<compile_context>
chip_gen: v6e
topology: v6e:2x2x1
jax: 0.10.0
libtpu: 0.0.40
codegen_flags: <defaults>
</compile_context>

<pallas_src>
import jax
import jax.numpy as jnp
from jax.experimental import pallas as pl
from jax.experimental.pallas import tpu as pltpu

# ---- model sizes (small, consistent with the module's forward) ----
T, B = 8, 2
IN_SIZE, H1, H2, H3, OUT = 16, 32, 32, 32, 8
NUM_LAYERS = 3

# Packed-weight slab layout: (80, 128) f32, 4 matrices per 128-lane row group.
#   rows  0:32  -> [ wih0 | whh0 | wih1 | whh1 ]
#   rows 32:64  -> [ wih2 | whh2 | w_h2 | w_out(pad to 32 cols) ]
#   rows 64:80  -> [ w_in (16x32) | zero pad ]
_W_ROWS = 2 * H2 + IN_SIZE      # 80
_W_LANES = 4 * H2               # 128


def _relu(v):
    return jnp.maximum(v, 0.0)


def _dot(a, b):
    return jnp.dot(a, b, preferred_element_type=jnp.float32)


def rnn_kernel(x_ref, h0_ref, w_ref, b_ref, out_ref, hn_ref):
    # ---- prologue: aligned full-lane-row loads of the packed slab, then
    #      one-time in-register lane slices (off the recurrence critical path) ----
    ga = w_ref[0:H2, :]                                  # (32, 128)
    gb = w_ref[H2:2 * H2, :]                             # (32, 128)
    gc = w_ref[2 * H2:2 * H2 + IN_SIZE, :]               # (16, 128)
    w_ih0, w_hh0 = ga[:, 0:H2], ga[:, H2:2 * H2]
    w_ih1, w_hh1 = ga[:, 2 * H2:3 * H2], ga[:, 3 * H2:4 * H2]
    w_ih2, w_hh2 = gb[:, 0:H2], gb[:, H2:2 * H2]
    w_h2, w_out = gb[:, 2 * H2:3 * H2], gb[:, 3 * H2:4 * H2]
    w_in = gc[:, 0:H1]                                   # (16, 32)

    b_in, b0 = b_ref[0:1, :], b_ref[1:2, :]
    b1, b2 = b_ref[2:3, :], b_ref[3:4, :]
    b_h2, b_out = b_ref[4:5, :], b_ref[5:6, :]

    # ---- time-independent input head, batched over all T (two matmuls) ----
    a = _relu(_dot(x_ref[...], w_in) + b_in)             # (T*B, H1)
    z0 = _dot(a, w_ih0) + b0                             # (T*B, H2)  (bih0+bhh0 folded)

    # Hoisted bias broadcasts (JAX does not CSE broadcast_in_dim in the unroll).
    b1b = jnp.broadcast_to(b1, (B, H2))
    b2b = jnp.broadcast_to(b2, (B, H2))

    # ---- layer-wavefront recurrence, fully unrolled (static trip count) ----
    # Super-step s computes layer0@t=s, layer1@t=s-1, layer2@t=s-2. All dots in a
    # super-step read ONLY previous-super-step state, so they are issued
    # back-to-back and pipeline through the MXU; the serial chain per round is
    # one dot + add + relu.  State stays in vregs (Python carries).
    h0 = h0_ref[0]
    h1 = h0_ref[1]
    h2 = h0_ref[2]
    h2_seq = []
    for s in range(T + NUM_LAYERS - 1):                  # 10 super-steps
        do0 = s < T
        do1 = 1 <= s <= T
        do2 = 2 <= s <= T + 1
        # independent MXU pushes (no lane-axis concat on the critical path)
        if do0:
            q0 = _dot(h0, w_hh0)
        if do1:
            p1 = _dot(h0, w_ih1)
            q1 = _dot(h1, w_hh1)
        if do2:
            p2 = _dot(h1, w_ih2)
            q2 = _dot(h2, w_hh2)
        # updates (consume the pops; VPU add/relu only)
        if do0:
            h0 = _relu(z0[s * B:(s + 1) * B, :] + q0)
        if do1:
            h1 = _relu(p1 + (q1 + b1b))
        if do2:
            h2 = _relu(p2 + (q2 + b2b))
            h2_seq.append(h2)                            # vreg-resident history

    # ---- single dense stores + post-loop batched output head ----
    hn_ref[...] = jnp.concatenate([h0, h1, h2], axis=0)  # (3*B, H2), one store
    h2_all = jnp.concatenate(h2_seq, axis=0)             # (T*B, H2), built from vregs
    h3 = _relu(_dot(h2_all, w_h2) + b_h2)                # (T*B, H3)
    out_ref[...] = _dot(h3, w_out) + b_out               # (T*B, 32) single store
    # TODO(synk): on v7x the z0/bias adds could be folded into MXU (MRB) accumulation;
    # not expressible through jnp.dot today.


def _pack_params(p):
    """Pack the 18 PyTorch-layout parameters into one lane-dense weight slab + one bias slab."""
    def wT(w):
        return jnp.asarray(w, jnp.float32).T

    w_out_pad = jnp.pad(wT(p["w_out"]), ((0, 0), (0, H2 - OUT)))              # (32, 8)->(32,32)
    group_a = jnp.concatenate(
        [wT(p["wih0"]), wT(p["whh0"]), wT(p["wih1"]), wT(p["whh1"])], axis=1)  # (32, 128)
    group_b = jnp.concatenate(
        [wT(p["wih2"]), wT(p["whh2"]), wT(p["w_h2"]), w_out_pad], axis=1)      # (32, 128)
    group_c = jnp.pad(wT(p["w_in"]), ((0, 0), (0, _W_LANES - H1)))             # (16, 128)
    w_slab = jnp.concatenate([group_a, group_b, group_c], axis=0)              # (80, 128)
    assert w_slab.shape == (_W_ROWS, _W_LANES)

    def bpad(b):
        b = jnp.asarray(b, jnp.float32)
        return jnp.pad(b, (0, H2 - b.shape[0]))

    b_slab = jnp.stack([
        bpad(p["b_in"]),
        bpad(p["bih0"]) + bpad(p["bhh0"]),
        bpad(p["bih1"]) + bpad(p["bhh1"]),
        bpad(p["bih2"]) + bpad(p["bhh2"]),
        bpad(p["b_h2"]),
        bpad(p["b_out"]),
        jnp.zeros((H2,), jnp.float32),
        jnp.zeros((H2,), jnp.float32),
    ], axis=0)                                                                 # (8, 32)
    return w_slab, b_slab


def rnn_forward(x, h0, params):
    """params: dict with PyTorch-layout weights ((out,in) matrices, (out,) biases)."""
    w_slab, b_slab = _pack_params(params)
    x_flat = jnp.asarray(x, jnp.float32).reshape(T * B, IN_SIZE)
    vmem = pl.BlockSpec(memory_space=pltpu.MemorySpace.VMEM)
    out_full, hn_flat = pl.pallas_call(
        rnn_kernel,
        out_shape=(jax.ShapeDtypeStruct((T * B, H2), jnp.float32),       # full 32-lane block
                   jax.ShapeDtypeStruct((NUM_LAYERS * B, H2), jnp.float32)),
        in_specs=[vmem, vmem, vmem, vmem],
        out_specs=(vmem, vmem),
    )(x_flat, h0, w_slab, b_slab)
    # wrapper-side layout plumbing (keeps kernel stores dense)
    out = out_full[:, :OUT].reshape(T, B, OUT)
    h_n = hn_flat.reshape(NUM_LAYERS, B, H2)
    return out, h_n


def reference_forward(x, h0, p):
    """Pure-JAX reference matching PyTorch semantics (for verification)."""
    def lin(v, w, b):
        return v @ w.T + b
    a = jax.nn.relu(lin(x, p["w_in"], p["b_in"]))                        # (T,B,H1)
    hs = [h0[0], h0[1], h0[2]]
    outs = []
    for t in range(T):
        inp = a[t]
        h_new = []
        for l, (wih, whh, bih, bhh) in enumerate(
                [(p["wih0"], p["whh0"], p["bih0"], p["bhh0"]),
                 (p["wih1"], p["whh1"], p["bih1"], p["bhh1"]),
                 (p["wih2"], p["whh2"], p["bih2"], p["bhh2"])]):
            h = jax.nn.relu(inp @ wih.T + bih + hs[l] @ whh.T + bhh)
            h_new.append(h)
            inp = h
        hs = h_new
        outs.append(inp)
    h2_seq = jnp.stack(outs, axis=0)                                     # (T,B,H2)
    h3 = jax.nn.relu(lin(h2_seq, p["w_h2"], p["b_h2"]))
    out_l = lin(h3, p["w_out"], p["b_out"])
    h_n = jnp.stack(hs, axis=0)
    return out_l, h_n


def init_params(key):
    """Deterministic init, PyTorch-like uniform(-1/sqrt(fan_in), 1/sqrt(fan_in))."""
    keys = jax.random.split(key, 32)
    ki = iter(keys)

    def u(shape, fan_in):
        bound = 1.0 / jnp.sqrt(float(fan_in))
        return jax.random.uniform(next(ki), shape, jnp.float32, -bound, bound)

    p = {}
    p["w_in"], p["b_in"] = u((H1, IN_SIZE), IN_SIZE), u((H1,), IN_SIZE)
    # RNN layer 0: input H1 -> hidden H2 ; layers 1,2: H2 -> H2
    p["wih0"], p["whh0"] = u((H2, H1), H2), u((H2, H2), H2)
    p["bih0"], p["bhh0"] = u((H2,), H2), u((H2,), H2)
    p["wih1"], p["whh1"] = u((H2, H2), H2), u((H2, H2), H2)
    p["bih1"], p["bhh1"] = u((H2,), H2), u((H2,), H2)
    p["wih2"], p["whh2"] = u((H2, H2), H2), u((H2, H2), H2)
    p["bih2"], p["bhh2"] = u((H2,), H2), u((H2,), H2)
    p["w_h2"], p["b_h2"] = u((H3, H2), H2), u((H3,), H2)
    p["w_out"], p["b_out"] = u((OUT, H3), H3), u((OUT,), H3)
    return p


if __name__ == "__main__":
    key = jax.random.PRNGKey(0)
    k_x, k_h, k_p = jax.random.split(key, 3)
    x = jax.random.normal(k_x, (T, B, IN_SIZE), jnp.float32)
    h_1 = jax.random.normal(k_h, (NUM_LAYERS, B, H2), jnp.float32)
    params = init_params(k_p)

    out_l, h_n = rnn_forward(x, h_1, params)
    out_l, h_n = jax.block_until_ready((out_l, h_n))

    ref_out, ref_hn = reference_forward(x, h_1, params)
    assert out_l.shape == (T, B, OUT) and h_n.shape == (NUM_LAYERS, B, H2)
    assert jnp.allclose(out_l, ref_out, atol=1e-4, rtol=1e-4)
    assert jnp.allclose(h_n, ref_hn, atol=1e-4, rtol=1e-4)
    print("KERNEL_OK")
</pallas_src>

<mosaic_0001>
module attributes {stable_mosaic.version = 11 : i64} {
  func.func @rnn_kernel(%arg0: memref<16x16xf32, #tpu.memory_space<vmem>>, %arg1: memref<3x2x32xf32, #tpu.memory_space<vmem>>, %arg2: memref<80x128xf32, #tpu.memory_space<vmem>>, %arg3: memref<8x32xf32, #tpu.memory_space<vmem>>, %arg4: memref<16x32xf32, #tpu.memory_space<vmem>>, %arg5: memref<6x32xf32, #tpu.memory_space<vmem>>) attributes {dimension_semantics = [], scalar_prefetch = 0 : i64, scratch_operands = 0 : i64, tpu.core_type = #tpu.core_type<tc>} {
    %c0 = arith.constant 0 : index
    %c0_0 = arith.constant 0 : index
    %0 = vector.load %arg2[%c0, %c0_0] : memref<80x128xf32, #tpu.memory_space<vmem>>, vector<32x128xf32>
    %c32 = arith.constant 32 : index
    %c0_1 = arith.constant 0 : index
    %1 = vector.load %arg2[%c32, %c0_1] : memref<80x128xf32, #tpu.memory_space<vmem>>, vector<32x128xf32>
    %c64 = arith.constant 64 : index
    %c0_2 = arith.constant 0 : index
    %2 = vector.load %arg2[%c64, %c0_2] : memref<80x128xf32, #tpu.memory_space<vmem>>, vector<16x128xf32>
    %3 = vector.extract_strided_slice %0 {offsets = [0, 0], sizes = [32, 32], strides = [1, 1]} : vector<32x128xf32> to vector<32x32xf32>
    %4 = vector.extract_strided_slice %0 {offsets = [0, 32], sizes = [32, 32], strides = [1, 1]} : vector<32x128xf32> to vector<32x32xf32>
    %5 = vector.extract_strided_slice %0 {offsets = [0, 64], sizes = [32, 32], strides = [1, 1]} : vector<32x128xf32> to vector<32x32xf32>
    %6 = vector.extract_strided_slice %0 {offsets = [0, 96], sizes = [32, 32], strides = [1, 1]} : vector<32x128xf32> to vector<32x32xf32>
    %7 = vector.extract_strided_slice %1 {offsets = [0, 0], sizes = [32, 32], strides = [1, 1]} : vector<32x128xf32> to vector<32x32xf32>
    %8 = vector.extract_strided_slice %1 {offsets = [0, 32], sizes = [32, 32], strides = [1, 1]} : vector<32x128xf32> to vector<32x32xf32>
    %9 = vector.extract_strided_slice %1 {offsets = [0, 64], sizes = [32, 32], strides = [1, 1]} : vector<32x128xf32> to vector<32x32xf32>
    %10 = vector.extract_strided_slice %1 {offsets = [0, 96], sizes = [32, 32], strides = [1, 1]} : vector<32x128xf32> to vector<32x32xf32>
    %11 = vector.extract_strided_slice %2 {offsets = [0, 0], sizes = [16, 32], strides = [1, 1]} : vector<16x128xf32> to vector<16x32xf32>
    %c0_3 = arith.constant 0 : index
    %c0_4 = arith.constant 0 : index
    %12 = vector.load %arg3[%c0_3, %c0_4] : memref<8x32xf32, #tpu.memory_space<vmem>>, vector<1x32xf32>
    %c1 = arith.constant 1 : index
    %c0_5 = arith.constant 0 : index
    %13 = vector.load %arg3[%c1, %c0_5] : memref<8x32xf32, #tpu.memory_space<vmem>>, vector<1x32xf32>
    %c2 = arith.constant 2 : index
    %c0_6 = arith.constant 0 : index
    %14 = vector.load %arg3[%c2, %c0_6] : memref<8x32xf32, #tpu.memory_space<vmem>>, vector<1x32xf32>
    %c3 = arith.constant 3 : index
    %c0_7 = arith.constant 0 : index
    %15 = vector.load %arg3[%c3, %c0_7] : memref<8x32xf32, #tpu.memory_space<vmem>>, vector<1x32xf32>
    %c4 = arith.constant 4 : index
    %c0_8 = arith.constant 0 : index
    %16 = vector.load %arg3[%c4, %c0_8] : memref<8x32xf32, #tpu.memory_space<vmem>>, vector<1x32xf32>
    %c5 = arith.constant 5 : index
    %c0_9 = arith.constant 0 : index
    %17 = vector.load %arg3[%c5, %c0_9] : memref<8x32xf32, #tpu.memory_space<vmem>>, vector<1x32xf32>
    %c0_10 = arith.constant 0 : index
    %c0_11 = arith.constant 0 : index
    %18 = vector.load %arg0[%c0_10, %c0_11] : memref<16x16xf32, #tpu.memory_space<vmem>>, vector<16x16xf32>
    %cst = arith.constant dense<0.000000e+00> : vector<16x32xf32>
    %19 = tpu.matmul %18, %11, %cst {dimension_numbers = #tpu.dot_dimension_numbers<[1], [0], [0], [1], [0, 0, 1, 1], [], []>} : vector<16x16xf32>, vector<16x32xf32>, vector<16x32xf32> -> vector<16x32xf32>
    %20 = vector.broadcast %12 : vector<1x32xf32> to vector<16x32xf32>
    %21 = arith.addf %19, %20 : vector<16x32xf32>
    %cst_12 = arith.constant 0.000000e+00 : f32
    %22 = vector.broadcast %cst_12 : f32 to vector<16x32xf32>
    %23 = arith.maximumf %21, %22 : vector<16x32xf32>
    %cst_13 = arith.constant dense<0.000000e+00> : vector<16x32xf32>
    %24 = tpu.matmul %23, %3, %cst_13 {dimension_numbers = #tpu.dot_dimension_numbers<[1], [0], [0], [1], [0, 0, 1, 1], [], []>} : vector<16x32xf32>, vector<32x32xf32>, vector<16x32xf32> -> vector<16x32xf32>
    %25 = vector.broadcast %13 : vector<1x32xf32> to vector<16x32xf32>
    %26 = arith.addf %24, %25 : vector<16x32xf32>
    %27 = vector.shape_cast %14 : vector<1x32xf32> to vector<1x32xf32>
    %28 = vector.broadcast %27 : vector<1x32xf32> to vector<2x32xf32>
    %29 = vector.shape_cast %15 : vector<1x32xf32> to vector<1x32xf32>
    %30 = vector.broadcast %29 : vector<1x32xf32> to vector<2x32xf32>
    %c0_14 = arith.constant 0 : index
    %c0_15 = arith.constant 0 : index
    %c0_16 = arith.constant 0 : index
    %31 = vector.load %arg1[%c0_14, %c0_15, %c0_16] : memref<3x2x32xf32, #tpu.memory_space<vmem>>, vector<1x2x32xf32>
    %32 = vector.shape_cast %31 : vector<1x2x32xf32> to vector<2x32xf32>
    %c1_17 = arith.constant 1 : index
    %c0_18 = arith.constant 0 : index
    %c0_19 = arith.constant 0 : index
    %33 = vector.load %arg1[%c1_17, %c0_18, %c0_19] : memref<3x2x32xf32, #tpu.memory_space<vmem>>, vector<1x2x32xf32>
    %34 = vector.shape_cast %33 : vector<1x2x32xf32> to vector<2x32xf32>
    %c2_20 = arith.constant 2 : index
    %c0_21 = arith.constant 0 : index
    %c0_22 = arith.constant 0 : index
    %35 = vector.load %arg1[%c2_20, %c0_21, %c0_22] : memref<3x2x32xf32, #tpu.memory_space<vmem>>, vector<1x2x32xf32>
    %36 = vector.shape_cast %35 : vector<1x2x32xf32> to vector<2x32xf32>
    %cst_23 = arith.constant dense<0.000000e+00> : vector<2x32xf32>
    %37 = tpu.matmul %32, %4, %cst_23 {dimension_numbers = #tpu.dot_dimension_numbers<[1], [0], [0], [1], [0, 0, 1, 1], [], []>} : vector<2x32xf32>, vector<32x32xf32>, vector<2x32xf32> -> vector<2x32xf32>
    %38 = vector.extract_strided_slice %26 {offsets = [0, 0], sizes = [2, 32], strides = [1, 1]} : vector<16x32xf32> to vector<2x32xf32>
    %39 = arith.addf %38, %37 : vector<2x32xf32>
    %cst_24 = arith.constant 0.000000e+00 : f32
    %40 = vector.broadcast %cst_24 : f32 to vector<2x32xf32>
    %41 = arith.maximumf %39, %40 : vector<2x32xf32>
    %cst_25 = arith.constant dense<0.000000e+00> : vector<2x32xf32>
    %42 = tpu.matmul %41, %4, %cst_25 {dimension_numbers = #tpu.dot_dimension_numbers<[1], [0], [0], [1], [0, 0, 1, 1], [], []>} : vector<2x32xf32>, vector<32x32xf32>, vector<2x32xf32> -> vector<2x32xf32>
    %cst_26 = arith.constant dense<0.000000e+00> : vector<2x32xf32>
    %43 = tpu.matmul %41, %5, %cst_26 {dimension_numbers = #tpu.dot_dimension_numbers<[1], [0], [0], [1], [0, 0, 1, 1], [], []>} : vector<2x32xf32>, vector<32x32xf32>, vector<2x32xf32> -> vector<2x32xf32>
    %cst_27 = arith.constant dense<0.000000e+00> : vector<2x32xf32>
    %44 = tpu.matmul %34, %6, %cst_27 {dimension_numbers = #tpu.dot_dimension_numbers<[1], [0], [0], [1], [0, 0, 1, 1], [], []>} : vector<2x32xf32>, vector<32x32xf32>, vector<2x32xf32> -> vector<2x32xf32>
    %45 = vector.extract_strided_slice %26 {offsets = [2, 0], sizes = [2, 32], strides = [1, 1]} : vector<16x32xf32> to vector<2x32xf32>
    %46 = arith.addf %45, %42 : vector<2x32xf32>
    %cst_28 = arith.constant 0.000000e+00 : f32
    %47 = vector.broadcast %cst_28 : f32 to vector<2x32xf32>
    %48 = arith.maximumf %46, %47 : vector<2x32xf32>
    %49 = arith.addf %44, %28 : vector<2x32xf32>
    %50 = arith.addf %43, %49 : vector<2x32xf32>
    %cst_29 = arith.constant 0.000000e+00 : f32
    %51 = vector.broadcast %cst_29 : f32 to vector<2x32xf32>
    %52 = arith.maximumf %50, %51 : vector<2x32xf32>
    %cst_30 = arith.constant dense<0.000000e+00> : vector<2x32xf32>
    %53 = tpu.matmul %48, %4, %cst_30 {dimension_numbers = #tpu.dot_dimension_numbers<[1], [0], [0], [1], [0, 0, 1, 1], [], []>} : vector<2x32xf32>, vector<32x32xf32>, vector<2x32xf32> -> vector<2x32xf32>
    %cst_31 = arith.constant dense<0.000000e+00> : vector<2x32xf32>
    %54 = tpu.matmul %48, %5, %cst_31 {dimension_numbers = #tpu.dot_dimension_numbers<[1], [0], [0], [1], [0, 0, 1, 1], [], []>} : vector<2x32xf32>, vector<32x32xf32>, vector<2x32xf32> -> vector<2x32xf32>
    %cst_32 = arith.constant dense<0.000000e+00> : vector<2x32xf32>
    %55 = tpu.matmul %52, %6, %cst_32 {dimension_numbers = #tpu.dot_dimension_numbers<[1], [0], [0], [1], [0, 0, 1, 1], [], []>} : vector<2x32xf32>, vector<32x32xf32>, vector<2x32xf32> -> vector<2x32xf32>
    %cst_33 = arith.constant dense<0.000000e+00> : vector<2x32xf32>
    %56 = tpu.matmul %52, %7, %cst_33 {dimension_numbers = #tpu.dot_dimension_numbers<[1], [0], [0], [1], [0, 0, 1, 1], [], []>} : vector<2x32xf32>, vector<32x32xf32>, vector<2x32xf32> -> vector<2x32xf32>
    %cst_34 = arith.constant dense<0.000000e+00> : vector<2x32xf32>
    %57 = tpu.matmul %36, %8, %cst_34 {dimension_numbers = #tpu.dot_dimension_numbers<[1], [0], [0], [1], [0, 0, 1, 1], [], []>} : vector<2x32xf32>, vector<32x32xf32>, vector<2x32xf32> -> vector<2x32xf32>
    %58 = vector.extract_strided_slice %26 {offsets = [4, 0], sizes = [2, 32], strides = [1, 1]} : vector<16x32xf32> to vector<2x32xf32>
    %59 = arith.addf %58, %53 : vector<2x32xf32>
    %cst_35 = arith.constant 0.000000e+00 : f32
    %60 = vector.broadcast %cst_35 : f32 to vector<2x32xf32>
    %61 = arith.maximumf %59, %60 : vector<2x32xf32>
    %62 = arith.addf %55, %28 : vector<2x32xf32>
    %63 = arith.addf %54, %62 : vector<2x32xf32>
    %cst_36 = arith.constant 0.000000e+00 : f32
    %64 = vector.broadcast %cst_36 : f32 to vector<2x32xf32>
    %65 = arith.maximumf %63, %64 : vector<2x32xf32>
    %66 = arith.addf %57, %30 : vector<2x32xf32>
    %67 = arith.addf %56, %66 : vector<2x32xf32>
    %cst_37 = arith.constant 0.000000e+00 : f32
    %68 = vector.broadcast %cst_37 : f32 to vector<2x32xf32>
    %69 = arith.maximumf %67, %68 : vector<2x32xf32>
    %cst_38 = arith.constant dense<0.000000e+00> : vector<2x32xf32>
    %70 = tpu.matmul %61, %4, %cst_38 {dimension_numbers = #tpu.dot_dimension_numbers<[1], [0], [0], [1], [0, 0, 1, 1], [], []>} : vector<2x32xf32>, vector<32x32xf32>, vector<2x32xf32> -> vector<2x32xf32>
    %cst_39 = arith.constant dense<0.000000e+00> : vector<2x32xf32>
    %71 = tpu.matmul %61, %5, %cst_39 {dimension_numbers = #tpu.dot_dimension_numbers<[1], [0], [0], [1], [0, 0, 1, 1], [], []>} : vector<2x32xf32>, vector<32x32xf32>, vector<2x32xf32> -> vector<2x32xf32>
    %cst_40 = arith.constant dense<0.000000e+00> : vector<2x32xf32>
    %72 = tpu.matmul %65, %6, %cst_40 {dimension_numbers = #tpu.dot_dimension_numbers<[1], [0], [0], [1], [0, 0, 1, 1], [], []>} : vector<2x32xf32>, vector<32x32xf32>, vector<2x32xf32> -> vector<2x32xf32>
    %cst_41 = arith.constant dense<0.000000e+00> : vector<2x32xf32>
    %73 = tpu.matmul %65, %7, %cst_41 {dimension_numbers = #tpu.dot_dimension_numbers<[1], [0], [0], [1], [0, 0, 1, 1], [], []>} : vector<2x32xf32>, vector<32x32xf32>, vector<2x32xf32> -> vector<2x32xf32>
    %cst_42 = arith.constant dense<0.000000e+00> : vector<2x32xf32>
    %74 = tpu.matmul %69, %8, %cst_42 {dimension_numbers = #tpu.dot_dimension_numbers<[1], [0], [0], [1], [0, 0, 1, 1], [], []>} : vector<2x32xf32>, vector<32x32xf32>, vector<2x32xf32> -> vector<2x32xf32>
    %75 = vector.extract_strided_slice %26 {offsets = [6, 0], sizes = [2, 32], strides = [1, 1]} : vector<16x32xf32> to vector<2x32xf32>
    %76 = arith.addf %75, %70 : vector<2x32xf32>
    %cst_43 = arith.constant 0.000000e+00 : f32
    %77 = vector.broadcast %cst_43 : f32 to vector<2x32xf32>
    %78 = arith.maximumf %76, %77 : vector<2x32xf32>
    %79 = arith.addf %72, %28 : vector<2x32xf32>
    %80 = arith.addf %71, %79 : vector<2x32xf32>
    %cst_44 = arith.constant 0.000000e+00 : f32
    %81 = vector.broadcast %cst_44 : f32 to vector<2x32xf32>
    %82 = arith.maximumf %80, %81 : vector<2x32xf32>
    %83 = arith.addf %74, %30 : vector<2x32xf32>
    %84 = arith.addf %73, %83 : vector<2x32xf32>
    %cst_45 = arith.constant 0.000000e+00 : f32
    %85 = vector.broadcast %cst_45 : f32 to vector<2x32xf32>
    %86 = arith.maximumf %84, %85 : vector<2x32xf32>
    %cst_46 = arith.constant dense<0.000000e+00> : vector<2x32xf32>
    %87 = tpu.matmul %78, %4, %cst_46 {dimension_numbers = #tpu.dot_dimension_numbers<[1], [0], [0], [1], [0, 0, 1, 1], [], []>} : vector<2x32xf32>, vector<32x32xf32>, vector<2x32xf32> -> vector<2x32xf32>
    %cst_47 = arith.constant dense<0.000000e+00> : vector<2x32xf32>
    %88 = tpu.matmul %78, %5, %cst_47 {dimension_numbers = #tpu.dot_dimension_numbers<[1], [0], [0], [1], [0, 0, 1, 1], [], []>} : vector<2x32xf32>, vector<32x32xf32>, vector<2x32xf32> -> vector<2x32xf32>
    %cst_48 = arith.constant dense<0.000000e+00> : vector<2x32xf32>
    %89 = tpu.matmul %82, %6, %cst_48 {dimension_numbers = #tpu.dot_dimension_numbers<[1], [0], [0], [1], [0, 0, 1, 1], [], []>} : vector<2x32xf32>, vector<32x32xf32>, vector<2x32xf32> -> vector<2x32xf32>
    %cst_49 = arith.constant dense<0.000000e+00> : vector<2x32xf32>
    %90 = tpu.matmul %82, %7, %cst_49 {dimension_numbers = #tpu.dot_dimension_numbers<[1], [0], [0], [1], [0, 0, 1, 1], [], []>} : vector<2x32xf32>, vector<32x32xf32>, vector<2x32xf32> -> vector<2x32xf32>
    %cst_50 = arith.constant dense<0.000000e+00> : vector<2x32xf32>
    %91 = tpu.matmul %86, %8, %cst_50 {dimension_numbers = #tpu.dot_dimension_numbers<[1], [0], [0], [1], [0, 0, 1, 1], [], []>} : vector<2x32xf32>, vector<32x32xf32>, vector<2x32xf32> -> vector<2x32xf32>
    %92 = vector.extract_strided_slice %26 {offsets = [8, 0], sizes = [2, 32], strides = [1, 1]} : vector<16x32xf32> to vector<2x32xf32>
    %93 = arith.addf %92, %87 : vector<2x32xf32>
    %cst_51 = arith.constant 0.000000e+00 : f32
    %94 = vector.broadcast %cst_51 : f32 to vector<2x32xf32>
    %95 = arith.maximumf %93, %94 : vector<2x32xf32>
    %96 = arith.addf %89, %28 : vector<2x32xf32>
    %97 = arith.addf %88, %96 : vector<2x32xf32>
    %cst_52 = arith.constant 0.000000e+00 : f32
    %98 = vector.broadcast %cst_52 : f32 to vector<2x32xf32>
    %99 = arith.maximumf %97, %98 : vector<2x32xf32>
    %100 = arith.addf %91, %30 : vector<2x32xf32>
    %101 = arith.addf %90, %100 : vector<2x32xf32>
    %cst_53 = arith.constant 0.000000e+00 : f32
    %102 = vector.broadcast %cst_53 : f32 to vector<2x32xf32>
    %103 = arith.maximumf %101, %102 : vector<2x32xf32>
    %cst_54 = arith.constant dense<0.000000e+00> : vector<2x32xf32>
    %104 = tpu.matmul %95, %4, %cst_54 {dimension_numbers = #tpu.dot_dimension_numbers<[1], [0], [0], [1], [0, 0, 1, 1], [], []>} : vector<2x32xf32>, vector<32x32xf32>, vector<2x32xf32> -> vector<2x32xf32>
    %cst_55 = arith.constant dense<0.000000e+00> : vector<2x32xf32>
    %105 = tpu.matmul %95, %5, %cst_55 {dimension_numbers = #tpu.dot_dimension_numbers<[1], [0], [0], [1], [0, 0, 1, 1], [], []>} : vector<2x32xf32>, vector<32x32xf32>, vector<2x32xf32> -> vector<2x32xf32>
    %cst_56 = arith.constant dense<0.000000e+00> : vector<2x32xf32>
    %106 = tpu.matmul %99, %6, %cst_56 {dimension_numbers = #tpu.dot_dimension_numbers<[1], [0], [0], [1], [0, 0, 1, 1], [], []>} : vector<2x32xf32>, vector<32x32xf32>, vector<2x32xf32> -> vector<2x32xf32>
    %cst_57 = arith.constant dense<0.000000e+00> : vector<2x32xf32>
    %107 = tpu.matmul %99, %7, %cst_57 {dimension_numbers = #tpu.dot_dimension_numbers<[1], [0], [0], [1], [0, 0, 1, 1], [], []>} : vector<2x32xf32>, vector<32x32xf32>, vector<2x32xf32> -> vector<2x32xf32>
    %cst_58 = arith.constant dense<0.000000e+00> : vector<2x32xf32>
    %108 = tpu.matmul %103, %8, %cst_58 {dimension_numbers = #tpu.dot_dimension_numbers<[1], [0], [0], [1], [0, 0, 1, 1], [], []>} : vector<2x32xf32>, vector<32x32xf32>, vector<2x32xf32> -> vector<2x32xf32>
    %109 = vector.extract_strided_slice %26 {offsets = [10, 0], sizes = [2, 32], strides = [1, 1]} : vector<16x32xf32> to vector<2x32xf32>
    %110 = arith.addf %109, %104 : vector<2x32xf32>
    %cst_59 = arith.constant 0.000000e+00 : f32
    %111 = vector.broadcast %cst_59 : f32 to vector<2x32xf32>
    %112 = arith.maximumf %110, %111 : vector<2x32xf32>
    %113 = arith.addf %106, %28 : vector<2x32xf32>
    %114 = arith.addf %105, %113 : vector<2x32xf32>
    %cst_60 = arith.constant 0.000000e+00 : f32
    %115 = vector.broadcast %cst_60 : f32 to vector<2x32xf32>
    %116 = arith.maximumf %114, %115 : vector<2x32xf32>
    %117 = arith.addf %108, %30 : vector<2x32xf32>
    %118 = arith.addf %107, %117 : vector<2x32xf32>
    %cst_61 = arith.constant 0.000000e+00 : f32
    %119 = vector.broadcast %cst_61 : f32 to vector<2x32xf32>
    %120 = arith.maximumf %118, %119 : vector<2x32xf32>
    %cst_62 = arith.constant dense<0.000000e+00> : vector<2x32xf32>
    %121 = tpu.matmul %112, %4, %cst_62 {dimension_numbers = #tpu.dot_dimension_numbers<[1], [0], [0], [1], [0, 0, 1, 1], [], []>} : vector<2x32xf32>, vector<32x32xf32>, vector<2x32xf32> -> vector<2x32xf32>
    %cst_63 = arith.constant dense<0.000000e+00> : vector<2x32xf32>
    %122 = tpu.matmul %112, %5, %cst_63 {dimension_numbers = #tpu.dot_dimension_numbers<[1], [0], [0], [1], [0, 0, 1, 1], [], []>} : vector<2x32xf32>, vector<32x32xf32>, vector<2x32xf32> -> vector<2x32xf32>
    %cst_64 = arith.constant dense<0.000000e+00> : vector<2x32xf32>
    %123 = tpu.matmul %116, %6, %cst_64 {dimension_numbers = #tpu.dot_dimension_numbers<[1], [0], [0], [1], [0, 0, 1, 1], [], []>} : vector<2x32xf32>, vector<32x32xf32>, vector<2x32xf32> -> vector<2x32xf32>
    %cst_65 = arith.constant dense<0.000000e+00> : vector<2x32xf32>
    %124 = tpu.matmul %116, %7, %cst_65 {dimension_numbers = #tpu.dot_dimension_numbers<[1], [0], [0], [1], [0, 0, 1, 1], [], []>} : vector<2x32xf32>, vector<32x32xf32>, vector<2x32xf32> -> vector<2x32xf32>
    %cst_66 = arith.constant dense<0.000000e+00> : vector<2x32xf32>
    %125 = tpu.matmul %120, %8, %cst_66 {dimension_numbers = #tpu.dot_dimension_numbers<[1], [0], [0], [1], [0, 0, 1, 1], [], []>} : vector<2x32xf32>, vector<32x32xf32>, vector<2x32xf32> -> vector<2x32xf32>
    %126 = vector.extract_strided_slice %26 {offsets = [12, 0], sizes = [2, 32], strides = [1, 1]} : vector<16x32xf32> to vector<2x32xf32>
    %127 = arith.addf %126, %121 : vector<2x32xf32>
    %cst_67 = arith.constant 0.000000e+00 : f32
    %128 = vector.broadcast %cst_67 : f32 to vector<2x32xf32>
    %129 = arith.maximumf %127, %128 : vector<2x32xf32>
    %130 = arith.addf %123, %28 : vector<2x32xf32>
    %131 = arith.addf %122, %130 : vector<2x32xf32>
    %cst_68 = arith.constant 0.000000e+00 : f32
    %132 = vector.broadcast %cst_68 : f32 to vector<2x32xf32>
    %133 = arith.maximumf %131, %132 : vector<2x32xf32>
    %134 = arith.addf %125, %30 : vector<2x32xf32>
    %135 = arith.addf %124, %134 : vector<2x32xf32>
    %cst_69 = arith.constant 0.000000e+00 : f32
    %136 = vector.broadcast %cst_69 : f32 to vector<2x32xf32>
    %137 = arith.maximumf %135, %136 : vector<2x32xf32>
    %cst_70 = arith.constant dense<0.000000e+00> : vector<2x32xf32>
    %138 = tpu.matmul %129, %4, %cst_70 {dimension_numbers = #tpu.dot_dimension_numbers<[1], [0], [0], [1], [0, 0, 1, 1], [], []>} : vector<2x32xf32>, vector<32x32xf32>, vector<2x32xf32> -> vector<2x32xf32>
    %cst_71 = arith.constant dense<0.000000e+00> : vector<2x32xf32>
    %139 = tpu.matmul %129, %5, %cst_71 {dimension_numbers = #tpu.dot_dimension_numbers<[1], [0], [0], [1], [0, 0, 1, 1], [], []>} : vector<2x32xf32>, vector<32x32xf32>, vector<2x32xf32> -> vector<2x32xf32>
    %cst_72 = arith.constant dense<0.000000e+00> : vector<2x32xf32>
    %140 = tpu.matmul %133, %6, %cst_72 {dimension_numbers = #tpu.dot_dimension_numbers<[1], [0], [0], [1], [0, 0, 1, 1], [], []>} : vector<2x32xf32>, vector<32x32xf32>, vector<2x32xf32> -> vector<2x32xf32>
    %cst_73 = arith.constant dense<0.000000e+00> : vector<2x32xf32>
    %141 = tpu.matmul %133, %7, %cst_73 {dimension_numbers = #tpu.dot_dimension_numbers<[1], [0], [0], [1], [0, 0, 1, 1], [], []>} : vector<2x32xf32>, vector<32x32xf32>, vector<2x32xf32> -> vector<2x32xf32>
    %cst_74 = arith.constant dense<0.000000e+00> : vector<2x32xf32>
    %142 = tpu.matmul %137, %8, %cst_74 {dimension_numbers = #tpu.dot_dimension_numbers<[1], [0], [0], [1], [0, 0, 1, 1], [], []>} : vector<2x32xf32>, vector<32x32xf32>, vector<2x32xf32> -> vector<2x32xf32>
    %143 = vector.extract_strided_slice %26 {offsets = [14, 0], sizes = [2, 32], strides = [1, 1]} : vector<16x32xf32> to vector<2x32xf32>
    %144 = arith.addf %143, %138 : vector<2x32xf32>
    %cst_75 = arith.constant 0.000000e+00 : f32
    %145 = vector.broadcast %cst_75 : f32 to vector<2x32xf32>
    %146 = arith.maximumf %144, %145 : vector<2x32xf32>
    %147 = arith.addf %140, %28 : vector<2x32xf32>
    %148 = arith.addf %139, %147 : vector<2x32xf32>
    %cst_76 = arith.constant 0.000000e+00 : f32
    %149 = vector.broadcast %cst_76 : f32 to vector<2x32xf32>
    %150 = arith.maximumf %148, %149 : vector<2x32xf32>
    %151 = arith.addf %142, %30 : vector<2x32xf32>
    %152 = arith.addf %141, %151 : vector<2x32xf32>
    %cst_77 = arith.constant 0.000000e+00 : f32
    %153 = vector.broadcast %cst_77 : f32 to vector<2x32xf32>
    %154 = arith.maximumf %152, %153 : vector<2x32xf32>
    %cst_78 = arith.constant dense<0.000000e+00> : vector<2x32xf32>
    %155 = tpu.matmul %146, %5, %cst_78 {dimension_numbers = #tpu.dot_dimension_numbers<[1], [0], [0], [1], [0, 0, 1, 1], [], []>} : vector<2x32xf32>, vector<32x32xf32>, vector<2x32xf32> -> vector<2x32xf32>
    %cst_79 = arith.constant dense<0.000000e+00> : vector<2x32xf32>
    %156 = tpu.matmul %150, %6, %cst_79 {dimension_numbers = #tpu.dot_dimension_numbers<[1], [0], [0], [1], [0, 0, 1, 1], [], []>} : vector<2x32xf32>, vector<32x32xf32>, vector<2x32xf32> -> vector<2x32xf32>
    %cst_80 = arith.constant dense<0.000000e+00> : vector<2x32xf32>
    %157 = tpu.matmul %150, %7, %cst_80 {dimension_numbers = #tpu.dot_dimension_numbers<[1], [0], [0], [1], [0, 0, 1, 1], [], []>} : vector<2x32xf32>, vector<32x32xf32>, vector<2x32xf32> -> vector<2x32xf32>
    %cst_81 = arith.constant dense<0.000000e+00> : vector<2x32xf32>
    %158 = tpu.matmul %154, %8, %cst_81 {dimension_numbers = #tpu.dot_dimension_numbers<[1], [0], [0], [1], [0, 0, 1, 1], [], []>} : vector<2x32xf32>, vector<32x32xf32>, vector<2x32xf32> -> vector<2x32xf32>
    %159 = arith.addf %156, %28 : vector<2x32xf32>
    %160 = arith.addf %155, %159 : vector<2x32xf32>
    %cst_82 = arith.constant 0.000000e+00 : f32
    %161 = vector.broadcast %cst_82 : f32 to vector<2x32xf32>
    %162 = arith.maximumf %160, %161 : vector<2x32xf32>
    %163 = arith.addf %158, %30 : vector<2x32xf32>
    %164 = arith.addf %157, %163 : vector<2x32xf32>
    %cst_83 = arith.constant 0.000000e+00 : f32
    %165 = vector.broadcast %cst_83 : f32 to vector<2x32xf32>
    %166 = arith.maximumf %164, %165 : vector<2x32xf32>
    %cst_84 = arith.constant dense<0.000000e+00> : vector<2x32xf32>
    %167 = tpu.matmul %162, %7, %cst_84 {dimension_numbers = #tpu.dot_dimension_numbers<[1], [0], [0], [1], [0, 0, 1, 1], [], []>} : vector<2x32xf32>, vector<32x32xf32>, vector<2x32xf32> -> vector<2x32xf32>
    %cst_85 = arith.constant dense<0.000000e+00> : vector<2x32xf32>
    %168 = tpu.matmul %166, %8, %cst_85 {dimension_numbers = #tpu.dot_dimension_numbers<[1], [0], [0], [1], [0, 0, 1, 1], [], []>} : vector<2x32xf32>, vector<32x32xf32>, vector<2x32xf32> -> vector<2x32xf32>
    %169 = arith.addf %168, %30 : vector<2x32xf32>
    %170 = arith.addf %167, %169 : vector<2x32xf32>
    %cst_86 = arith.constant 0.000000e+00 : f32
    %171 = vector.broadcast %cst_86 : f32 to vector<2x32xf32>
    %172 = arith.maximumf %170, %171 : vector<2x32xf32>
    %173 = tpu.concatenate %146, %162, %172 in 0 : vector<2x32xf32>, vector<2x32xf32>, vector<2x32xf32> -> vector<6x32xf32>
    %c0_87 = arith.constant 0 : index
    %c0_88 = arith.constant 0 : index
    %174 = vector.load %arg5[%c0_87, %c0_88] : memref<6x32xf32, #tpu.memory_space<vmem>>, vector<6x32xf32>
    tpu.vector_store %arg5[%c0_87, %c0_88], %173 {strides = array<i32>} : memref<6x32xf32, #tpu.memory_space<vmem>>, vector<6x32xf32>,
    %175 = tpu.concatenate %69, %86, %103, %120, %137, %154, %166, %172 in 0 : vector<2x32xf32>, vector<2x32xf32>, vector<2x32xf32>, vector<2x32xf32>, vector<2x32xf32>, vector<2x32xf32>, vector<2x32xf32>, vector<2x32xf32> -> vector<16x32xf32>
    %cst_89 = arith.constant dense<0.000000e+00> : vector<16x32xf32>
    %176 = tpu.matmul %175, %9, %cst_89 {dimension_numbers = #tpu.dot_dimension_numbers<[1], [0], [0], [1], [0, 0, 1, 1], [], []>} : vector<16x32xf32>, vector<32x32xf32>, vector<16x32xf32> -> vector<16x32xf32>
    %177 = vector.broadcast %16 : vector<1x32xf32> to vector<16x32xf32>
    %178 = arith.addf %176, %177 : vector<16x32xf32>
    %cst_90 = arith.constant 0.000000e+00 : f32
    %179 = vector.broadcast %cst_90 : f32 to vector<16x32xf32>
    %180 = arith.maximumf %178, %179 : vector<16x32xf32>
    %cst_91 = arith.constant dense<0.000000e+00> : vector<16x32xf32>
    %181 = tpu.matmul %180, %10, %cst_91 {dimension_numbers = #tpu.dot_dimension_numbers<[1], [0], [0], [1], [0, 0, 1, 1], [], []>} : vector<16x32xf32>, vector<32x32xf32>, vector<16x32xf32> -> vector<16x32xf32>
    %182 = vector.broadcast %17 : vector<1x32xf32> to vector<16x32xf32>
    %183 = arith.addf %181, %182 : vector<16x32xf32>
    %c0_92 = arith.constant 0 : index
    %c0_93 = arith.constant 0 : index
    %184 = vector.load %arg4[%c0_92, %c0_93] : memref<16x32xf32, #tpu.memory_space<vmem>>, vector<16x32xf32>
    tpu.vector_store %arg4[%c0_92, %c0_93], %183 {strides = array<i32>} : memref<16x32xf32, #tpu.memory_space<vmem>>, vector<16x32xf32>,
    return
  }
}

</mosaic_0001>

<llo_original>
// kernel: tpu_custom_call.1
$region0: #{tpu_custom_call.1}
  #allocation0 [shape = 'u32[]', space=smem, size = 0x4, offset = 0x4, fixed_abs, tag = 'smem constant byte address 0x4 - core index']
  #allocation1 [shape = 'u32[144,128]{1,0:T(1,128)}', space=vmem, size = 0x12000, scoped, tag = 'internal scratch']
  %s0 = inlined_call_operand.hbm [shape: f32[16,16], index: 0, kind: input, shape index: {}]
  %s1 = inlined_call_operand.hbm [shape: f32[3,2,32], index: 1, kind: input, shape index: {}]
  %s2 = inlined_call_operand.hbm [shape: f32[80,128], index: 2, kind: input, shape index: {}]
  %s3 = inlined_call_operand.hbm [shape: f32[8,32], index: 3, kind: input, shape index: {}]
  %s4 = inlined_call_operand.hbm [shape: f32[16,32], index: 4, kind: output, shape index: {0}]
  %s5 = inlined_call_operand.hbm [shape: f32[6,32], index: 5, kind: output, shape index: {1}]
  %6 = xla_tuple %s4, %s5
  %s7 = sld [smem:[#allocation0]]
  $region50: #{tpu_custom_call.1} parent=0
    _
  %s9 = ssub.s32 1, %s7
  %s10 = scalar_select 0, %s9, %s7
  $region1: #{tpu_custom_call.1} parent=0
    #allocation2 [shape = 'u8[8192]{0}', space=vmem, size = 0x2000, scoped, tag = 'input window, operand 0, single buffered']
    #allocation3 [shape = 's32[1]{0}', space=sflag, size = 0x4, scoped, tag = 'scoped memory for tpu_custom_call.1']
    #allocation4 [shape = 's32[1]{0}', space=sflag, size = 0x4, scoped, tag = 'scoped memory for tpu_custom_call.1']
    #allocation5 [shape = 'u8[3072]{0}', space=vmem, size = 0xc00, scoped, tag = 'input window, operand 1, single buffered']
    #allocation6 [shape = 's32[1]{0}', space=sflag, size = 0x4, scoped, tag = 'scoped memory for tpu_custom_call.1']
    #allocation7 [shape = 'u8[40960]{0}', space=vmem, size = 0xa000, scoped, tag = 'input window, operand 2, single buffered']
    #allocation8 [shape = 'u8[4096]{0}', space=vmem, size = 0x1000, scoped, tag = 'input window, operand 3, single buffered']
    #allocation9 [shape = 's32[1]{0}', space=sflag, size = 0x4, scoped, tag = 'scoped memory for tpu_custom_call.1']
    #allocation10 [shape = 'u8[8192]{0}', space=vmem, size = 0x2000, scoped, tag = 'output window, operand 0, single buffered']
    #allocation11 [shape = 'u8[4096]{0}', space=vmem, size = 0x1000, scoped, tag = 'output window, operand 1, single buffered']
    #allocation12 [shape = 's32[1]{0}', space=sflag, size = 0x4, scoped, tag = 'scoped memory for tpu_custom_call.1']
    %11 = vsyncpa [#allocation3], 0
    %12 = vsyncpa [#allocation6], 0
    %13 = vsyncpa [#allocation9], 0
    %14 = vsyncpa [#allocation4], 0
    %15 = vsyncpa [#allocation12], 0
    // Predicated region
    $region2: #{tpu_custom_call.1} parent=1 // pred_check
      _
    $region3: #{tpu_custom_call.1} parent=1 // pred_check_branch
      %17 = sbr.rel (0) target = $region5
    $region4: #{tpu_custom_call.1} parent=1 // pred_region
      %s19 = ssub.s32 256, 256
      %20 = vsyncadd [#allocation3], %s19
      %s21 = sshll.u32 [#allocation2], 4
      %s22 = int_to_ptr.vmem [resolvable:$true] %s21
      %27 = dma.hbm_to_vmem [thread:$0]  %s0, 256, %s22, [#allocation3], 128, 128, 8
    $region5: #{tpu_custom_call.1} parent=1 // pred_fallthru
      _
    // Predicated region
    $region6: #{tpu_custom_call.1} parent=1 // pred_check
      _
    $region7: #{tpu_custom_call.1} parent=1 // pred_check_branch
      %29 = sbr.rel (0) target = $region9
    $region8: #{tpu_custom_call.1} parent=1 // pred_region
      %s31 = ssub.s32 96, 96
      %32 = vsyncadd [#allocation6], %s31
      %s33 = sshll.u32 [#allocation5], 4
      %s34 = int_to_ptr.vmem [resolvable:$true] %s33
      %39 = dma.hbm_to_vmem [thread:$0]  %s1, 96, %s34, [#allocation6], 32, 32, 2
    $region9: #{tpu_custom_call.1} parent=1 // pred_fallthru
      _
    // Predicated region
    $region10: #{tpu_custom_call.1} parent=1 // pred_check
      _
    $region11: #{tpu_custom_call.1} parent=1 // pred_check_branch
      %41 = sbr.rel (0) target = $region13
    $region12: #{tpu_custom_call.1} parent=1 // pred_region
      %s43 = ssub.s32 1280, 1280
      %44 = vsyncadd [#allocation6], %s43
      %s45 = sshll.u32 [#allocation7], 4
      %s46 = int_to_ptr.vmem [resolvable:$true] %s45
      %51 = dma.hbm_to_vmem [thread:$0]  %s2, 1280, %s46, [#allocation6], 128, 128, 8
    $region13: #{tpu_custom_call.1} parent=1 // pred_fallthru
      _
    // Predicated region
    $region14: #{tpu_custom_call.1} parent=1 // pred_check
      _
    $region15: #{tpu_custom_call.1} parent=1 // pred_check_branch
      %53 = sbr.rel (0) target = $region17
    $region16: #{tpu_custom_call.1} parent=1 // pred_region
      %s55 = ssub.s32 128, 128
      %56 = vsyncadd [#allocation9], %s55
      %s58 = sshll.u32 [#allocation8], 4
      %s59 = int_to_ptr.vmem [resolvable:$true] %s58
      %61 = dma.hbm_to_vmem [thread:$0]  %s3, 128, %s59, [#allocation9]
    $region17: #{tpu_custom_call.1} parent=1 // pred_fallthru
      _
    // Predicated region
    $region18: #{tpu_custom_call.1} parent=1 // pred_check
      _
    $region19: #{tpu_custom_call.1} parent=1 // pred_check_branch
      %63 = sbr.rel (0) target = $region21
    $region20: #{tpu_custom_call.1} parent=1 // pred_region
      %64 = dma.done [#allocation3], 256
    $region21: #{tpu_custom_call.1} parent=1 // pred_fallthru
      _
    // Predicated region
    $region22: #{tpu_custom_call.1} parent=1 // pred_check
      _
    $region23: #{tpu_custom_call.1} parent=1 // pred_check_branch
      %66 = sbr.rel (0) target = $region25
    $region24: #{tpu_custom_call.1} parent=1 // pred_region
      %67 = dma.done [#allocation6], 96
    $region25: #{tpu_custom_call.1} parent=1 // pred_fallthru
      _
    // Predicated region
    $region26: #{tpu_custom_call.1} parent=1 // pred_check
      _
    $region27: #{tpu_custom_call.1} parent=1 // pred_check_branch
      %69 = sbr.rel (0) target = $region29
    $region28: #{tpu_custom_call.1} parent=1 // pred_region
      %70 = dma.done [#allocation6], 1280
    $region29: #{tpu_custom_call.1} parent=1 // pred_fallthru
      _
    // Predicated region
    $region30: #{tpu_custom_call.1} parent=1 // pred_check
      _
    $region31: #{tpu_custom_call.1} parent=1 // pred_check_branch
      %72 = sbr.rel (0) target = $region33
    $region32: #{tpu_custom_call.1} parent=1 // pred_region
      %73 = dma.done [#allocation9], 128
    $region33: #{tpu_custom_call.1} parent=1 // pred_fallthru
      _
    %v74 = vld [vmem:[#allocation7] sm:$0xff]
    %v75 = vld [vmem:[#allocation7 + $0x8] sm:$0xff]
    %v76 = vld [vmem:[#allocation7 + $0x10] sm:$0xff]
    %v77 = vld [vmem:[#allocation7 + $0x18] sm:$0xff]
    %v78 = vld [vmem:[#allocation7 + $0x20] sm:$0xff]
    %v79 = vld [vmem:[#allocation7 + $0x28] sm:$0xff]
    %v80 = vld [vmem:[#allocation7 + $0x30] sm:$0xff]
    %v81 = vld [vmem:[#allocation7 + $0x38] sm:$0xff]
    %v82 = vld [vmem:[#allocation7 + $0x40] sm:$0xff]
    %v83 = vld [vmem:[#allocation7 + $0x48] sm:$0xff]
    %v84 = vld [vmem:[#allocation8] sm:$0x1]
    %v85 = vld [vmem:[#allocation8 + $0x1] sm:$0x1]
    %v86 = vld [vmem:[#allocation8 + $0x2] sm:$0x1]
    %v87 = vld [vmem:[#allocation8 + $0x3] sm:$0x1]
    %v88 = vld [vmem:[#allocation8 + $0x4] sm:$0x1]
    %v89 = vld [vmem:[#allocation8 + $0x5] sm:$0x1]
    %v90 = vld [vmem:[#allocation2] sm:$0xff]
    %v91 = vld [vmem:[#allocation2 + $0x8] sm:$0xff]
    %v92 = vlaneseq
    %v93 = vshrl.u32 %v92, 7
    %v94 = vsub.s32 0, %v93
    %v95 = vrot.slane %v84, %v94
    %vm96 = vcmask 130048
    %v98 = vsel %vm96, %v90, 0
    %v101 = vsel %vm96, %v91, 0
    %103 = vmatprep.subr.mxu0 0.0
    %104 = vmatpush1.msra.mxu0 0.0
    %105 = vmatprep.subr.mxu0 0.0
    %106 = vmatpush1.msra.mxu0 0.0
    %107 = vmatprep.subr.mxu0 0.0
    %108 = vmatpush1.msra.mxu0 0.0
    %109 = vmatprep.subr.mxu0 0.0
    %110 = vmatpush1.msra.mxu0 0.0
    %111 = vmatprep.subr.mxu0 0.0
    %112 = vmatpush1.msra.mxu0 0.0
    %113 = vmatprep.subr.mxu0 0.0
    %114 = vmatpush1.msra.mxu0 0.0
    %115 = vmatprep.subr.mxu0 0.0
    %116 = vmatpush1.msra.mxu0 0.0
    %117 = vmatprep.subr.mxu0 0.0
    %118 = vmatpush1.msra.mxu0 0.0
    %119 = vmatprep.subr.mxu0 0.0
    %120 = vmatpush1.msra.mxu0 0.0
    %121 = vmatprep.subr.mxu0 0.0
    %122 = vmatpush1.msra.mxu0 0.0
    %123 = vmatprep.subr.mxu0 0.0
    %124 = vmatpush1.msra.mxu0 0.0
    %125 = vmatprep.subr.mxu0 0.0
    %126 = vmatpush1.msra.mxu0 0.0
    %127 = vmatprep.subr.mxu0 0.0
    %128 = vmatpush1.msra.mxu0 0.0
    %129 = vmatprep.subr.mxu0 0.0
    %130 = vmatpush1.msra.mxu0 0.0
    %131 = vmatprep.subr.mxu0 0.0
    %132 = vmatpush1.msra.mxu0 %v83
    %133 = vmatprep.subr.mxu0 0.0
    %134 = vmatpush1.msra.mxu0 %v82
    %135 = vmatprep.subr.mxu0 0.0
    %136 = vmatpush2.msra.mxu0 0.0
    %137 = vmatprep.subr.mxu0 0.0
    %138 = vmatpush2.msra.mxu0 0.0
    %139 = vmatprep.subr.mxu0 0.0
    %140 = vmatpush2.msra.mxu0 0.0
    %141 = vmatprep.subr.mxu0 0.0
    %142 = vmatpush2.msra.mxu0 0.0
    %143 = vmatprep.subr.mxu0 0.0
    %144 = vmatpush2.msra.mxu0 0.0
    %145 = vmatprep.subr.mxu0 0.0
    %146 = vmatpush2.msra.mxu0 0.0
    %147 = vmatprep.subr.mxu0 0.0
    %148 = vmatpush2.msra.mxu0 0.0
    %149 = vmatprep.subr.mxu0 0.0
    %150 = vmatpush2.msra.mxu0 0.0
    %151 = vmatprep.subr.mxu0 0.0
    %152 = vmatpush2.msra.mxu0 0.0
    %153 = vmatprep.subr.mxu0 0.0
    %154 = vmatpush2.msra.mxu0 0.0
    %155 = vmatprep.subr.mxu0 0.0
    %156 = vmatpush2.msra.mxu0 0.0
    %157 = vmatprep.subr.mxu0 0.0
    %158 = vmatpush2.msra.mxu0 0.0
    %159 = vmatprep.subr.mxu0 0.0
    %160 = vmatpush2.msra.mxu0 0.0
    %161 = vmatprep.subr.mxu0 0.0
    %162 = vmatpush2.msra.mxu0 0.0
    %163 = vmatprep.subr.mxu0 0.0
    %164 = vmatpush2.msra.mxu0 0.0
    %165 = vmatprep.subr.mxu0 0.0
    %166 = vmatpush2.msra.mxu0 0.0
    %167 = vmatprep.mubr.f32.mxu0 0.0
    %168 = vmatmul.mubr.f32.gmra.mxu0 %v98
    %v169 = vpop.f32.mrf.mxu0
    %v170 = vadd.f32 %v95, %v169
    %v171 = vpop.f32.mrf.mxu0
    %172 = vmatprep.mubr.f32.mxu0 0.0
    %173 = vmatmul.mubr.f32.gmra.mxu0 %v101
    %v174 = vpop.f32.mrf.mxu0
    %v175 = vadd.f32 %v95, %v174
    %v176 = vpop.f32.mrf.mxu0
    %177 = vdwg.mxu0
    %v178 = vmax.f32 %v170, 0.0
    %v179 = vmax.f32 %v175, 0.0
    %v180 = vlaneseq
    %v181 = vshrl.u32 %v180, 7
    %v182 = vsub.s32 0, %v181
    %v183 = vrot.slane %v85, %v182
    %vm184 = vcmask 261120
    %v186 = vsel %vm184, %v178, 0
    %v189 = vsel %vm184, %v179, 0
    %191 = vmatprep.subr.mxu0 0.0
    %192 = vmatpush1.msra.mxu0 0.0
    %193 = vmatprep.subr.mxu0 0.0
    %194 = vmatpush1.msra.mxu0 0.0
    %195 = vmatprep.subr.mxu0 0.0
    %196 = vmatpush1.msra.mxu0 0.0
    %197 = vmatprep.subr.mxu0 0.0
    %198 = vmatpush1.msra.mxu0 0.0
    %199 = vmatprep.subr.mxu0 0.0
    %200 = vmatpush1.msra.mxu0 0.0
    %201 = vmatprep.subr.mxu0 0.0
    %202 = vmatpush1.msra.mxu0 0.0
    %203 = vmatprep.subr.mxu0 0.0
    %204 = vmatpush1.msra.mxu0 0.0
    %205 = vmatprep.subr.mxu0 0.0
    %206 = vmatpush1.msra.mxu0 0.0
    %207 = vmatprep.subr.mxu0 0.0
    %208 = vmatpush1.msra.mxu0 0.0
    %209 = vmatprep.subr.mxu0 0.0
    %210 = vmatpush1.msra.mxu0 0.0
    %211 = vmatprep.subr.mxu0 0.0
    %212 = vmatpush1.msra.mxu0 0.0
    %213 = vmatprep.subr.mxu0 0.0
    %214 = vmatpush1.msra.mxu0 0.0
    %215 = vmatprep.subr.mxu0 0.0
    %216 = vmatpush1.msra.mxu0 %v77
    %217 = vmatprep.subr.mxu0 0.0
    %218 = vmatpush1.msra.mxu0 %v76
    %219 = vmatprep.subr.mxu0 0.0
    %220 = vmatpush1.msra.mxu0 %v75
    %221 = vmatprep.subr.mxu0 0.0
    %222 = vmatpush1.msra.mxu0 %v74
    %223 = vmatprep.subr.mxu0 0.0
    %224 = vmatpush2.msra.mxu0 0.0
    %225 = vmatprep.subr.mxu0 0.0
    %226 = vmatpush2.msra.mxu0 0.0
    %227 = vmatprep.subr.mxu0 0.0
    %228 = vmatpush2.msra.mxu0 0.0
    %229 = vmatprep.subr.mxu0 0.0
    %230 = vmatpush2.msra.mxu0 0.0
    %231 = vmatprep.subr.mxu0 0.0
    %232 = vmatpush2.msra.mxu0 0.0
    %233 = vmatprep.subr.mxu0 0.0
    %234 = vmatpush2.msra.mxu0 0.0
    %235 = vmatprep.subr.mxu0 0.0
    %236 = vmatpush2.msra.mxu0 0.0
    %237 = vmatprep.subr.mxu0 0.0
    %238 = vmatpush2.msra.mxu0 0.0
    %239 = vmatprep.subr.mxu0 0.0
    %240 = vmatpush2.msra.mxu0 0.0
    %241 = vmatprep.subr.mxu0 0.0
    %242 = vmatpush2.msra.mxu0 0.0
    %243 = vmatprep.subr.mxu0 0.0
    %244 = vmatpush2.msra.mxu0 0.0
    %245 = vmatprep.subr.mxu0 0.0
    %246 = vmatpush2.msra.mxu0 0.0
    %247 = vmatprep.subr.mxu0 0.0
    %248 = vmatpush2.msra.mxu0 0.0
    %249 = vmatprep.subr.mxu0 0.0
    %250 = vmatpush2.msra.mxu0 0.0
    %251 = vmatprep.subr.mxu0 0.0
    %252 = vmatpush2.msra.mxu0 0.0
    %253 = vmatprep.subr.mxu0 0.0
    %254 = vmatpush2.msra.mxu0 0.0
    %255 = vmatprep.mubr.f32.mxu0 0.0
    %256 = vmatmul.mubr.f32.gmra.mxu0 %v186
    %v257 = vpop.f32.mrf.mxu0
    %v258 = vadd.f32 %v183, %v257
    %v259 = vpop.f32.mrf.mxu0
    %260 = vmatprep.mubr.f32.mxu0 0.0
    %261 = vmatmul.mubr.f32.gmra.mxu0 %v189
    %v262 = vpop.f32.mrf.mxu0
    %v263 = vadd.f32 %v183, %v262
    %v264 = vpop.f32.mrf.mxu0
    %265 = vdwg.mxu0
    %v266 = vlaneseq
    %v267 = vshrl.u32 %v266, 7
    %v268 = vsub.s32 0, %v267
    %v269 = vrot.slane %v86, %v268
    %v270 = vlaneseq
    %v271 = vshrl.u32 %v270, 7
    %v272 = vsub.s32 0, %v271
    %v273 = vrot.slane %v87, %v272
    %v274 = vld [vmem:[#allocation5] sm:$0x3]
    %s275 = scalar_lea.vmem [#allocation5], 2
    %v276 = vld [vmem:[%s275] sm:$0x3]
    %s277 = scalar_lea.vmem [#allocation5], 4
    %v278 = vld [vmem:[%s277] sm:$0x3]
    %283 = vrot.lane.b32.xlu0 %v74, 96
    %v284 = vpop.permute.xlu0 %283
    %285 = vrot.lane.b32.xlu0 %v75, 96
    %v286 = vpop.permute.xlu0 %285
    %287 = vrot.lane.b32.xlu0 %v76, 96
    %v288 = vpop.permute.xlu0 %287
    %289 = vrot.lane.b32.xlu0 %v77, 96
    %v290 = vpop.permute.xlu0 %289
    %v296 = vsel %vm184, %v274, 0
    %298 = vmatprep.subr.mxu0 0.0
    %299 = vmatpush1.msra.mxu0 0.0
    %300 = vmatprep.subr.mxu0 0.0
    %301 = vmatpush1.msra.mxu0 0.0
    %302 = vmatprep.subr.mxu0 0.0
    %303 = vmatpush1.msra.mxu0 0.0
    %304 = vmatprep.subr.mxu0 0.0
    %305 = vmatpush1.msra.mxu0 0.0
    %306 = vmatprep.subr.mxu0 0.0
    %307 = vmatpush1.msra.mxu0 0.0
    %308 = vmatprep.subr.mxu0 0.0
    %309 = vmatpush1.msra.mxu0 0.0
    %310 = vmatprep.subr.mxu0 0.0
    %311 = vmatpush1.msra.mxu0 0.0
    %312 = vmatprep.subr.mxu0 0.0
    %313 = vmatpush1.msra.mxu0 0.0
    %314 = vmatprep.subr.mxu0 0.0
    %315 = vmatpush1.msra.mxu0 0.0
    %316 = vmatprep.subr.mxu0 0.0
    %317 = vmatpush1.msra.mxu0 0.0
    %318 = vmatprep.subr.mxu0 0.0
    %319 = vmatpush1.msra.mxu0 0.0
    %320 = vmatprep.subr.mxu0 0.0
    %321 = vmatpush1.msra.mxu0 0.0
    %322 = vmatprep.subr.mxu0 0.0
    %323 = vmatpush1.msra.mxu0 %v290
    %324 = vmatprep.subr.mxu0 0.0
    %325 = vmatpush1.msra.mxu0 %v288
    %326 = vmatprep.subr.mxu0 0.0
    %327 = vmatpush1.msra.mxu0 %v286
    %328 = vmatprep.subr.mxu0 0.0
    %329 = vmatpush1.msra.mxu0 %v284
    %330 = vmatprep.subr.mxu0 0.0
    %331 = vmatpush2.msra.mxu0 0.0
    %332 = vmatprep.subr.mxu0 0.0
    %333 = vmatpush2.msra.mxu0 0.0
    %334 = vmatprep.subr.mxu0 0.0
    %335 = vmatpush2.msra.mxu0 0.0
    %336 = vmatprep.subr.mxu0 0.0
    %337 = vmatpush2.msra.mxu0 0.0
    %338 = vmatprep.subr.mxu0 0.0
    %339 = vmatpush2.msra.mxu0 0.0
    %340 = vmatprep.subr.mxu0 0.0
    %341 = vmatpush2.msra.mxu0 0.0
    %342 = vmatprep.subr.mxu0 0.0
    %343 = vmatpush2.msra.mxu0 0.0
    %344 = vmatprep.subr.mxu0 0.0
    %345 = vmatpush2.msra.mxu0 0.0
    %346 = vmatprep.subr.mxu0 0.0
    %347 = vmatpush2.msra.mxu0 0.0
    %348 = vmatprep.subr.mxu0 0.0
    %349 = vmatpush2.msra.mxu0 0.0
    %350 = vmatprep.subr.mxu0 0.0
    %351 = vmatpush2.msra.mxu0 0.0
    %352 = vmatprep.subr.mxu0 0.0
    %353 = vmatpush2.msra.mxu0 0.0
    %354 = vmatprep.subr.mxu0 0.0
    %355 = vmatpush2.msra.mxu0 0.0
    %356 = vmatprep.subr.mxu0 0.0
    %357 = vmatpush2.msra.mxu0 0.0
    %358 = vmatprep.subr.mxu0 0.0
    %359 = vmatpush2.msra.mxu0 0.0
    %360 = vmatprep.subr.mxu0 0.0
    %361 = vmatpush2.msra.mxu0 0.0
    %362 = vmatprep.mubr.f32.mxu0 0.0
    %363 = vmatmul.mubr.f32.gmra.mxu0 %v296
    %v364 = vpop.f32.mrf.mxu0
    %v365 = vadd.f32 0.0, %v364
    %v366 = vpop.f32.mrf.mxu0
    %367 = vdwg.mxu0
    %v368 = vadd.f32 %v258, %v365
    %v369 = vmax.f32 %v368, 0.0
    %v371 = vsel %vm184, %v369, 0
    %373 = vmatprep.subr.mxu0 0.0
    %374 = vmatpush1.msra.mxu0 0.0
    %375 = vmatprep.subr.mxu0 0.0
    %376 = vmatpush1.msra.mxu0 0.0
    %377 = vmatprep.subr.mxu0 0.0
    %378 = vmatpush1.msra.mxu0 0.0
    %379 = vmatprep.subr.mxu0 0.0
    %380 = vmatpush1.msra.mxu0 0.0
    %381 = vmatprep.subr.mxu0 0.0
    %382 = vmatpush1.msra.mxu0 0.0
    %383 = vmatprep.subr.mxu0 0.0
    %384 = vmatpush1.msra.mxu0 0.0
    %385 = vmatprep.subr.mxu0 0.0
    %386 = vmatpush1.msra.mxu0 0.0
    %387 = vmatprep.subr.mxu0 0.0
    %388 = vmatpush1.msra.mxu0 0.0
    %389 = vmatprep.subr.mxu0 0.0
    %390 = vmatpush1.msra.mxu0 0.0
    %391 = vmatprep.subr.mxu0 0.0
    %392 = vmatpush1.msra.mxu0 0.0
    %393 = vmatprep.subr.mxu0 0.0
    %394 = vmatpush1.msra.mxu0 0.0
    %395 = vmatprep.subr.mxu0 0.0
    %396 = vmatpush1.msra.mxu0 0.0
    %397 = vmatprep.subr.mxu0 0.0
    %398 = vmatpush1.msra.mxu0 %v290
    %399 = vmatprep.subr.mxu0 0.0
    %400 = vmatpush1.msra.mxu0 %v288
    %401 = vmatprep.subr.mxu0 0.0
    %402 = vmatpush1.msra.mxu0 %v286
    %403 = vmatprep.subr.mxu0 0.0
    %404 = vmatpush1.msra.mxu0 %v284
    %405 = vmatprep.subr.mxu0 0.0
    %406 = vmatpush2.msra.mxu0 0.0
    %407 = vmatprep.subr.mxu0 0.0
    %408 = vmatpush2.msra.mxu0 0.0
    %409 = vmatprep.subr.mxu0 0.0
    %410 = vmatpush2.msra.mxu0 0.0
    %411 = vmatprep.subr.mxu0 0.0
    %412 = vmatpush2.msra.mxu0 0.0
    %413 = vmatprep.subr.mxu0 0.0
    %414 = vmatpush2.msra.mxu0 0.0
    %415 = vmatprep.subr.mxu0 0.0
    %416 = vmatpush2.msra.mxu0 0.0
    %417 = vmatprep.subr.mxu0 0.0
    %418 = vmatpush2.msra.mxu0 0.0
    %419 = vmatprep.subr.mxu0 0.0
    %420 = vmatpush2.msra.mxu0 0.0
    %421 = vmatprep.subr.mxu0 0.0
    %422 = vmatpush2.msra.mxu0 0.0
    %423 = vmatprep.subr.mxu0 0.0
    %424 = vmatpush2.msra.mxu0 0.0
    %425 = vmatprep.subr.mxu0 0.0
    %426 = vmatpush2.msra.mxu0 0.0
    %427 = vmatprep.subr.mxu0 0.0
    %428 = vmatpush2.msra.mxu0 0.0
    %429 = vmatprep.subr.mxu0 0.0
    %430 = vmatpush2.msra.mxu0 0.0
    %431 = vmatprep.subr.mxu0 0.0
    %432 = vmatpush2.msra.mxu0 0.0
    %433 = vmatprep.subr.mxu0 0.0
    %434 = vmatpush2.msra.mxu0 0.0
    %435 = vmatprep.subr.mxu0 0.0
    %436 = vmatpush2.msra.mxu0 0.0
    %437 = vmatprep.mubr.f32.mxu0 0.0
    %438 = vmatmul.mubr.f32.gmra.mxu0 %v371
    %v439 = vpop.f32.mrf.mxu0
    %v440 = vadd.f32 0.0, %v439
    %v441 = vpop.f32.mrf.mxu0
    %442 = vdwg.mxu0
    %v444 = vrot.slane %v440, 6
    %v446 = vadd.f32 %v258, %v444
    %v447 = vmax.f32 %v446, 0.0
    %448 = vrot.lane.b32.xlu0 %v74, 32
    %v449 = vpop.permute.xlu0 %448
    %450 = vrot.lane.b32.xlu0 %v75, 32
    %v451 = vpop.permute.xlu0 %450
    %452 = vrot.lane.b32.xlu0 %v76, 32
    %v453 = vpop.permute.xlu0 %452
    %454 = vrot.lane.b32.xlu0 %v77, 32
    %v455 = vpop.permute.xlu0 %454
    %v461 = vsel %vm184, %v276, 0
    %463 = vmatprep.subr.mxu0 0.0
    %464 = vmatpush1.msra.mxu0 0.0
    %465 = vmatprep.subr.mxu0 0.0
    %466 = vmatpush1.msra.mxu0 0.0
    %467 = vmatprep.subr.mxu0 0.0
    %468 = vmatpush1.msra.mxu0 0.0
    %469 = vmatprep.subr.mxu0 0.0
    %470 = vmatpush1.msra.mxu0 0.0
    %471 = vmatprep.subr.mxu0 0.0
    %472 = vmatpush1.msra.mxu0 0.0
    %473 = vmatprep.subr.mxu0 0.0
    %474 = vmatpush1.msra.mxu0 0.0
    %475 = vmatprep.subr.mxu0 0.0
    %476 = vmatpush1.msra.mxu0 0.0
    %477 = vmatprep.subr.mxu0 0.0
    %478 = vmatpush1.msra.mxu0 0.0
    %479 = vmatprep.subr.mxu0 0.0
    %480 = vmatpush1.msra.mxu0 0.0
    %481 = vmatprep.subr.mxu0 0.0
    %482 = vmatpush1.msra.mxu0 0.0
    %483 = vmatprep.subr.mxu0 0.0
    %484 = vmatpush1.msra.mxu0 0.0
    %485 = vmatprep.subr.mxu0 0.0
    %486 = vmatpush1.msra.mxu0 0.0
    %487 = vmatprep.subr.mxu0 0.0
    %488 = vmatpush1.msra.mxu0 %v455
    %489 = vmatprep.subr.mxu0 0.0
    %490 = vmatpush1.msra.mxu0 %v453
    %491 = vmatprep.subr.mxu0 0.0
    %492 = vmatpush1.msra.mxu0 %v451
    %493 = vmatprep.subr.mxu0 0.0
    %494 = vmatpush1.msra.mxu0 %v449
    %495 = vmatprep.subr.mxu0 0.0
    %496 = vmatpush2.msra.mxu0 0.0
    %497 = vmatprep.subr.mxu0 0.0
    %498 = vmatpush2.msra.mxu0 0.0
    %499 = vmatprep.subr.mxu0 0.0
    %500 = vmatpush2.msra.mxu0 0.0
    %501 = vmatprep.subr.mxu0 0.0
    %502 = vmatpush2.msra.mxu0 0.0
    %503 = vmatprep.subr.mxu0 0.0
    %504 = vmatpush2.msra.mxu0 0.0
    %505 = vmatprep.subr.mxu0 0.0
    %506 = vmatpush2.msra.mxu0 0.0
    %507 = vmatprep.subr.mxu0 0.0
    %508 = vmatpush2.msra.mxu0 0.0
    %509 = vmatprep.subr.mxu0 0.0
    %510 = vmatpush2.msra.mxu0 0.0
    %511 = vmatprep.subr.mxu0 0.0
    %512 = vmatpush2.msra.mxu0 0.0
    %513 = vmatprep.subr.mxu0 0.0
    %514 = vmatpush2.msra.mxu0 0.0
    %515 = vmatprep.subr.mxu0 0.0
    %516 = vmatpush2.msra.mxu0 0.0
    %517 = vmatprep.subr.mxu0 0.0
    %518 = vmatpush2.msra.mxu0 0.0
    %519 = vmatprep.subr.mxu0 0.0
    %520 = vmatpush2.msra.mxu0 0.0
    %521 = vmatprep.subr.mxu0 0.0
    %522 = vmatpush2.msra.mxu0 0.0
    %523 = vmatprep.subr.mxu0 0.0
    %524 = vmatpush2.msra.mxu0 0.0
    %525 = vmatprep.subr.mxu0 0.0
    %526 = vmatpush2.msra.mxu0 0.0
    %527 = vmatprep.mubr.f32.mxu0 0.0
    %528 = vmatmul.mubr.f32.gmra.mxu0 %v461
    %v529 = vpop.f32.mrf.mxu0
    %v530 = vadd.f32 %v269, %v529
    %v531 = vpop.f32.mrf.mxu0
    %532 = vdwg.mxu0
    %533 = vrot.lane.b32.xlu0 %v74, 64
    %v534 = vpop.permute.xlu0 %533
    %535 = vrot.lane.b32.xlu0 %v75, 64
    %v536 = vpop.permute.xlu0 %535
    %537 = vrot.lane.b32.xlu0 %v76, 64
    %v538 = vpop.permute.xlu0 %537
    %539 = vrot.lane.b32.xlu0 %v77, 64
    %v540 = vpop.permute.xlu0 %539
    %545 = vmatprep.subr.mxu0 0.0
    %546 = vmatpush1.msra.mxu0 0.0
    %547 = vmatprep.subr.mxu0 0.0
    %548 = vmatpush1.msra.mxu0 0.0
    %549 = vmatprep.subr.mxu0 0.0
    %550 = vmatpush1.msra.mxu0 0.0
    %551 = vmatprep.subr.mxu0 0.0
    %552 = vmatpush1.msra.mxu0 0.0
    %553 = vmatprep.subr.mxu0 0.0
    %554 = vmatpush1.msra.mxu0 0.0
    %555 = vmatprep.subr.mxu0 0.0
    %556 = vmatpush1.msra.mxu0 0.0
    %557 = vmatprep.subr.mxu0 0.0
    %558 = vmatpush1.msra.mxu0 0.0
    %559 = vmatprep.subr.mxu0 0.0
    %560 = vmatpush1.msra.mxu0 0.0
    %561 = vmatprep.subr.mxu0 0.0
    %562 = vmatpush1.msra.mxu0 0.0
    %563 = vmatprep.subr.mxu0 0.0
    %564 = vmatpush1.msra.mxu0 0.0
    %565 = vmatprep.subr.mxu0 0.0
    %566 = vmatpush1.msra.mxu0 0.0
    %567 = vmatprep.subr.mxu0 0.0
    %568 = vmatpush1.msra.mxu0 0.0
    %569 = vmatprep.subr.mxu0 0.0
    %570 = vmatpush1.msra.mxu0 %v540
    %571 = vmatprep.subr.mxu0 0.0
    %572 = vmatpush1.msra.mxu0 %v538
    %573 = vmatprep.subr.mxu0 0.0
    %574 = vmatpush1.msra.mxu0 %v536
    %575 = vmatprep.subr.mxu0 0.0
    %576 = vmatpush1.msra.mxu0 %v534
    %577 = vmatprep.subr.mxu0 0.0
    %578 = vmatpush2.msra.mxu0 0.0
    %579 = vmatprep.subr.mxu0 0.0
    %580 = vmatpush2.msra.mxu0 0.0
    %581 = vmatprep.subr.mxu0 0.0
    %582 = vmatpush2.msra.mxu0 0.0
    %583 = vmatprep.subr.mxu0 0.0
    %584 = vmatpush2.msra.mxu0 0.0
    %585 = vmatprep.subr.mxu0 0.0
    %586 = vmatpush2.msra.mxu0 0.0
    %587 = vmatprep.subr.mxu0 0.0
    %588 = vmatpush2.msra.mxu0 0.0
    %589 = vmatprep.subr.mxu0 0.0
    %590 = vmatpush2.msra.mxu0 0.0
    %591 = vmatprep.subr.mxu0 0.0
    %592 = vmatpush2.msra.mxu0 0.0
    %593 = vmatprep.subr.mxu0 0.0
    %594 = vmatpush2.msra.mxu0 0.0
    %595 = vmatprep.subr.mxu0 0.0
    %596 = vmatpush2.msra.mxu0 0.0
    %597 = vmatprep.subr.mxu0 0.0
    %598 = vmatpush2.msra.mxu0 0.0
    %599 = vmatprep.subr.mxu0 0.0
    %600 = vmatpush2.msra.mxu0 0.0
    %601 = vmatprep.subr.mxu0 0.0
    %602 = vmatpush2.msra.mxu0 0.0
    %603 = vmatprep.subr.mxu0 0.0
    %604 = vmatpush2.msra.mxu0 0.0
    %605 = vmatprep.subr.mxu0 0.0
    %606 = vmatpush2.msra.mxu0 0.0
    %607 = vmatprep.subr.mxu0 0.0
    %608 = vmatpush2.msra.mxu0 0.0
    %609 = vmatprep.mubr.f32.mxu0 0.0
    %610 = vmatmul.mubr.f32.gmra.mxu0 %v371
    %v611 = vpop.f32.mrf.mxu0
    %v612 = vadd.f32 %v530, %v611
    %v613 = vpop.f32.mrf.mxu0
    %614 = vdwg.mxu0
    %v615 = vmax.f32 %v612, 0.0
    %v617 = vrot.slane %v447, 2
    %v618 = vsel %vm184, %v617, 0
    %620 = vmatprep.subr.mxu0 0.0
    %621 = vmatpush1.msra.mxu0 0.0
    %622 = vmatprep.subr.mxu0 0.0
    %623 = vmatpush1.msra.mxu0 0.0
    %624 = vmatprep.subr.mxu0 0.0
    %625 = vmatpush1.msra.mxu0 0.0
    %626 = vmatprep.subr.mxu0 0.0
    %627 = vmatpush1.msra.mxu0 0.0
    %628 = vmatprep.subr.mxu0 0.0
    %629 = vmatpush1.msra.mxu0 0.0
    %630 = vmatprep.subr.mxu0 0.0
    %631 = vmatpush1.msra.mxu0 0.0
    %632 = vmatprep.subr.mxu0 0.0
    %633 = vmatpush1.msra.mxu0 0.0
    %634 = vmatprep.subr.mxu0 0.0
    %635 = vmatpush1.msra.mxu0 0.0
    %636 = vmatprep.subr.mxu0 0.0
    %637 = vmatpush1.msra.mxu0 0.0
    %638 = vmatprep.subr.mxu0 0.0
    %639 = vmatpush1.msra.mxu0 0.0
    %640 = vmatprep.subr.mxu0 0.0
    %641 = vmatpush1.msra.mxu0 0.0
    %642 = vmatprep.subr.mxu0 0.0
    %643 = vmatpush1.msra.mxu0 0.0
    %644 = vmatprep.subr.mxu0 0.0
    %645 = vmatpush1.msra.mxu0 %v290
    %646 = vmatprep.subr.mxu0 0.0
    %647 = vmatpush1.msra.mxu0 %v288
    %648 = vmatprep.subr.mxu0 0.0
    %649 = vmatpush1.msra.mxu0 %v286
    %650 = vmatprep.subr.mxu0 0.0
    %651 = vmatpush1.msra.mxu0 %v284
    %652 = vmatprep.subr.mxu0 0.0
    %653 = vmatpush2.msra.mxu0 0.0
    %654 = vmatprep.subr.mxu0 0.0
    %655 = vmatpush2.msra.mxu0 0.0
    %656 = vmatprep.subr.mxu0 0.0
    %657 = vmatpush2.msra.mxu0 0.0
    %658 = vmatprep.subr.mxu0 0.0
    %659 = vmatpush2.msra.mxu0 0.0
    %660 = vmatprep.subr.mxu0 0.0
    %661 = vmatpush2.msra.mxu0 0.0
    %662 = vmatprep.subr.mxu0 0.0
    %663 = vmatpush2.msra.mxu0 0.0
    %664 = vmatprep.subr.mxu0 0.0
    %665 = vmatpush2.msra.mxu0 0.0
    %666 = vmatprep.subr.mxu0 0.0
    %667 = vmatpush2.msra.mxu0 0.0
    %668 = vmatprep.subr.mxu0 0.0
    %669 = vmatpush2.msra.mxu0 0.0
    %670 = vmatprep.subr.mxu0 0.0
    %671 = vmatpush2.msra.mxu0 0.0
    %672 = vmatprep.subr.mxu0 0.0
    %673 = vmatpush2.msra.mxu0 0.0
    %674 = vmatprep.subr.mxu0 0.0
    %675 = vmatpush2.msra.mxu0 0.0
    %676 = vmatprep.subr.mxu0 0.0
    %677 = vmatpush2.msra.mxu0 0.0
    %678 = vmatprep.subr.mxu0 0.0
    %679 = vmatpush2.msra.mxu0 0.0
    %680 = vmatprep.subr.mxu0 0.0
    %681 = vmatpush2.msra.mxu0 0.0
    %682 = vmatprep.subr.mxu0 0.0
    %683 = vmatpush2.msra.mxu0 0.0
    %684 = vmatprep.mubr.f32.mxu0 0.0
    %685 = vmatmul.mubr.f32.gmra.mxu0 %v618
    %v686 = vpop.f32.mrf.mxu0
    %v687 = vadd.f32 0.0, %v686
    %v688 = vpop.f32.mrf.mxu0
    %689 = vdwg.mxu0
    %v691 = vrot.slane %v687, 4
    %v693 = vadd.f32 %v258, %v691
    %v694 = vmax.f32 %v693, 0.0
    %v696 = vsel %vm184, %v615, 0
    %698 = vmatprep.subr.mxu0 0.0
    %699 = vmatpush1.msra.mxu0 0.0
    %700 = vmatprep.subr.mxu0 0.0
    %701 = vmatpush1.msra.mxu0 0.0
    %702 = vmatprep.subr.mxu0 0.0
    %703 = vmatpush1.msra.mxu0 0.0
    %704 = vmatprep.subr.mxu0 0.0
    %705 = vmatpush1.msra.mxu0 0.0
    %706 = vmatprep.subr.mxu0 0.0
    %707 = vmatpush1.msra.mxu0 0.0
    %708 = vmatprep.subr.mxu0 0.0
    %709 = vmatpush1.msra.mxu0 0.0
    %710 = vmatprep.subr.mxu0 0.0
    %711 = vmatpush1.msra.mxu0 0.0
    %712 = vmatprep.subr.mxu0 0.0
    %713 = vmatpush1.msra.mxu0 0.0
    %714 = vmatprep.subr.mxu0 0.0
    %715 = vmatpush1.msra.mxu0 0.0
    %716 = vmatprep.subr.mxu0 0.0
    %717 = vmatpush1.msra.mxu0 0.0
    %718 = vmatprep.subr.mxu0 0.0
    %719 = vmatpush1.msra.mxu0 0.0
    %720 = vmatprep.subr.mxu0 0.0
    %721 = vmatpush1.msra.mxu0 0.0
    %722 = vmatprep.subr.mxu0 0.0
    %723 = vmatpush1.msra.mxu0 %v455
    %724 = vmatprep.subr.mxu0 0.0
    %725 = vmatpush1.msra.mxu0 %v453
    %726 = vmatprep.subr.mxu0 0.0
    %727 = vmatpush1.msra.mxu0 %v451
    %728 = vmatprep.subr.mxu0 0.0
    %729 = vmatpush1.msra.mxu0 %v449
    %730 = vmatprep.subr.mxu0 0.0
    %731 = vmatpush2.msra.mxu0 0.0
    %732 = vmatprep.subr.mxu0 0.0
    %733 = vmatpush2.msra.mxu0 0.0
    %734 = vmatprep.subr.mxu0 0.0
    %735 = vmatpush2.msra.mxu0 0.0
    %736 = vmatprep.subr.mxu0 0.0
    %737 = vmatpush2.msra.mxu0 0.0
    %738 = vmatprep.subr.mxu0 0.0
    %739 = vmatpush2.msra.mxu0 0.0
    %740 = vmatprep.subr.mxu0 0.0
    %741 = vmatpush2.msra.mxu0 0.0
    %742 = vmatprep.subr.mxu0 0.0
    %743 = vmatpush2.msra.mxu0 0.0
    %744 = vmatprep.subr.mxu0 0.0
    %745 = vmatpush2.msra.mxu0 0.0
    %746 = vmatprep.subr.mxu0 0.0
    %747 = vmatpush2.msra.mxu0 0.0
    %748 = vmatprep.subr.mxu0 0.0
    %749 = vmatpush2.msra.mxu0 0.0
    %750 = vmatprep.subr.mxu0 0.0
    %751 = vmatpush2.msra.mxu0 0.0
    %752 = vmatprep.subr.mxu0 0.0
    %753 = vmatpush2.msra.mxu0 0.0
    %754 = vmatprep.subr.mxu0 0.0
    %755 = vmatpush2.msra.mxu0 0.0
    %756 = vmatprep.subr.mxu0 0.0
    %757 = vmatpush2.msra.mxu0 0.0
    %758 = vmatprep.subr.mxu0 0.0
    %759 = vmatpush2.msra.mxu0 0.0
    %760 = vmatprep.subr.mxu0 0.0
    %761 = vmatpush2.msra.mxu0 0.0
    %762 = vmatprep.mubr.f32.mxu0 0.0
    %763 = vmatmul.mubr.f32.gmra.mxu0 %v696
    %v764 = vpop.f32.mrf.mxu0
    %v765 = vadd.f32 %v269, %v764
    %v766 = vpop.f32.mrf.mxu0
    %767 = vdwg.mxu0
    %768 = vmatprep.subr.mxu0 0.0
    %769 = vmatpush1.msra.mxu0 0.0
    %770 = vmatprep.subr.mxu0 0.0
    %771 = vmatpush1.msra.mxu0 0.0
    %772 = vmatprep.subr.mxu0 0.0
    %773 = vmatpush1.msra.mxu0 0.0
    %774 = vmatprep.subr.mxu0 0.0
    %775 = vmatpush1.msra.mxu0 0.0
    %776 = vmatprep.subr.mxu0 0.0
    %777 = vmatpush1.msra.mxu0 0.0
    %778 = vmatprep.subr.mxu0 0.0
    %779 = vmatpush1.msra.mxu0 0.0
    %780 = vmatprep.subr.mxu0 0.0
    %781 = vmatpush1.msra.mxu0 0.0
    %782 = vmatprep.subr.mxu0 0.0
    %783 = vmatpush1.msra.mxu0 0.0
    %784 = vmatprep.subr.mxu0 0.0
    %785 = vmatpush1.msra.mxu0 0.0
    %786 = vmatprep.subr.mxu0 0.0
    %787 = vmatpush1.msra.mxu0 0.0
    %788 = vmatprep.subr.mxu0 0.0
    %789 = vmatpush1.msra.mxu0 0.0
    %790 = vmatprep.subr.mxu0 0.0
    %791 = vmatpush1.msra.mxu0 0.0
    %792 = vmatprep.subr.mxu0 0.0
    %793 = vmatpush1.msra.mxu0 %v540
    %794 = vmatprep.subr.mxu0 0.0
    %795 = vmatpush1.msra.mxu0 %v538
    %796 = vmatprep.subr.mxu0 0.0
    %797 = vmatpush1.msra.mxu0 %v536
    %798 = vmatprep.subr.mxu0 0.0
    %799 = vmatpush1.msra.mxu0 %v534
    %800 = vmatprep.subr.mxu0 0.0
    %801 = vmatpush2.msra.mxu0 0.0
    %802 = vmatprep.subr.mxu0 0.0
    %803 = vmatpush2.msra.mxu0 0.0
    %804 = vmatprep.subr.mxu0 0.0
    %805 = vmatpush2.msra.mxu0 0.0
    %806 = vmatprep.subr.mxu0 0.0
    %807 = vmatpush2.msra.mxu0 0.0
    %808 = vmatprep.subr.mxu0 0.0
    %809 = vmatpush2.msra.mxu0 0.0
    %810 = vmatprep.subr.mxu0 0.0
    %811 = vmatpush2.msra.mxu0 0.0
    %812 = vmatprep.subr.mxu0 0.0
    %813 = vmatpush2.msra.mxu0 0.0
    %814 = vmatprep.subr.mxu0 0.0
    %815 = vmatpush2.msra.mxu0 0.0
    %816 = vmatprep.subr.mxu0 0.0
    %817 = vmatpush2.msra.mxu0 0.0
    %818 = vmatprep.subr.mxu0 0.0
    %819 = vmatpush2.msra.mxu0 0.0
    %820 = vmatprep.subr.mxu0 0.0
    %821 = vmatpush2.msra.mxu0 0.0
    %822 = vmatprep.subr.mxu0 0.0
    %823 = vmatpush2.msra.mxu0 0.0
    %824 = vmatprep.subr.mxu0 0.0
    %825 = vmatpush2.msra.mxu0 0.0
    %826 = vmatprep.subr.mxu0 0.0
    %827 = vmatpush2.msra.mxu0 0.0
    %828 = vmatprep.subr.mxu0 0.0
    %829 = vmatpush2.msra.mxu0 0.0
    %830 = vmatprep.subr.mxu0 0.0
    %831 = vmatpush2.msra.mxu0 0.0
    %832 = vmatprep.mubr.f32.mxu0 0.0
    %833 = vmatmul.mubr.f32.gmra.mxu0 %v618
    %v834 = vpop.f32.mrf.mxu0
    %v835 = vadd.f32 %v765, %v834
    %v836 = vpop.f32.mrf.mxu0
    %837 = vdwg.mxu0
    %v838 = vmax.f32 %v835, 0.0
    %843 = vrot.lane.b32.xlu0 %v78, 96
    %v844 = vpop.permute.xlu0 %843
    %845 = vrot.lane.b32.xlu0 %v79, 96
    %v846 = vpop.permute.xlu0 %845
    %847 = vrot.lane.b32.xlu0 %v80, 96
    %v848 = vpop.permute.xlu0 %847
    %849 = vrot.lane.b32.xlu0 %v81, 96
    %v850 = vpop.permute.xlu0 %849
    %v856 = vsel %vm184, %v278, 0
    %858 = vmatprep.subr.mxu0 0.0
    %859 = vmatpush1.msra.mxu0 0.0
    %860 = vmatprep.subr.mxu0 0.0
    %861 = vmatpush1.msra.mxu0 0.0
    %862 = vmatprep.subr.mxu0 0.0
    %863 = vmatpush1.msra.mxu0 0.0
    %864 = vmatprep.subr.mxu0 0.0
    %865 = vmatpush1.msra.mxu0 0.0
    %866 = vmatprep.subr.mxu0 0.0
    %867 = vmatpush1.msra.mxu0 0.0
    %868 = vmatprep.subr.mxu0 0.0
    %869 = vmatpush1.msra.mxu0 0.0
    %870 = vmatprep.subr.mxu0 0.0
    %871 = vmatpush1.msra.mxu0 0.0
    %872 = vmatprep.subr.mxu0 0.0
    %873 = vmatpush1.msra.mxu0 0.0
    %874 = vmatprep.subr.mxu0 0.0
    %875 = vmatpush1.msra.mxu0 0.0
    %876 = vmatprep.subr.mxu0 0.0
    %877 = vmatpush1.msra.mxu0 0.0
    %878 = vmatprep.subr.mxu0 0.0
    %879 = vmatpush1.msra.mxu0 0.0
    %880 = vmatprep.subr.mxu0 0.0
    %881 = vmatpush1.msra.mxu0 0.0
    %882 = vmatprep.subr.mxu0 0.0
    %883 = vmatpush1.msra.mxu0 %v850
    %884 = vmatprep.subr.mxu0 0.0
    %885 = vmatpush1.msra.mxu0 %v848
    %886 = vmatprep.subr.mxu0 0.0
    %887 = vmatpush1.msra.mxu0 %v846
    %888 = vmatprep.subr.mxu0 0.0
    %889 = vmatpush1.msra.mxu0 %v844
    %890 = vmatprep.subr.mxu0 0.0
    %891 = vmatpush2.msra.mxu0 0.0
    %892 = vmatprep.subr.mxu0 0.0
    %893 = vmatpush2.msra.mxu0 0.0
    %894 = vmatprep.subr.mxu0 0.0
    %895 = vmatpush2.msra.mxu0 0.0
    %896 = vmatprep.subr.mxu0 0.0
    %897 = vmatpush2.msra.mxu0 0.0
    %898 = vmatprep.subr.mxu0 0.0
    %899 = vmatpush2.msra.mxu0 0.0
    %900 = vmatprep.subr.mxu0 0.0
    %901 = vmatpush2.msra.mxu0 0.0
    %902 = vmatprep.subr.mxu0 0.0
    %903 = vmatpush2.msra.mxu0 0.0
    %904 = vmatprep.subr.mxu0 0.0
    %905 = vmatpush2.msra.mxu0 0.0
    %906 = vmatprep.subr.mxu0 0.0
    %907 = vmatpush2.msra.mxu0 0.0
    %908 = vmatprep.subr.mxu0 0.0
    %909 = vmatpush2.msra.mxu0 0.0
    %910 = vmatprep.subr.mxu0 0.0
    %911 = vmatpush2.msra.mxu0 0.0
    %912 = vmatprep.subr.mxu0 0.0
    %913 = vmatpush2.msra.mxu0 0.0
    %914 = vmatprep.subr.mxu0 0.0
    %915 = vmatpush2.msra.mxu0 0.0
    %916 = vmatprep.subr.mxu0 0.0
    %917 = vmatpush2.msra.mxu0 0.0
    %918 = vmatprep.subr.mxu0 0.0
    %919 = vmatpush2.msra.mxu0 0.0
    %920 = vmatprep.subr.mxu0 0.0
    %921 = vmatpush2.msra.mxu0 0.0
    %922 = vmatprep.mubr.f32.mxu0 0.0
    %923 = vmatmul.mubr.f32.gmra.mxu0 %v856
    %v924 = vpop.f32.mrf.mxu0
    %v925 = vadd.f32 %v273, %v924
    %v926 = vpop.f32.mrf.mxu0
    %927 = vdwg.mxu0
    %928 = vmatprep.subr.mxu0 0.0
    %929 = vmatpush1.msra.mxu0 0.0
    %930 = vmatprep.subr.mxu0 0.0
    %931 = vmatpush1.msra.mxu0 0.0
    %932 = vmatprep.subr.mxu0 0.0
    %933 = vmatpush1.msra.mxu0 0.0
    %934 = vmatprep.subr.mxu0 0.0
    %935 = vmatpush1.msra.mxu0 0.0
    %936 = vmatprep.subr.mxu0 0.0
    %937 = vmatpush1.msra.mxu0 0.0
    %938 = vmatprep.subr.mxu0 0.0
    %939 = vmatpush1.msra.mxu0 0.0
    %940 = vmatprep.subr.mxu0 0.0
    %941 = vmatpush1.msra.mxu0 0.0
    %942 = vmatprep.subr.mxu0 0.0
    %943 = vmatpush1.msra.mxu0 0.0
    %944 = vmatprep.subr.mxu0 0.0
    %945 = vmatpush1.msra.mxu0 0.0
    %946 = vmatprep.subr.mxu0 0.0
    %947 = vmatpush1.msra.mxu0 0.0
    %948 = vmatprep.subr.mxu0 0.0
    %949 = vmatpush1.msra.mxu0 0.0
    %950 = vmatprep.subr.mxu0 0.0
    %951 = vmatpush1.msra.mxu0 0.0
    %952 = vmatprep.subr.mxu0 0.0
    %953 = vmatpush1.msra.mxu0 %v81
    %954 = vmatprep.subr.mxu0 0.0
    %955 = vmatpush1.msra.mxu0 %v80
    %956 = vmatprep.subr.mxu0 0.0
    %957 = vmatpush1.msra.mxu0 %v79
    %958 = vmatprep.subr.mxu0 0.0
    %959 = vmatpush1.msra.mxu0 %v78
    %960 = vmatprep.subr.mxu0 0.0
    %961 = vmatpush2.msra.mxu0 0.0
    %962 = vmatprep.subr.mxu0 0.0
    %963 = vmatpush2.msra.mxu0 0.0
    %964 = vmatprep.subr.mxu0 0.0
    %965 = vmatpush2.msra.mxu0 0.0
    %966 = vmatprep.subr.mxu0 0.0
    %967 = vmatpush2.msra.mxu0 0.0
    %968 = vmatprep.subr.mxu0 0.0
    %969 = vmatpush2.msra.mxu0 0.0
    %970 = vmatprep.subr.mxu0 0.0
    %971 = vmatpush2.msra.mxu0 0.0
    %972 = vmatprep.subr.mxu0 0.0
    %973 = vmatpush2.msra.mxu0 0.0
    %974 = vmatprep.subr.mxu0 0.0
    %975 = vmatpush2.msra.mxu0 0.0
    %976 = vmatprep.subr.mxu0 0.0
    %977 = vmatpush2.msra.mxu0 0.0
    %978 = vmatprep.subr.mxu0 0.0
    %979 = vmatpush2.msra.mxu0 0.0
    %980 = vmatprep.subr.mxu0 0.0
    %981 = vmatpush2.msra.mxu0 0.0
    %982 = vmatprep.subr.mxu0 0.0
    %983 = vmatpush2.msra.mxu0 0.0
    %984 = vmatprep.subr.mxu0 0.0
    %985 = vmatpush2.msra.mxu0 0.0
    %986 = vmatprep.subr.mxu0 0.0
    %987 = vmatpush2.msra.mxu0 0.0
    %988 = vmatprep.subr.mxu0 0.0
    %989 = vmatpush2.msra.mxu0 0.0
    %990 = vmatprep.subr.mxu0 0.0
    %991 = vmatpush2.msra.mxu0 0.0
    %992 = vmatprep.mubr.f32.mxu0 0.0
    %993 = vmatmul.mubr.f32.gmra.mxu0 %v696
    %v994 = vpop.f32.mrf.mxu0
    %v995 = vadd.f32 %v925, %v994
    %v996 = vpop.f32.mrf.mxu0
    %997 = vdwg.mxu0
    %v998 = vmax.f32 %v995, 0.0
    %v1000 = vrot.slane %v694, 4
    %v1001 = vsel %vm184, %v1000, 0
    %1003 = vmatprep.subr.mxu0 0.0
    %1004 = vmatpush1.msra.mxu0 0.0
    %1005 = vmatprep.subr.mxu0 0.0
    %1006 = vmatpush1.msra.mxu0 0.0
    %1007 = vmatprep.subr.mxu0 0.0
    %1008 = vmatpush1.msra.mxu0 0.0
    %1009 = vmatprep.subr.mxu0 0.0
    %1010 = vmatpush1.msra.mxu0 0.0
    %1011 = vmatprep.subr.mxu0 0.0
    %1012 = vmatpush1.msra.mxu0 0.0
    %1013 = vmatprep.subr.mxu0 0.0
    %1014 = vmatpush1.msra.mxu0 0.0
    %1015 = vmatprep.subr.mxu0 0.0
    %1016 = vmatpush1.msra.mxu0 0.0
    %1017 = vmatprep.subr.mxu0 0.0
    %1018 = vmatpush1.msra.mxu0 0.0
    %1019 = vmatprep.subr.mxu0 0.0
    %1020 = vmatpush1.msra.mxu0 0.0
    %1021 = vmatprep.subr.mxu0 0.0
    %1022 = vmatpush1.msra.mxu0 0.0
    %1023 = vmatprep.subr.mxu0 0.0
    %1024 = vmatpush1.msra.mxu0 0.0
    %1025 = vmatprep.subr.mxu0 0.0
    %1026 = vmatpush1.msra.mxu0 0.0
    %1027 = vmatprep.subr.mxu0 0.0
    %1028 = vmatpush1.msra.mxu0 %v290
    %1029 = vmatprep.subr.mxu0 0.0
    %1030 = vmatpush1.msra.mxu0 %v288
    %1031 = vmatprep.subr.mxu0 0.0
    %1032 = vmatpush1.msra.mxu0 %v286
    %1033 = vmatprep.subr.mxu0 0.0
    %1034 = vmatpush1.msra.mxu0 %v284
    %1035 = vmatprep.subr.mxu0 0.0
    %1036 = vmatpush2.msra.mxu0 0.0
    %1037 = vmatprep.subr.mxu0 0.0
    %1038 = vmatpush2.msra.mxu0 0.0
    %1039 = vmatprep.subr.mxu0 0.0
    %1040 = vmatpush2.msra.mxu0 0.0
    %1041 = vmatprep.subr.mxu0 0.0
    %1042 = vmatpush2.msra.mxu0 0.0
    %1043 = vmatprep.subr.mxu0 0.0
    %1044 = vmatpush2.msra.mxu0 0.0
    %1045 = vmatprep.subr.mxu0 0.0
    %1046 = vmatpush2.msra.mxu0 0.0
    %1047 = vmatprep.subr.mxu0 0.0
    %1048 = vmatpush2.msra.mxu0 0.0
    %1049 = vmatprep.subr.mxu0 0.0
    %1050 = vmatpush2.msra.mxu0 0.0
    %1051 = vmatprep.subr.mxu0 0.0
    %1052 = vmatpush2.msra.mxu0 0.0
    %1053 = vmatprep.subr.mxu0 0.0
    %1054 = vmatpush2.msra.mxu0 0.0
    %1055 = vmatprep.subr.mxu0 0.0
    %1056 = vmatpush2.msra.mxu0 0.0
    %1057 = vmatprep.subr.mxu0 0.0
    %1058 = vmatpush2.msra.mxu0 0.0
    %1059 = vmatprep.subr.mxu0 0.0
    %1060 = vmatpush2.msra.mxu0 0.0
    %1061 = vmatprep.subr.mxu0 0.0
    %1062 = vmatpush2.msra.mxu0 0.0
    %1063 = vmatprep.subr.mxu0 0.0
    %1064 = vmatpush2.msra.mxu0 0.0
    %1065 = vmatprep.subr.mxu0 0.0
    %1066 = vmatpush2.msra.mxu0 0.0
    %1067 = vmatprep.mubr.f32.mxu0 0.0
    %1068 = vmatmul.mubr.f32.gmra.mxu0 %v1001
    %v1069 = vpop.f32.mrf.mxu0
    %v1070 = vadd.f32 0.0, %v1069
    %v1071 = vpop.f32.mrf.mxu0
    %1072 = vdwg.mxu0
    %v1074 = vrot.slane %v1070, 2
    %v1076 = vadd.f32 %v258, %v1074
    %v1077 = vmax.f32 %v1076, 0.0
    %v1079 = vsel %vm184, %v838, 0
    %1081 = vmatprep.subr.mxu0 0.0
    %1082 = vmatpush1.msra.mxu0 0.0
    %1083 = vmatprep.subr.mxu0 0.0
    %1084 = vmatpush1.msra.mxu0 0.0
    %1085 = vmatprep.subr.mxu0 0.0
    %1086 = vmatpush1.msra.mxu0 0.0
    %1087 = vmatprep.subr.mxu0 0.0
    %1088 = vmatpush1.msra.mxu0 0.0
    %1089 = vmatprep.subr.mxu0 0.0
    %1090 = vmatpush1.msra.mxu0 0.0
    %1091 = vmatprep.subr.mxu0 0.0
    %1092 = vmatpush1.msra.mxu0 0.0
    %1093 = vmatprep.subr.mxu0 0.0
    %1094 = vmatpush1.msra.mxu0 0.0
    %1095 = vmatprep.subr.mxu0 0.0
    %1096 = vmatpush1.msra.mxu0 0.0
    %1097 = vmatprep.subr.mxu0 0.0
    %1098 = vmatpush1.msra.mxu0 0.0
    %1099 = vmatprep.subr.mxu0 0.0
    %1100 = vmatpush1.msra.mxu0 0.0
    %1101 = vmatprep.subr.mxu0 0.0
    %1102 = vmatpush1.msra.mxu0 0.0
    %1103 = vmatprep.subr.mxu0 0.0
    %1104 = vmatpush1.msra.mxu0 0.0
    %1105 = vmatprep.subr.mxu0 0.0
    %1106 = vmatpush1.msra.mxu0 %v455
    %1107 = vmatprep.subr.mxu0 0.0
    %1108 = vmatpush1.msra.mxu0 %v453
    %1109 = vmatprep.subr.mxu0 0.0
    %1110 = vmatpush1.msra.mxu0 %v451
    %1111 = vmatprep.subr.mxu0 0.0
    %1112 = vmatpush1.msra.mxu0 %v449
    %1113 = vmatprep.subr.mxu0 0.0
    %1114 = vmatpush2.msra.mxu0 0.0
    %1115 = vmatprep.subr.mxu0 0.0
    %1116 = vmatpush2.msra.mxu0 0.0
    %1117 = vmatprep.subr.mxu0 0.0
    %1118 = vmatpush2.msra.mxu0 0.0
    %1119 = vmatprep.subr.mxu0 0.0
    %1120 = vmatpush2.msra.mxu0 0.0
    %1121 = vmatprep.subr.mxu0 0.0
    %1122 = vmatpush2.msra.mxu0 0.0
    %1123 = vmatprep.subr.mxu0 0.0
    %1124 = vmatpush2.msra.mxu0 0.0
    %1125 = vmatprep.subr.mxu0 0.0
    %1126 = vmatpush2.msra.mxu0 0.0
    %1127 = vmatprep.subr.mxu0 0.0
    %1128 = vmatpush2.msra.mxu0 0.0
    %1129 = vmatprep.subr.mxu0 0.0
    %1130 = vmatpush2.msra.mxu0 0.0
    %1131 = vmatprep.subr.mxu0 0.0
    %1132 = vmatpush2.msra.mxu0 0.0
    %1133 = vmatprep.subr.mxu0 0.0
    %1134 = vmatpush2.msra.mxu0 0.0
    %1135 = vmatprep.subr.mxu0 0.0
    %1136 = vmatpush2.msra.mxu0 0.0
    %1137 = vmatprep.subr.mxu0 0.0
    %1138 = vmatpush2.msra.mxu0 0.0
    %1139 = vmatprep.subr.mxu0 0.0
    %1140 = vmatpush2.msra.mxu0 0.0
    %1141 = vmatprep.subr.mxu0 0.0
    %1142 = vmatpush2.msra.mxu0 0.0
    %1143 = vmatprep.subr.mxu0 0.0
    %1144 = vmatpush2.msra.mxu0 0.0
    %1145 = vmatprep.mubr.f32.mxu0 0.0
    %1146 = vmatmul.mubr.f32.gmra.mxu0 %v1079
    %v1147 = vpop.f32.mrf.mxu0
    %v1148 = vadd.f32 %v269, %v1147
    %v1149 = vpop.f32.mrf.mxu0
    %1150 = vdwg.mxu0
    %1151 = vmatprep.subr.mxu0 0.0
    %1152 = vmatpush1.msra.mxu0 0.0
    %1153 = vmatprep.subr.mxu0 0.0
    %1154 = vmatpush1.msra.mxu0 0.0
    %1155 = vmatprep.subr.mxu0 0.0
    %1156 = vmatpush1.msra.mxu0 0.0
    %1157 = vmatprep.subr.mxu0 0.0
    %1158 = vmatpush1.msra.mxu0 0.0
    %1159 = vmatprep.subr.mxu0 0.0
    %1160 = vmatpush1.msra.mxu0 0.0
    %1161 = vmatprep.subr.mxu0 0.0
    %1162 = vmatpush1.msra.mxu0 0.0
    %1163 = vmatprep.subr.mxu0 0.0
    %1164 = vmatpush1.msra.mxu0 0.0
    %1165 = vmatprep.subr.mxu0 0.0
    %1166 = vmatpush1.msra.mxu0 0.0
    %1167 = vmatprep.subr.mxu0 0.0
    %1168 = vmatpush1.msra.mxu0 0.0
    %1169 = vmatprep.subr.mxu0 0.0
    %1170 = vmatpush1.msra.mxu0 0.0
    %1171 = vmatprep.subr.mxu0 0.0
    %1172 = vmatpush1.msra.mxu0 0.0
    %1173 = vmatprep.subr.mxu0 0.0
    %1174 = vmatpush1.msra.mxu0 0.0
    %1175 = vmatprep.subr.mxu0 0.0
    %1176 = vmatpush1.msra.mxu0 %v540
    %1177 = vmatprep.subr.mxu0 0.0
    %1178 = vmatpush1.msra.mxu0 %v538
    %1179 = vmatprep.subr.mxu0 0.0
    %1180 = vmatpush1.msra.mxu0 %v536
    %1181 = vmatprep.subr.mxu0 0.0
    %1182 = vmatpush1.msra.mxu0 %v534
    %1183 = vmatprep.subr.mxu0 0.0
    %1184 = vmatpush2.msra.mxu0 0.0
    %1185 = vmatprep.subr.mxu0 0.0
    %1186 = vmatpush2.msra.mxu0 0.0
    %1187 = vmatprep.subr.mxu0 0.0
    %1188 = vmatpush2.msra.mxu0 0.0
    %1189 = vmatprep.subr.mxu0 0.0
    %1190 = vmatpush2.msra.mxu0 0.0
    %1191 = vmatprep.subr.mxu0 0.0
    %1192 = vmatpush2.msra.mxu0 0.0
    %1193 = vmatprep.subr.mxu0 0.0
    %1194 = vmatpush2.msra.mxu0 0.0
    %1195 = vmatprep.subr.mxu0 0.0
    %1196 = vmatpush2.msra.mxu0 0.0
    %1197 = vmatprep.subr.mxu0 0.0
    %1198 = vmatpush2.msra.mxu0 0.0
    %1199 = vmatprep.subr.mxu0 0.0
    %1200 = vmatpush2.msra.mxu0 0.0
    %1201 = vmatprep.subr.mxu0 0.0
    %1202 = vmatpush2.msra.mxu0 0.0
    %1203 = vmatprep.subr.mxu0 0.0
    %1204 = vmatpush2.msra.mxu0 0.0
    %1205 = vmatprep.subr.mxu0 0.0
    %1206 = vmatpush2.msra.mxu0 0.0
    %1207 = vmatprep.subr.mxu0 0.0
    %1208 = vmatpush2.msra.mxu0 0.0
    %1209 = vmatprep.subr.mxu0 0.0
    %1210 = vmatpush2.msra.mxu0 0.0
    %1211 = vmatprep.subr.mxu0 0.0
    %1212 = vmatpush2.msra.mxu0 0.0
    %1213 = vmatprep.subr.mxu0 0.0
    %1214 = vmatpush2.msra.mxu0 0.0
    %1215 = vmatprep.mubr.f32.mxu0 0.0
    %1216 = vmatmul.mubr.f32.gmra.mxu0 %v1001
    %v1217 = vpop.f32.mrf.mxu0
    %v1218 = vadd.f32 %v1148, %v1217
    %v1219 = vpop.f32.mrf.mxu0
    %1220 = vdwg.mxu0
    %v1221 = vmax.f32 %v1218, 0.0
    %v1223 = vsel %vm184, %v998, 0
    %1225 = vmatprep.subr.mxu0 0.0
    %1226 = vmatpush1.msra.mxu0 0.0
    %1227 = vmatprep.subr.mxu0 0.0
    %1228 = vmatpush1.msra.mxu0 0.0
    %1229 = vmatprep.subr.mxu0 0.0
    %1230 = vmatpush1.msra.mxu0 0.0
    %1231 = vmatprep.subr.mxu0 0.0
    %1232 = vmatpush1.msra.mxu0 0.0
    %1233 = vmatprep.subr.mxu0 0.0
    %1234 = vmatpush1.msra.mxu0 0.0
    %1235 = vmatprep.subr.mxu0 0.0
    %1236 = vmatpush1.msra.mxu0 0.0
    %1237 = vmatprep.subr.mxu0 0.0
    %1238 = vmatpush1.msra.mxu0 0.0
    %1239 = vmatprep.subr.mxu0 0.0
    %1240 = vmatpush1.msra.mxu0 0.0
    %1241 = vmatprep.subr.mxu0 0.0
    %1242 = vmatpush1.msra.mxu0 0.0
    %1243 = vmatprep.subr.mxu0 0.0
    %1244 = vmatpush1.msra.mxu0 0.0
    %1245 = vmatprep.subr.mxu0 0.0
    %1246 = vmatpush1.msra.mxu0 0.0
    %1247 = vmatprep.subr.mxu0 0.0
    %1248 = vmatpush1.msra.mxu0 0.0
    %1249 = vmatprep.subr.mxu0 0.0
    %1250 = vmatpush1.msra.mxu0 %v850
    %1251 = vmatprep.subr.mxu0 0.0
    %1252 = vmatpush1.msra.mxu0 %v848
    %1253 = vmatprep.subr.mxu0 0.0
    %1254 = vmatpush1.msra.mxu0 %v846
    %1255 = vmatprep.subr.mxu0 0.0
    %1256 = vmatpush1.msra.mxu0 %v844
    %1257 = vmatprep.subr.mxu0 0.0
    %1258 = vmatpush2.msra.mxu0 0.0
    %1259 = vmatprep.subr.mxu0 0.0
    %1260 = vmatpush2.msra.mxu0 0.0
    %1261 = vmatprep.subr.mxu0 0.0
    %1262 = vmatpush2.msra.mxu0 0.0
    %1263 = vmatprep.subr.mxu0 0.0
    %1264 = vmatpush2.msra.mxu0 0.0
    %1265 = vmatprep.subr.mxu0 0.0
    %1266 = vmatpush2.msra.mxu0 0.0
    %1267 = vmatprep.subr.mxu0 0.0
    %1268 = vmatpush2.msra.mxu0 0.0
    %1269 = vmatprep.subr.mxu0 0.0
    %1270 = vmatpush2.msra.mxu0 0.0
    %1271 = vmatprep.subr.mxu0 0.0
    %1272 = vmatpush2.msra.mxu0 0.0
    %1273 = vmatprep.subr.mxu0 0.0
    %1274 = vmatpush2.msra.mxu0 0.0
    %1275 = vmatprep.subr.mxu0 0.0
    %1276 = vmatpush2.msra.mxu0 0.0
    %1277 = vmatprep.subr.mxu0 0.0
    %1278 = vmatpush2.msra.mxu0 0.0
    %1279 = vmatprep.subr.mxu0 0.0
    %1280 = vmatpush2.msra.mxu0 0.0
    %1281 = vmatprep.subr.mxu0 0.0
    %1282 = vmatpush2.msra.mxu0 0.0
    %1283 = vmatprep.subr.mxu0 0.0
    %1284 = vmatpush2.msra.mxu0 0.0
    %1285 = vmatprep.subr.mxu0 0.0
    %1286 = vmatpush2.msra.mxu0 0.0
    %1287 = vmatprep.subr.mxu0 0.0
    %1288 = vmatpush2.msra.mxu0 0.0
    %1289 = vmatprep.mubr.f32.mxu0 0.0
    %1290 = vmatmul.mubr.f32.gmra.mxu0 %v1223
    %v1291 = vpop.f32.mrf.mxu0
    %v1292 = vadd.f32 %v273, %v1291
    %v1293 = vpop.f32.mrf.mxu0
    %1294 = vdwg.mxu0
    %1295 = vmatprep.subr.mxu0 0.0
    %1296 = vmatpush1.msra.mxu0 0.0
    %1297 = vmatprep.subr.mxu0 0.0
    %1298 = vmatpush1.msra.mxu0 0.0
    %1299 = vmatprep.subr.mxu0 0.0
    %1300 = vmatpush1.msra.mxu0 0.0
    %1301 = vmatprep.subr.mxu0 0.0
    %1302 = vmatpush1.msra.mxu0 0.0
    %1303 = vmatprep.subr.mxu0 0.0
    %1304 = vmatpush1.msra.mxu0 0.0
    %1305 = vmatprep.subr.mxu0 0.0
    %1306 = vmatpush1.msra.mxu0 0.0
    %1307 = vmatprep.subr.mxu0 0.0
    %1308 = vmatpush1.msra.mxu0 0.0
    %1309 = vmatprep.subr.mxu0 0.0
    %1310 = vmatpush1.msra.mxu0 0.0
    %1311 = vmatprep.subr.mxu0 0.0
    %1312 = vmatpush1.msra.mxu0 0.0
    %1313 = vmatprep.subr.mxu0 0.0
    %1314 = vmatpush1.msra.mxu0 0.0
    %1315 = vmatprep.subr.mxu0 0.0
    %1316 = vmatpush1.msra.mxu0 0.0
    %1317 = vmatprep.subr.mxu0 0.0
    %1318 = vmatpush1.msra.mxu0 0.0
    %1319 = vmatprep.subr.mxu0 0.0
    %1320 = vmatpush1.msra.mxu0 %v81
    %1321 = vmatprep.subr.mxu0 0.0
    %1322 = vmatpush1.msra.mxu0 %v80
    %1323 = vmatprep.subr.mxu0 0.0
    %1324 = vmatpush1.msra.mxu0 %v79
    %1325 = vmatprep.subr.mxu0 0.0
    %1326 = vmatpush1.msra.mxu0 %v78
    %1327 = vmatprep.subr.mxu0 0.0
    %1328 = vmatpush2.msra.mxu0 0.0
    %1329 = vmatprep.subr.mxu0 0.0
    %1330 = vmatpush2.msra.mxu0 0.0
    %1331 = vmatprep.subr.mxu0 0.0
    %1332 = vmatpush2.msra.mxu0 0.0
    %1333 = vmatprep.subr.mxu0 0.0
    %1334 = vmatpush2.msra.mxu0 0.0
    %1335 = vmatprep.subr.mxu0 0.0
    %1336 = vmatpush2.msra.mxu0 0.0
    %1337 = vmatprep.subr.mxu0 0.0
    %1338 = vmatpush2.msra.mxu0 0.0
    %1339 = vmatprep.subr.mxu0 0.0
    %1340 = vmatpush2.msra.mxu0 0.0
    %1341 = vmatprep.subr.mxu0 0.0
    %1342 = vmatpush2.msra.mxu0 0.0
    %1343 = vmatprep.subr.mxu0 0.0
    %1344 = vmatpush2.msra.mxu0 0.0
    %1345 = vmatprep.subr.mxu0 0.0
    %1346 = vmatpush2.msra.mxu0 0.0
    %1347 = vmatprep.subr.mxu0 0.0
    %1348 = vmatpush2.msra.mxu0 0.0
    %1349 = vmatprep.subr.mxu0 0.0
    %1350 = vmatpush2.msra.mxu0 0.0
    %1351 = vmatprep.subr.mxu0 0.0
    %1352 = vmatpush2.msra.mxu0 0.0
    %1353 = vmatprep.subr.mxu0 0.0
    %1354 = vmatpush2.msra.mxu0 0.0
    %1355 = vmatprep.subr.mxu0 0.0
    %1356 = vmatpush2.msra.mxu0 0.0
    %1357 = vmatprep.subr.mxu0 0.0
    %1358 = vmatpush2.msra.mxu0 0.0
    %1359 = vmatprep.mubr.f32.mxu0 0.0
    %1360 = vmatmul.mubr.f32.gmra.mxu0 %v1079
    %v1361 = vpop.f32.mrf.mxu0
    %v1362 = vadd.f32 %v1292, %v1361
    %v1363 = vpop.f32.mrf.mxu0
    %1364 = vdwg.mxu0
    %v1365 = vmax.f32 %v1362, 0.0
    %v1367 = vrot.slane %v1077, 6
    %v1368 = vsel %vm184, %v1367, 0
    %1370 = vmatprep.subr.mxu0 0.0
    %1371 = vmatpush1.msra.mxu0 0.0
    %1372 = vmatprep.subr.mxu0 0.0
    %1373 = vmatpush1.msra.mxu0 0.0
    %1374 = vmatprep.subr.mxu0 0.0
    %1375 = vmatpush1.msra.mxu0 0.0
    %1376 = vmatprep.subr.mxu0 0.0
    %1377 = vmatpush1.msra.mxu0 0.0
    %1378 = vmatprep.subr.mxu0 0.0
    %1379 = vmatpush1.msra.mxu0 0.0
    %1380 = vmatprep.subr.mxu0 0.0
    %1381 = vmatpush1.msra.mxu0 0.0
    %1382 = vmatprep.subr.mxu0 0.0
    %1383 = vmatpush1.msra.mxu0 0.0
    %1384 = vmatprep.subr.mxu0 0.0
    %1385 = vmatpush1.msra.mxu0 0.0
    %1386 = vmatprep.subr.mxu0 0.0
    %1387 = vmatpush1.msra.mxu0 0.0
    %1388 = vmatprep.subr.mxu0 0.0
    %1389 = vmatpush1.msra.mxu0 0.0
    %1390 = vmatprep.subr.mxu0 0.0
    %1391 = vmatpush1.msra.mxu0 0.0
    %1392 = vmatprep.subr.mxu0 0.0
    %1393 = vmatpush1.msra.mxu0 0.0
    %1394 = vmatprep.subr.mxu0 0.0
    %1395 = vmatpush1.msra.mxu0 %v290
    %1396 = vmatprep.subr.mxu0 0.0
    %1397 = vmatpush1.msra.mxu0 %v288
    %1398 = vmatprep.subr.mxu0 0.0
    %1399 = vmatpush1.msra.mxu0 %v286
    %1400 = vmatprep.subr.mxu0 0.0
    %1401 = vmatpush1.msra.mxu0 %v284
    %1402 = vmatprep.subr.mxu0 0.0
    %1403 = vmatpush2.msra.mxu0 0.0
    %1404 = vmatprep.subr.mxu0 0.0
    %1405 = vmatpush2.msra.mxu0 0.0
    %1406 = vmatprep.subr.mxu0 0.0
    %1407 = vmatpush2.msra.mxu0 0.0
    %1408 = vmatprep.subr.mxu0 0.0
    %1409 = vmatpush2.msra.mxu0 0.0
    %1410 = vmatprep.subr.mxu0 0.0
    %1411 = vmatpush2.msra.mxu0 0.0
    %1412 = vmatprep.subr.mxu0 0.0
    %1413 = vmatpush2.msra.mxu0 0.0
    %1414 = vmatprep.subr.mxu0 0.0
    %1415 = vmatpush2.msra.mxu0 0.0
    %1416 = vmatprep.subr.mxu0 0.0
    %1417 = vmatpush2.msra.mxu0 0.0
    %1418 = vmatprep.subr.mxu0 0.0
    %1419 = vmatpush2.msra.mxu0 0.0
    %1420 = vmatprep.subr.mxu0 0.0
    %1421 = vmatpush2.msra.mxu0 0.0
    %1422 = vmatprep.subr.mxu0 0.0
    %1423 = vmatpush2.msra.mxu0 0.0
    %1424 = vmatprep.subr.mxu0 0.0
    %1425 = vmatpush2.msra.mxu0 0.0
    %1426 = vmatprep.subr.mxu0 0.0
    %1427 = vmatpush2.msra.mxu0 0.0
    %1428 = vmatprep.subr.mxu0 0.0
    %1429 = vmatpush2.msra.mxu0 0.0
    %1430 = vmatprep.subr.mxu0 0.0
    %1431 = vmatpush2.msra.mxu0 0.0
    %1432 = vmatprep.subr.mxu0 0.0
    %1433 = vmatpush2.msra.mxu0 0.0
    %1434 = vmatprep.mubr.f32.mxu0 0.0
    %1435 = vmatmul.mubr.f32.gmra.mxu0 %v1368
    %v1436 = vpop.f32.mrf.mxu0
    %v1437 = vadd.f32 0.0, %v1436
    %v1438 = vpop.f32.mrf.mxu0
    %1439 = vdwg.mxu0
    %v1440 = vadd.f32 %v263, %v1437
    %v1441 = vmax.f32 %v1440, 0.0
    %v1443 = vsel %vm184, %v1221, 0
    %1445 = vmatprep.subr.mxu0 0.0
    %1446 = vmatpush1.msra.mxu0 0.0
    %1447 = vmatprep.subr.mxu0 0.0
    %1448 = vmatpush1.msra.mxu0 0.0
    %1449 = vmatprep.subr.mxu0 0.0
    %1450 = vmatpush1.msra.mxu0 0.0
    %1451 = vmatprep.subr.mxu0 0.0
    %1452 = vmatpush1.msra.mxu0 0.0
    %1453 = vmatprep.subr.mxu0 0.0
    %1454 = vmatpush1.msra.mxu0 0.0
    %1455 = vmatprep.subr.mxu0 0.0
    %1456 = vmatpush1.msra.mxu0 0.0
    %1457 = vmatprep.subr.mxu0 0.0
    %1458 = vmatpush1.msra.mxu0 0.0
    %1459 = vmatprep.subr.mxu0 0.0
    %1460 = vmatpush1.msra.mxu0 0.0
    %1461 = vmatprep.subr.mxu0 0.0
    %1462 = vmatpush1.msra.mxu0 0.0
    %1463 = vmatprep.subr.mxu0 0.0
    %1464 = vmatpush1.msra.mxu0 0.0
    %1465 = vmatprep.subr.mxu0 0.0
    %1466 = vmatpush1.msra.mxu0 0.0
    %1467 = vmatprep.subr.mxu0 0.0
    %1468 = vmatpush1.msra.mxu0 0.0
    %1469 = vmatprep.subr.mxu0 0.0
    %1470 = vmatpush1.msra.mxu0 %v455
    %1471 = vmatprep.subr.mxu0 0.0
    %1472 = vmatpush1.msra.mxu0 %v453
    %1473 = vmatprep.subr.mxu0 0.0
    %1474 = vmatpush1.msra.mxu0 %v451
    %1475 = vmatprep.subr.mxu0 0.0
    %1476 = vmatpush1.msra.mxu0 %v449
    %1477 = vmatprep.subr.mxu0 0.0
    %1478 = vmatpush2.msra.mxu0 0.0
    %1479 = vmatprep.subr.mxu0 0.0
    %1480 = vmatpush2.msra.mxu0 0.0
    %1481 = vmatprep.subr.mxu0 0.0
    %1482 = vmatpush2.msra.mxu0 0.0
    %1483 = vmatprep.subr.mxu0 0.0
    %1484 = vmatpush2.msra.mxu0 0.0
    %1485 = vmatprep.subr.mxu0 0.0
    %1486 = vmatpush2.msra.mxu0 0.0
    %1487 = vmatprep.subr.mxu0 0.0
    %1488 = vmatpush2.msra.mxu0 0.0
    %1489 = vmatprep.subr.mxu0 0.0
    %1490 = vmatpush2.msra.mxu0 0.0
    %1491 = vmatprep.subr.mxu0 0.0
    %1492 = vmatpush2.msra.mxu0 0.0
    %1493 = vmatprep.subr.mxu0 0.0
    %1494 = vmatpush2.msra.mxu0 0.0
    %1495 = vmatprep.subr.mxu0 0.0
    %1496 = vmatpush2.msra.mxu0 0.0
    %1497 = vmatprep.subr.mxu0 0.0
    %1498 = vmatpush2.msra.mxu0 0.0
    %1499 = vmatprep.subr.mxu0 0.0
    %1500 = vmatpush2.msra.mxu0 0.0
    %1501 = vmatprep.subr.mxu0 0.0
    %1502 = vmatpush2.msra.mxu0 0.0
    %1503 = vmatprep.subr.mxu0 0.0
    %1504 = vmatpush2.msra.mxu0 0.0
    %1505 = vmatprep.subr.mxu0 0.0
    %1506 = vmatpush2.msra.mxu0 0.0
    %1507 = vmatprep.subr.mxu0 0.0
    %1508 = vmatpush2.msra.mxu0 0.0
    %1509 = vmatprep.mubr.f32.mxu0 0.0
    %1510 = vmatmul.mubr.f32.gmra.mxu0 %v1443
    %v1511 = vpop.f32.mrf.mxu0
    %v1512 = vadd.f32 %v269, %v1511
    %v1513 = vpop.f32.mrf.mxu0
    %1514 = vdwg.mxu0
    %1515 = vmatprep.subr.mxu0 0.0
    %1516 = vmatpush1.msra.mxu0 0.0
    %1517 = vmatprep.subr.mxu0 0.0
    %1518 = vmatpush1.msra.mxu0 0.0
    %1519 = vmatprep.subr.mxu0 0.0
    %1520 = vmatpush1.msra.mxu0 0.0
    %1521 = vmatprep.subr.mxu0 0.0
    %1522 = vmatpush1.msra.mxu0 0.0
    %1523 = vmatprep.subr.mxu0 0.0
    %1524 = vmatpush1.msra.mxu0 0.0
    %1525 = vmatprep.subr.mxu0 0.0
    %1526 = vmatpush1.msra.mxu0 0.0
    %1527 = vmatprep.subr.mxu0 0.0
    %1528 = vmatpush1.msra.mxu0 0.0
    %1529 = vmatprep.subr.mxu0 0.0
    %1530 = vmatpush1.msra.mxu0 0.0
    %1531 = vmatprep.subr.mxu0 0.0
    %1532 = vmatpush1.msra.mxu0 0.0
    %1533 = vmatprep.subr.mxu0 0.0
    %1534 = vmatpush1.msra.mxu0 0.0
    %1535 = vmatprep.subr.mxu0 0.0
    %1536 = vmatpush1.msra.mxu0 0.0
    %1537 = vmatprep.subr.mxu0 0.0
    %1538 = vmatpush1.msra.mxu0 0.0
    %1539 = vmatprep.subr.mxu0 0.0
    %1540 = vmatpush1.msra.mxu0 %v540
    %1541 = vmatprep.subr.mxu0 0.0
    %1542 = vmatpush1.msra.mxu0 %v538
    %1543 = vmatprep.subr.mxu0 0.0
    %1544 = vmatpush1.msra.mxu0 %v536
    %1545 = vmatprep.subr.mxu0 0.0
    %1546 = vmatpush1.msra.mxu0 %v534
    %1547 = vmatprep.subr.mxu0 0.0
    %1548 = vmatpush2.msra.mxu0 0.0
    %1549 = vmatprep.subr.mxu0 0.0
    %1550 = vmatpush2.msra.mxu0 0.0
    %1551 = vmatprep.subr.mxu0 0.0
    %1552 = vmatpush2.msra.mxu0 0.0
    %1553 = vmatprep.subr.mxu0 0.0
    %1554 = vmatpush2.msra.mxu0 0.0
    %1555 = vmatprep.subr.mxu0 0.0
    %1556 = vmatpush2.msra.mxu0 0.0
    %1557 = vmatprep.subr.mxu0 0.0
    %1558 = vmatpush2.msra.mxu0 0.0
    %1559 = vmatprep.subr.mxu0 0.0
    %1560 = vmatpush2.msra.mxu0 0.0
    %1561 = vmatprep.subr.mxu0 0.0
    %1562 = vmatpush2.msra.mxu0 0.0
    %1563 = vmatprep.subr.mxu0 0.0
    %1564 = vmatpush2.msra.mxu0 0.0
    %1565 = vmatprep.subr.mxu0 0.0
    %1566 = vmatpush2.msra.mxu0 0.0
    %1567 = vmatprep.subr.mxu0 0.0
    %1568 = vmatpush2.msra.mxu0 0.0
    %1569 = vmatprep.subr.mxu0 0.0
    %1570 = vmatpush2.msra.mxu0 0.0
    %1571 = vmatprep.subr.mxu0 0.0
    %1572 = vmatpush2.msra.mxu0 0.0
    %1573 = vmatprep.subr.mxu0 0.0
    %1574 = vmatpush2.msra.mxu0 0.0
    %1575 = vmatprep.subr.mxu0 0.0
    %1576 = vmatpush2.msra.mxu0 0.0
    %1577 = vmatprep.subr.mxu0 0.0
    %1578 = vmatpush2.msra.mxu0 0.0
    %1579 = vmatprep.mubr.f32.mxu0 0.0
    %1580 = vmatmul.mubr.f32.gmra.mxu0 %v1368
    %v1581 = vpop.f32.mrf.mxu0
    %v1582 = vadd.f32 %v1512, %v1581
    %v1583 = vpop.f32.mrf.mxu0
    %1584 = vdwg.mxu0
    %v1585 = vmax.f32 %v1582, 0.0
    %v1587 = vsel %vm184, %v1365, 0
    %1589 = vmatprep.subr.mxu0 0.0
    %1590 = vmatpush1.msra.mxu0 0.0
    %1591 = vmatprep.subr.mxu0 0.0
    %1592 = vmatpush1.msra.mxu0 0.0
    %1593 = vmatprep.subr.mxu0 0.0
    %1594 = vmatpush1.msra.mxu0 0.0
    %1595 = vmatprep.subr.mxu0 0.0
    %1596 = vmatpush1.msra.mxu0 0.0
    %1597 = vmatprep.subr.mxu0 0.0
    %1598 = vmatpush1.msra.mxu0 0.0
    %1599 = vmatprep.subr.mxu0 0.0
    %1600 = vmatpush1.msra.mxu0 0.0
    %1601 = vmatprep.subr.mxu0 0.0
    %1602 = vmatpush1.msra.mxu0 0.0
    %1603 = vmatprep.subr.mxu0 0.0
    %1604 = vmatpush1.msra.mxu0 0.0
    %1605 = vmatprep.subr.mxu0 0.0
    %1606 = vmatpush1.msra.mxu0 0.0
    %1607 = vmatprep.subr.mxu0 0.0
    %1608 = vmatpush1.msra.mxu0 0.0
    %1609 = vmatprep.subr.mxu0 0.0
    %1610 = vmatpush1.msra.mxu0 0.0
    %1611 = vmatprep.subr.mxu0 0.0
    %1612 = vmatpush1.msra.mxu0 0.0
    %1613 = vmatprep.subr.mxu0 0.0
    %1614 = vmatpush1.msra.mxu0 %v850
    %1615 = vmatprep.subr.mxu0 0.0
    %1616 = vmatpush1.msra.mxu0 %v848
    %1617 = vmatprep.subr.mxu0 0.0
    %1618 = vmatpush1.msra.mxu0 %v846
    %1619 = vmatprep.subr.mxu0 0.0
    %1620 = vmatpush1.msra.mxu0 %v844
    %1621 = vmatprep.subr.mxu0 0.0
    %1622 = vmatpush2.msra.mxu0 0.0
    %1623 = vmatprep.subr.mxu0 0.0
    %1624 = vmatpush2.msra.mxu0 0.0
    %1625 = vmatprep.subr.mxu0 0.0
    %1626 = vmatpush2.msra.mxu0 0.0
    %1627 = vmatprep.subr.mxu0 0.0
    %1628 = vmatpush2.msra.mxu0 0.0
    %1629 = vmatprep.subr.mxu0 0.0
    %1630 = vmatpush2.msra.mxu0 0.0
    %1631 = vmatprep.subr.mxu0 0.0
    %1632 = vmatpush2.msra.mxu0 0.0
    %1633 = vmatprep.subr.mxu0 0.0
    %1634 = vmatpush2.msra.mxu0 0.0
    %1635 = vmatprep.subr.mxu0 0.0
    %1636 = vmatpush2.msra.mxu0 0.0
    %1637 = vmatprep.subr.mxu0 0.0
    %1638 = vmatpush2.msra.mxu0 0.0
    %1639 = vmatprep.subr.mxu0 0.0
    %1640 = vmatpush2.msra.mxu0 0.0
    %1641 = vmatprep.subr.mxu0 0.0
    %1642 = vmatpush2.msra.mxu0 0.0
    %1643 = vmatprep.subr.mxu0 0.0
    %1644 = vmatpush2.msra.mxu0 0.0
    %1645 = vmatprep.subr.mxu0 0.0
    %1646 = vmatpush2.msra.mxu0 0.0
    %1647 = vmatprep.subr.mxu0 0.0
    %1648 = vmatpush2.msra.mxu0 0.0
    %1649 = vmatprep.subr.mxu0 0.0
    %1650 = vmatpush2.msra.mxu0 0.0
    %1651 = vmatprep.subr.mxu0 0.0
    %1652 = vmatpush2.msra.mxu0 0.0
    %1653 = vmatprep.mubr.f32.mxu0 0.0
    %1654 = vmatmul.mubr.f32.gmra.mxu0 %v1587
    %v1655 = vpop.f32.mrf.mxu0
    %v1656 = vadd.f32 %v273, %v1655
    %v1657 = vpop.f32.mrf.mxu0
    %1658 = vdwg.mxu0
    %1659 = vmatprep.subr.mxu0 0.0
    %1660 = vmatpush1.msra.mxu0 0.0
    %1661 = vmatprep.subr.mxu0 0.0
    %1662 = vmatpush1.msra.mxu0 0.0
    %1663 = vmatprep.subr.mxu0 0.0
    %1664 = vmatpush1.msra.mxu0 0.0
    %1665 = vmatprep.subr.mxu0 0.0
    %1666 = vmatpush1.msra.mxu0 0.0
    %1667 = vmatprep.subr.mxu0 0.0
    %1668 = vmatpush1.msra.mxu0 0.0
    %1669 = vmatprep.subr.mxu0 0.0
    %1670 = vmatpush1.msra.mxu0 0.0
    %1671 = vmatprep.subr.mxu0 0.0
    %1672 = vmatpush1.msra.mxu0 0.0
    %1673 = vmatprep.subr.mxu0 0.0
    %1674 = vmatpush1.msra.mxu0 0.0
    %1675 = vmatprep.subr.mxu0 0.0
    %1676 = vmatpush1.msra.mxu0 0.0
    %1677 = vmatprep.subr.mxu0 0.0
    %1678 = vmatpush1.msra.mxu0 0.0
    %1679 = vmatprep.subr.mxu0 0.0
    %1680 = vmatpush1.msra.mxu0 0.0
    %1681 = vmatprep.subr.mxu0 0.0
    %1682 = vmatpush1.msra.mxu0 0.0
    %1683 = vmatprep.subr.mxu0 0.0
    %1684 = vmatpush1.msra.mxu0 %v81
    %1685 = vmatprep.subr.mxu0 0.0
    %1686 = vmatpush1.msra.mxu0 %v80
    %1687 = vmatprep.subr.mxu0 0.0
    %1688 = vmatpush1.msra.mxu0 %v79
    %1689 = vmatprep.subr.mxu0 0.0
    %1690 = vmatpush1.msra.mxu0 %v78
    %1691 = vmatprep.subr.mxu0 0.0
    %1692 = vmatpush2.msra.mxu0 0.0
    %1693 = vmatprep.subr.mxu0 0.0
    %1694 = vmatpush2.msra.mxu0 0.0
    %1695 = vmatprep.subr.mxu0 0.0
    %1696 = vmatpush2.msra.mxu0 0.0
    %1697 = vmatprep.subr.mxu0 0.0
    %1698 = vmatpush2.msra.mxu0 0.0
    %1699 = vmatprep.subr.mxu0 0.0
    %1700 = vmatpush2.msra.mxu0 0.0
    %1701 = vmatprep.subr.mxu0 0.0
    %1702 = vmatpush2.msra.mxu0 0.0
    %1703 = vmatprep.subr.mxu0 0.0
    %1704 = vmatpush2.msra.mxu0 0.0
    %1705 = vmatprep.subr.mxu0 0.0
    %1706 = vmatpush2.msra.mxu0 0.0
    %1707 = vmatprep.subr.mxu0 0.0
    %1708 = vmatpush2.msra.mxu0 0.0
    %1709 = vmatprep.subr.mxu0 0.0
    %1710 = vmatpush2.msra.mxu0 0.0
    %1711 = vmatprep.subr.mxu0 0.0
    %1712 = vmatpush2.msra.mxu0 0.0
    %1713 = vmatprep.subr.mxu0 0.0
    %1714 = vmatpush2.msra.mxu0 0.0
    %1715 = vmatprep.subr.mxu0 0.0
    %1716 = vmatpush2.msra.mxu0 0.0
    %1717 = vmatprep.subr.mxu0 0.0
    %1718 = vmatpush2.msra.mxu0 0.0
    %1719 = vmatprep.subr.mxu0 0.0
    %1720 = vmatpush2.msra.mxu0 0.0
    %1721 = vmatprep.subr.mxu0 0.0
    %1722 = vmatpush2.msra.mxu0 0.0
    %1723 = vmatprep.mubr.f32.mxu0 0.0
    %1724 = vmatmul.mubr.f32.gmra.mxu0 %v1443
    %v1725 = vpop.f32.mrf.mxu0
    %v1726 = vadd.f32 %v1656, %v1725
    %v1727 = vpop.f32.mrf.mxu0
    %1728 = vdwg.mxu0
    %v1729 = vmax.f32 %v1726, 0.0
    %v1731 = vsel %vm184, %v1441, 0
    %1733 = vmatprep.subr.mxu0 0.0
    %1734 = vmatpush1.msra.mxu0 0.0
    %1735 = vmatprep.subr.mxu0 0.0
    %1736 = vmatpush1.msra.mxu0 0.0
    %1737 = vmatprep.subr.mxu0 0.0
    %1738 = vmatpush1.msra.mxu0 0.0
    %1739 = vmatprep.subr.mxu0 0.0
    %1740 = vmatpush1.msra.mxu0 0.0
    %1741 = vmatprep.subr.mxu0 0.0
    %1742 = vmatpush1.msra.mxu0 0.0
    %1743 = vmatprep.subr.mxu0 0.0
    %1744 = vmatpush1.msra.mxu0 0.0
    %1745 = vmatprep.subr.mxu0 0.0
    %1746 = vmatpush1.msra.mxu0 0.0
    %1747 = vmatprep.subr.mxu0 0.0
    %1748 = vmatpush1.msra.mxu0 0.0
    %1749 = vmatprep.subr.mxu0 0.0
    %1750 = vmatpush1.msra.mxu0 0.0
    %1751 = vmatprep.subr.mxu0 0.0
    %1752 = vmatpush1.msra.mxu0 0.0
    %1753 = vmatprep.subr.mxu0 0.0
    %1754 = vmatpush1.msra.mxu0 0.0
    %1755 = vmatprep.subr.mxu0 0.0
    %1756 = vmatpush1.msra.mxu0 0.0
    %1757 = vmatprep.subr.mxu0 0.0
    %1758 = vmatpush1.msra.mxu0 %v290
    %1759 = vmatprep.subr.mxu0 0.0
    %1760 = vmatpush1.msra.mxu0 %v288
    %1761 = vmatprep.subr.mxu0 0.0
    %1762 = vmatpush1.msra.mxu0 %v286
    %1763 = vmatprep.subr.mxu0 0.0
    %1764 = vmatpush1.msra.mxu0 %v284
    %1765 = vmatprep.subr.mxu0 0.0
    %1766 = vmatpush2.msra.mxu0 0.0
    %1767 = vmatprep.subr.mxu0 0.0
    %1768 = vmatpush2.msra.mxu0 0.0
    %1769 = vmatprep.subr.mxu0 0.0
    %1770 = vmatpush2.msra.mxu0 0.0
    %1771 = vmatprep.subr.mxu0 0.0
    %1772 = vmatpush2.msra.mxu0 0.0
    %1773 = vmatprep.subr.mxu0 0.0
    %1774 = vmatpush2.msra.mxu0 0.0
    %1775 = vmatprep.subr.mxu0 0.0
    %1776 = vmatpush2.msra.mxu0 0.0
    %1777 = vmatprep.subr.mxu0 0.0
    %1778 = vmatpush2.msra.mxu0 0.0
    %1779 = vmatprep.subr.mxu0 0.0
    %1780 = vmatpush2.msra.mxu0 0.0
    %1781 = vmatprep.subr.mxu0 0.0
    %1782 = vmatpush2.msra.mxu0 0.0
    %1783 = vmatprep.subr.mxu0 0.0
    %1784 = vmatpush2.msra.mxu0 0.0
    %1785 = vmatprep.subr.mxu0 0.0
    %1786 = vmatpush2.msra.mxu0 0.0
    %1787 = vmatprep.subr.mxu0 0.0
    %1788 = vmatpush2.msra.mxu0 0.0
    %1789 = vmatprep.subr.mxu0 0.0
    %1790 = vmatpush2.msra.mxu0 0.0
    %1791 = vmatprep.subr.mxu0 0.0
    %1792 = vmatpush2.msra.mxu0 0.0
    %1793 = vmatprep.subr.mxu0 0.0
    %1794 = vmatpush2.msra.mxu0 0.0
    %1795 = vmatprep.subr.mxu0 0.0
    %1796 = vmatpush2.msra.mxu0 0.0
    %1797 = vmatprep.mubr.f32.mxu0 0.0
    %1798 = vmatmul.mubr.f32.gmra.mxu0 %v1731
    %v1799 = vpop.f32.mrf.mxu0
    %v1800 = vadd.f32 0.0, %v1799
    %v1801 = vpop.f32.mrf.mxu0
    %1802 = vdwg.mxu0
    %v1804 = vrot.slane %v1800, 6
    %v1806 = vadd.f32 %v263, %v1804
    %v1807 = vmax.f32 %v1806, 0.0
    %v1809 = vsel %vm184, %v1585, 0
    %1811 = vmatprep.subr.mxu0 0.0
    %1812 = vmatpush1.msra.mxu0 0.0
    %1813 = vmatprep.subr.mxu0 0.0
    %1814 = vmatpush1.msra.mxu0 0.0
    %1815 = vmatprep.subr.mxu0 0.0
    %1816 = vmatpush1.msra.mxu0 0.0
    %1817 = vmatprep.subr.mxu0 0.0
    %1818 = vmatpush1.msra.mxu0 0.0
    %1819 = vmatprep.subr.mxu0 0.0
    %1820 = vmatpush1.msra.mxu0 0.0
    %1821 = vmatprep.subr.mxu0 0.0
    %1822 = vmatpush1.msra.mxu0 0.0
    %1823 = vmatprep.subr.mxu0 0.0
    %1824 = vmatpush1.msra.mxu0 0.0
    %1825 = vmatprep.subr.mxu0 0.0
    %1826 = vmatpush1.msra.mxu0 0.0
    %1827 = vmatprep.subr.mxu0 0.0
    %1828 = vmatpush1.msra.mxu0 0.0
    %1829 = vmatprep.subr.mxu0 0.0
    %1830 = vmatpush1.msra.mxu0 0.0
    %1831 = vmatprep.subr.mxu0 0.0
    %1832 = vmatpush1.msra.mxu0 0.0
    %1833 = vmatprep.subr.mxu0 0.0
    %1834 = vmatpush1.msra.mxu0 0.0
    %1835 = vmatprep.subr.mxu0 0.0
    %1836 = vmatpush1.msra.mxu0 %v455
    %1837 = vmatprep.subr.mxu0 0.0
    %1838 = vmatpush1.msra.mxu0 %v453
    %1839 = vmatprep.subr.mxu0 0.0
    %1840 = vmatpush1.msra.mxu0 %v451
    %1841 = vmatprep.subr.mxu0 0.0
    %1842 = vmatpush1.msra.mxu0 %v449
    %1843 = vmatprep.subr.mxu0 0.0
    %1844 = vmatpush2.msra.mxu0 0.0
    %1845 = vmatprep.subr.mxu0 0.0
    %1846 = vmatpush2.msra.mxu0 0.0
    %1847 = vmatprep.subr.mxu0 0.0
    %1848 = vmatpush2.msra.mxu0 0.0
    %1849 = vmatprep.subr.mxu0 0.0
    %1850 = vmatpush2.msra.mxu0 0.0
    %1851 = vmatprep.subr.mxu0 0.0
    %1852 = vmatpush2.msra.mxu0 0.0
    %1853 = vmatprep.subr.mxu0 0.0
    %1854 = vmatpush2.msra.mxu0 0.0
    %1855 = vmatprep.subr.mxu0 0.0
    %1856 = vmatpush2.msra.mxu0 0.0
    %1857 = vmatprep.subr.mxu0 0.0
    %1858 = vmatpush2.msra.mxu0 0.0
    %1859 = vmatprep.subr.mxu0 0.0
    %1860 = vmatpush2.msra.mxu0 0.0
    %1861 = vmatprep.subr.mxu0 0.0
    %1862 = vmatpush2.msra.mxu0 0.0
    %1863 = vmatprep.subr.mxu0 0.0
    %1864 = vmatpush2.msra.mxu0 0.0
    %1865 = vmatprep.subr.mxu0 0.0
    %1866 = vmatpush2.msra.mxu0 0.0
    %1867 = vmatprep.subr.mxu0 0.0
    %1868 = vmatpush2.msra.mxu0 0.0
    %1869 = vmatprep.subr.mxu0 0.0
    %1870 = vmatpush2.msra.mxu0 0.0
    %1871 = vmatprep.subr.mxu0 0.0
    %1872 = vmatpush2.msra.mxu0 0.0
    %1873 = vmatprep.subr.mxu0 0.0
    %1874 = vmatpush2.msra.mxu0 0.0
    %1875 = vmatprep.mubr.f32.mxu0 0.0
    %1876 = vmatmul.mubr.f32.gmra.mxu0 %v1809
    %v1877 = vpop.f32.mrf.mxu0
    %v1878 = vadd.f32 %v269, %v1877
    %v1879 = vpop.f32.mrf.mxu0
    %1880 = vdwg.mxu0
    %1881 = vmatprep.subr.mxu0 0.0
    %1882 = vmatpush1.msra.mxu0 0.0
    %1883 = vmatprep.subr.mxu0 0.0
    %1884 = vmatpush1.msra.mxu0 0.0
    %1885 = vmatprep.subr.mxu0 0.0
    %1886 = vmatpush1.msra.mxu0 0.0
    %1887 = vmatprep.subr.mxu0 0.0
    %1888 = vmatpush1.msra.mxu0 0.0
    %1889 = vmatprep.subr.mxu0 0.0
    %1890 = vmatpush1.msra.mxu0 0.0
    %1891 = vmatprep.subr.mxu0 0.0
    %1892 = vmatpush1.msra.mxu0 0.0
    %1893 = vmatprep.subr.mxu0 0.0
    %1894 = vmatpush1.msra.mxu0 0.0
    %1895 = vmatprep.subr.mxu0 0.0
    %1896 = vmatpush1.msra.mxu0 0.0
    %1897 = vmatprep.subr.mxu0 0.0
    %1898 = vmatpush1.msra.mxu0 0.0
    %1899 = vmatprep.subr.mxu0 0.0
    %1900 = vmatpush1.msra.mxu0 0.0
    %1901 = vmatprep.subr.mxu0 0.0
    %1902 = vmatpush1.msra.mxu0 0.0
    %1903 = vmatprep.subr.mxu0 0.0
    %1904 = vmatpush1.msra.mxu0 0.0
    %1905 = vmatprep.subr.mxu0 0.0
    %1906 = vmatpush1.msra.mxu0 %v540
    %1907 = vmatprep.subr.mxu0 0.0
    %1908 = vmatpush1.msra.mxu0 %v538
    %1909 = vmatprep.subr.mxu0 0.0
    %1910 = vmatpush1.msra.mxu0 %v536
    %1911 = vmatprep.subr.mxu0 0.0
    %1912 = vmatpush1.msra.mxu0 %v534
    %1913 = vmatprep.subr.mxu0 0.0
    %1914 = vmatpush2.msra.mxu0 0.0
    %1915 = vmatprep.subr.mxu0 0.0
    %1916 = vmatpush2.msra.mxu0 0.0
    %1917 = vmatprep.subr.mxu0 0.0
    %1918 = vmatpush2.msra.mxu0 0.0
    %1919 = vmatprep.subr.mxu0 0.0
    %1920 = vmatpush2.msra.mxu0 0.0
    %1921 = vmatprep.subr.mxu0 0.0
    %1922 = vmatpush2.msra.mxu0 0.0
    %1923 = vmatprep.subr.mxu0 0.0
    %1924 = vmatpush2.msra.mxu0 0.0
    %1925 = vmatprep.subr.mxu0 0.0
    %1926 = vmatpush2.msra.mxu0 0.0
    %1927 = vmatprep.subr.mxu0 0.0
    %1928 = vmatpush2.msra.mxu0 0.0
    %1929 = vmatprep.subr.mxu0 0.0
    %1930 = vmatpush2.msra.mxu0 0.0
    %1931 = vmatprep.subr.mxu0 0.0
    %1932 = vmatpush2.msra.mxu0 0.0
    %1933 = vmatprep.subr.mxu0 0.0
    %1934 = vmatpush2.msra.mxu0 0.0
    %1935 = vmatprep.subr.mxu0 0.0
    %1936 = vmatpush2.msra.mxu0 0.0
    %1937 = vmatprep.subr.mxu0 0.0
    %1938 = vmatpush2.msra.mxu0 0.0
    %1939 = vmatprep.subr.mxu0 0.0
    %1940 = vmatpush2.msra.mxu0 0.0
    %1941 = vmatprep.subr.mxu0 0.0
    %1942 = vmatpush2.msra.mxu0 0.0
    %1943 = vmatprep.subr.mxu0 0.0
    %1944 = vmatpush2.msra.mxu0 0.0
    %1945 = vmatprep.mubr.f32.mxu0 0.0
    %1946 = vmatmul.mubr.f32.gmra.mxu0 %v1731
    %v1947 = vpop.f32.mrf.mxu0
    %v1948 = vadd.f32 %v1878, %v1947
    %v1949 = vpop.f32.mrf.mxu0
    %1950 = vdwg.mxu0
    %v1951 = vmax.f32 %v1948, 0.0
    %v1953 = vsel %vm184, %v1729, 0
    %1955 = vmatprep.subr.mxu0 0.0
    %1956 = vmatpush1.msra.mxu0 0.0
    %1957 = vmatprep.subr.mxu0 0.0
    %1958 = vmatpush1.msra.mxu0 0.0
    %1959 = vmatprep.subr.mxu0 0.0
    %1960 = vmatpush1.msra.mxu0 0.0
    %1961 = vmatprep.subr.mxu0 0.0
    %1962 = vmatpush1.msra.mxu0 0.0
    %1963 = vmatprep.subr.mxu0 0.0
    %1964 = vmatpush1.msra.mxu0 0.0
    %1965 = vmatprep.subr.mxu0 0.0
    %1966 = vmatpush1.msra.mxu0 0.0
    %1967 = vmatprep.subr.mxu0 0.0
    %1968 = vmatpush1.msra.mxu0 0.0
    %1969 = vmatprep.subr.mxu0 0.0
    %1970 = vmatpush1.msra.mxu0 0.0
    %1971 = vmatprep.subr.mxu0 0.0
    %1972 = vmatpush1.msra.mxu0 0.0
    %1973 = vmatprep.subr.mxu0 0.0
    %1974 = vmatpush1.msra.mxu0 0.0
    %1975 = vmatprep.subr.mxu0 0.0
    %1976 = vmatpush1.msra.mxu0 0.0
    %1977 = vmatprep.subr.mxu0 0.0
    %1978 = vmatpush1.msra.mxu0 0.0
    %1979 = vmatprep.subr.mxu0 0.0
    %1980 = vmatpush1.msra.mxu0 %v850
    %1981 = vmatprep.subr.mxu0 0.0
    %1982 = vmatpush1.msra.mxu0 %v848
    %1983 = vmatprep.subr.mxu0 0.0
    %1984 = vmatpush1.msra.mxu0 %v846
    %1985 = vmatprep.subr.mxu0 0.0
    %1986 = vmatpush1.msra.mxu0 %v844
    %1987 = vmatprep.subr.mxu0 0.0
    %1988 = vmatpush2.msra.mxu0 0.0
    %1989 = vmatprep.subr.mxu0 0.0
    %1990 = vmatpush2.msra.mxu0 0.0
    %1991 = vmatprep.subr.mxu0 0.0
    %1992 = vmatpush2.msra.mxu0 0.0
    %1993 = vmatprep.subr.mxu0 0.0
    %1994 = vmatpush2.msra.mxu0 0.0
    %1995 = vmatprep.subr.mxu0 0.0
    %1996 = vmatpush2.msra.mxu0 0.0
    %1997 = vmatprep.subr.mxu0 0.0
    %1998 = vmatpush2.msra.mxu0 0.0
    %1999 = vmatprep.subr.mxu0 0.0
    %2000 = vmatpush2.msra.mxu0 0.0
    %2001 = vmatprep.subr.mxu0 0.0
    %2002 = vmatpush2.msra.mxu0 0.0
    %2003 = vmatprep.subr.mxu0 0.0
    %2004 = vmatpush2.msra.mxu0 0.0
    %2005 = vmatprep.subr.mxu0 0.0
    %2006 = vmatpush2.msra.mxu0 0.0
    %2007 = vmatprep.subr.mxu0 0.0
    %2008 = vmatpush2.msra.mxu0 0.0
    %2009 = vmatprep.subr.mxu0 0.0
    %2010 = vmatpush2.msra.mxu0 0.0
    %2011 = vmatprep.subr.mxu0 0.0
    %2012 = vmatpush2.msra.mxu0 0.0
    %2013 = vmatprep.subr.mxu0 0.0
    %2014 = vmatpush2.msra.mxu0 0.0
    %2015 = vmatprep.subr.mxu0 0.0
    %2016 = vmatpush2.msra.mxu0 0.0
    %2017 = vmatprep.subr.mxu0 0.0
    %2018 = vmatpush2.msra.mxu0 0.0
    %2019 = vmatprep.mubr.f32.mxu0 0.0
    %2020 = vmatmul.mubr.f32.gmra.mxu0 %v1953
    %v2021 = vpop.f32.mrf.mxu0
    %v2022 = vadd.f32 %v273, %v2021
    %v2023 = vpop.f32.mrf.mxu0
    %2024 = vdwg.mxu0
    %2025 = vmatprep.subr.mxu0 0.0
    %2026 = vmatpush1.msra.mxu0 0.0
    %2027 = vmatprep.subr.mxu0 0.0
    %2028 = vmatpush1.msra.mxu0 0.0
    %2029 = vmatprep.subr.mxu0 0.0
    %2030 = vmatpush1.msra.mxu0 0.0
    %2031 = vmatprep.subr.mxu0 0.0
    %2032 = vmatpush1.msra.mxu0 0.0
    %2033 = vmatprep.subr.mxu0 0.0
    %2034 = vmatpush1.msra.mxu0 0.0
    %2035 = vmatprep.subr.mxu0 0.0
    %2036 = vmatpush1.msra.mxu0 0.0
    %2037 = vmatprep.subr.mxu0 0.0
    %2038 = vmatpush1.msra.mxu0 0.0
    %2039 = vmatprep.subr.mxu0 0.0
    %2040 = vmatpush1.msra.mxu0 0.0
    %2041 = vmatprep.subr.mxu0 0.0
    %2042 = vmatpush1.msra.mxu0 0.0
    %2043 = vmatprep.subr.mxu0 0.0
    %2044 = vmatpush1.msra.mxu0 0.0
    %2045 = vmatprep.subr.mxu0 0.0
    %2046 = vmatpush1.msra.mxu0 0.0
    %2047 = vmatprep.subr.mxu0 0.0
    %2048 = vmatpush1.msra.mxu0 0.0
    %2049 = vmatprep.subr.mxu0 0.0
    %2050 = vmatpush1.msra.mxu0 %v81
    %2051 = vmatprep.subr.mxu0 0.0
    %2052 = vmatpush1.msra.mxu0 %v80
    %2053 = vmatprep.subr.mxu0 0.0
    %2054 = vmatpush1.msra.mxu0 %v79
    %2055 = vmatprep.subr.mxu0 0.0
    %2056 = vmatpush1.msra.mxu0 %v78
    %2057 = vmatprep.subr.mxu0 0.0
    %2058 = vmatpush2.msra.mxu0 0.0
    %2059 = vmatprep.subr.mxu0 0.0
    %2060 = vmatpush2.msra.mxu0 0.0
    %2061 = vmatprep.subr.mxu0 0.0
    %2062 = vmatpush2.msra.mxu0 0.0
    %2063 = vmatprep.subr.mxu0 0.0
    %2064 = vmatpush2.msra.mxu0 0.0
    %2065 = vmatprep.subr.mxu0 0.0
    %2066 = vmatpush2.msra.mxu0 0.0
    %2067 = vmatprep.subr.mxu0 0.0
    %2068 = vmatpush2.msra.mxu0 0.0
    %2069 = vmatprep.subr.mxu0 0.0
    %2070 = vmatpush2.msra.mxu0 0.0
    %2071 = vmatprep.subr.mxu0 0.0
    %2072 = vmatpush2.msra.mxu0 0.0
    %2073 = vmatprep.subr.mxu0 0.0
    %2074 = vmatpush2.msra.mxu0 0.0
    %2075 = vmatprep.subr.mxu0 0.0
    %2076 = vmatpush2.msra.mxu0 0.0
    %2077 = vmatprep.subr.mxu0 0.0
    %2078 = vmatpush2.msra.mxu0 0.0
    %2079 = vmatprep.subr.mxu0 0.0
    %2080 = vmatpush2.msra.mxu0 0.0
    %2081 = vmatprep.subr.mxu0 0.0
    %2082 = vmatpush2.msra.mxu0 0.0
    %2083 = vmatprep.subr.mxu0 0.0
    %2084 = vmatpush2.msra.mxu0 0.0
    %2085 = vmatprep.subr.mxu0 0.0
    %2086 = vmatpush2.msra.mxu0 0.0
    %2087 = vmatprep.subr.mxu0 0.0
    %2088 = vmatpush2.msra.mxu0 0.0
    %2089 = vmatprep.mubr.f32.mxu0 0.0
    %2090 = vmatmul.mubr.f32.gmra.mxu0 %v1809
    %v2091 = vpop.f32.mrf.mxu0
    %v2092 = vadd.f32 %v2022, %v2091
    %v2093 = vpop.f32.mrf.mxu0
    %2094 = vdwg.mxu0
    %v2095 = vmax.f32 %v2092, 0.0
    %v2097 = vrot.slane %v1807, 2
    %v2098 = vsel %vm184, %v2097, 0
    %2100 = vmatprep.subr.mxu0 0.0
    %2101 = vmatpush1.msra.mxu0 0.0
    %2102 = vmatprep.subr.mxu0 0.0
    %2103 = vmatpush1.msra.mxu0 0.0
    %2104 = vmatprep.subr.mxu0 0.0
    %2105 = vmatpush1.msra.mxu0 0.0
    %2106 = vmatprep.subr.mxu0 0.0
    %2107 = vmatpush1.msra.mxu0 0.0
    %2108 = vmatprep.subr.mxu0 0.0
    %2109 = vmatpush1.msra.mxu0 0.0
    %2110 = vmatprep.subr.mxu0 0.0
    %2111 = vmatpush1.msra.mxu0 0.0
    %2112 = vmatprep.subr.mxu0 0.0
    %2113 = vmatpush1.msra.mxu0 0.0
    %2114 = vmatprep.subr.mxu0 0.0
    %2115 = vmatpush1.msra.mxu0 0.0
    %2116 = vmatprep.subr.mxu0 0.0
    %2117 = vmatpush1.msra.mxu0 0.0
    %2118 = vmatprep.subr.mxu0 0.0
    %2119 = vmatpush1.msra.mxu0 0.0
    %2120 = vmatprep.subr.mxu0 0.0
    %2121 = vmatpush1.msra.mxu0 0.0
    %2122 = vmatprep.subr.mxu0 0.0
    %2123 = vmatpush1.msra.mxu0 0.0
    %2124 = vmatprep.subr.mxu0 0.0
    %2125 = vmatpush1.msra.mxu0 %v290
    %2126 = vmatprep.subr.mxu0 0.0
    %2127 = vmatpush1.msra.mxu0 %v288
    %2128 = vmatprep.subr.mxu0 0.0
    %2129 = vmatpush1.msra.mxu0 %v286
    %2130 = vmatprep.subr.mxu0 0.0
    %2131 = vmatpush1.msra.mxu0 %v284
    %2132 = vmatprep.subr.mxu0 0.0
    %2133 = vmatpush2.msra.mxu0 0.0
    %2134 = vmatprep.subr.mxu0 0.0
    %2135 = vmatpush2.msra.mxu0 0.0
    %2136 = vmatprep.subr.mxu0 0.0
    %2137 = vmatpush2.msra.mxu0 0.0
    %2138 = vmatprep.subr.mxu0 0.0
    %2139 = vmatpush2.msra.mxu0 0.0
    %2140 = vmatprep.subr.mxu0 0.0
    %2141 = vmatpush2.msra.mxu0 0.0
    %2142 = vmatprep.subr.mxu0 0.0
    %2143 = vmatpush2.msra.mxu0 0.0
    %2144 = vmatprep.subr.mxu0 0.0
    %2145 = vmatpush2.msra.mxu0 0.0
    %2146 = vmatprep.subr.mxu0 0.0
    %2147 = vmatpush2.msra.mxu0 0.0
    %2148 = vmatprep.subr.mxu0 0.0
    %2149 = vmatpush2.msra.mxu0 0.0
    %2150 = vmatprep.subr.mxu0 0.0
    %2151 = vmatpush2.msra.mxu0 0.0
    %2152 = vmatprep.subr.mxu0 0.0
    %2153 = vmatpush2.msra.mxu0 0.0
    %2154 = vmatprep.subr.mxu0 0.0
    %2155 = vmatpush2.msra.mxu0 0.0
    %2156 = vmatprep.subr.mxu0 0.0
    %2157 = vmatpush2.msra.mxu0 0.0
    %2158 = vmatprep.subr.mxu0 0.0
    %2159 = vmatpush2.msra.mxu0 0.0
    %2160 = vmatprep.subr.mxu0 0.0
    %2161 = vmatpush2.msra.mxu0 0.0
    %2162 = vmatprep.subr.mxu0 0.0
    %2163 = vmatpush2.msra.mxu0 0.0
    %2164 = vmatprep.mubr.f32.mxu0 0.0
    %2165 = vmatmul.mubr.f32.gmra.mxu0 %v2098
    %v2166 = vpop.f32.mrf.mxu0
    %v2167 = vadd.f32 0.0, %v2166
    %v2168 = vpop.f32.mrf.mxu0
    %2169 = vdwg.mxu0
    %v2171 = vrot.slane %v2167, 4
    %v2173 = vadd.f32 %v263, %v2171
    %v2174 = vmax.f32 %v2173, 0.0
    %v2176 = vsel %vm184, %v1951, 0
    %2178 = vmatprep.subr.mxu0 0.0
    %2179 = vmatpush1.msra.mxu0 0.0
    %2180 = vmatprep.subr.mxu0 0.0
    %2181 = vmatpush1.msra.mxu0 0.0
    %2182 = vmatprep.subr.mxu0 0.0
    %2183 = vmatpush1.msra.mxu0 0.0
    %2184 = vmatprep.subr.mxu0 0.0
    %2185 = vmatpush1.msra.mxu0 0.0
    %2186 = vmatprep.subr.mxu0 0.0
    %2187 = vmatpush1.msra.mxu0 0.0
    %2188 = vmatprep.subr.mxu0 0.0
    %2189 = vmatpush1.msra.mxu0 0.0
    %2190 = vmatprep.subr.mxu0 0.0
    %2191 = vmatpush1.msra.mxu0 0.0
    %2192 = vmatprep.subr.mxu0 0.0
    %2193 = vmatpush1.msra.mxu0 0.0
    %2194 = vmatprep.subr.mxu0 0.0
    %2195 = vmatpush1.msra.mxu0 0.0
    %2196 = vmatprep.subr.mxu0 0.0
    %2197 = vmatpush1.msra.mxu0 0.0
    %2198 = vmatprep.subr.mxu0 0.0
    %2199 = vmatpush1.msra.mxu0 0.0
    %2200 = vmatprep.subr.mxu0 0.0
    %2201 = vmatpush1.msra.mxu0 0.0
    %2202 = vmatprep.subr.mxu0 0.0
    %2203 = vmatpush1.msra.mxu0 %v455
    %2204 = vmatprep.subr.mxu0 0.0
    %2205 = vmatpush1.msra.mxu0 %v453
    %2206 = vmatprep.subr.mxu0 0.0
    %2207 = vmatpush1.msra.mxu0 %v451
    %2208 = vmatprep.subr.mxu0 0.0
    %2209 = vmatpush1.msra.mxu0 %v449
    %2210 = vmatprep.subr.mxu0 0.0
    %2211 = vmatpush2.msra.mxu0 0.0
    %2212 = vmatprep.subr.mxu0 0.0
    %2213 = vmatpush2.msra.mxu0 0.0
    %2214 = vmatprep.subr.mxu0 0.0
    %2215 = vmatpush2.msra.mxu0 0.0
    %2216 = vmatprep.subr.mxu0 0.0
    %2217 = vmatpush2.msra.mxu0 0.0
    %2218 = vmatprep.subr.mxu0 0.0
    %2219 = vmatpush2.msra.mxu0 0.0
    %2220 = vmatprep.subr.mxu0 0.0
    %2221 = vmatpush2.msra.mxu0 0.0
    %2222 = vmatprep.subr.mxu0 0.0
    %2223 = vmatpush2.msra.mxu0 0.0
    %2224 = vmatprep.subr.mxu0 0.0
    %2225 = vmatpush2.msra.mxu0 0.0
    %2226 = vmatprep.subr.mxu0 0.0
    %2227 = vmatpush2.msra.mxu0 0.0
    %2228 = vmatprep.subr.mxu0 0.0
    %2229 = vmatpush2.msra.mxu0 0.0
    %2230 = vmatprep.subr.mxu0 0.0
    %2231 = vmatpush2.msra.mxu0 0.0
    %2232 = vmatprep.subr.mxu0 0.0
    %2233 = vmatpush2.msra.mxu0 0.0
    %2234 = vmatprep.subr.mxu0 0.0
    %2235 = vmatpush2.msra.mxu0 0.0
    %2236 = vmatprep.subr.mxu0 0.0
    %2237 = vmatpush2.msra.mxu0 0.0
    %2238 = vmatprep.subr.mxu0 0.0
    %2239 = vmatpush2.msra.mxu0 0.0
    %2240 = vmatprep.subr.mxu0 0.0
    %2241 = vmatpush2.msra.mxu0 0.0
    %2242 = vmatprep.mubr.f32.mxu0 0.0
    %2243 = vmatmul.mubr.f32.gmra.mxu0 %v2176
    %v2244 = vpop.f32.mrf.mxu0
    %v2245 = vadd.f32 %v269, %v2244
    %v2246 = vpop.f32.mrf.mxu0
    %2247 = vdwg.mxu0
    %2248 = vmatprep.subr.mxu0 0.0
    %2249 = vmatpush1.msra.mxu0 0.0
    %2250 = vmatprep.subr.mxu0 0.0
    %2251 = vmatpush1.msra.mxu0 0.0
    %2252 = vmatprep.subr.mxu0 0.0
    %2253 = vmatpush1.msra.mxu0 0.0
    %2254 = vmatprep.subr.mxu0 0.0
    %2255 = vmatpush1.msra.mxu0 0.0
    %2256 = vmatprep.subr.mxu0 0.0
    %2257 = vmatpush1.msra.mxu0 0.0
    %2258 = vmatprep.subr.mxu0 0.0
    %2259 = vmatpush1.msra.mxu0 0.0
    %2260 = vmatprep.subr.mxu0 0.0
    %2261 = vmatpush1.msra.mxu0 0.0
    %2262 = vmatprep.subr.mxu0 0.0
    %2263 = vmatpush1.msra.mxu0 0.0
    %2264 = vmatprep.subr.mxu0 0.0
    %2265 = vmatpush1.msra.mxu0 0.0
    %2266 = vmatprep.subr.mxu0 0.0
    %2267 = vmatpush1.msra.mxu0 0.0
    %2268 = vmatprep.subr.mxu0 0.0
    %2269 = vmatpush1.msra.mxu0 0.0
    %2270 = vmatprep.subr.mxu0 0.0
    %2271 = vmatpush1.msra.mxu0 0.0
    %2272 = vmatprep.subr.mxu0 0.0
    %2273 = vmatpush1.msra.mxu0 %v540
    %2274 = vmatprep.subr.mxu0 0.0
    %2275 = vmatpush1.msra.mxu0 %v538
    %2276 = vmatprep.subr.mxu0 0.0
    %2277 = vmatpush1.msra.mxu0 %v536
    %2278 = vmatprep.subr.mxu0 0.0
    %2279 = vmatpush1.msra.mxu0 %v534
    %2280 = vmatprep.subr.mxu0 0.0
    %2281 = vmatpush2.msra.mxu0 0.0
    %2282 = vmatprep.subr.mxu0 0.0
    %2283 = vmatpush2.msra.mxu0 0.0
    %2284 = vmatprep.subr.mxu0 0.0
    %2285 = vmatpush2.msra.mxu0 0.0
    %2286 = vmatprep.subr.mxu0 0.0
    %2287 = vmatpush2.msra.mxu0 0.0
    %2288 = vmatprep.subr.mxu0 0.0
    %2289 = vmatpush2.msra.mxu0 0.0
    %2290 = vmatprep.subr.mxu0 0.0
    %2291 = vmatpush2.msra.mxu0 0.0
    %2292 = vmatprep.subr.mxu0 0.0
    %2293 = vmatpush2.msra.mxu0 0.0
    %2294 = vmatprep.subr.mxu0 0.0
    %2295 = vmatpush2.msra.mxu0 0.0
    %2296 = vmatprep.subr.mxu0 0.0
    %2297 = vmatpush2.msra.mxu0 0.0
    %2298 = vmatprep.subr.mxu0 0.0
    %2299 = vmatpush2.msra.mxu0 0.0
    %2300 = vmatprep.subr.mxu0 0.0
    %2301 = vmatpush2.msra.mxu0 0.0
    %2302 = vmatprep.subr.mxu0 0.0
    %2303 = vmatpush2.msra.mxu0 0.0
    %2304 = vmatprep.subr.mxu0 0.0
    %2305 = vmatpush2.msra.mxu0 0.0
    %2306 = vmatprep.subr.mxu0 0.0
    %2307 = vmatpush2.msra.mxu0 0.0
    %2308 = vmatprep.subr.mxu0 0.0
    %2309 = vmatpush2.msra.mxu0 0.0
    %2310 = vmatprep.subr.mxu0 0.0
    %2311 = vmatpush2.msra.mxu0 0.0
    %2312 = vmatprep.mubr.f32.mxu0 0.0
    %2313 = vmatmul.mubr.f32.gmra.mxu0 %v2098
    %v2314 = vpop.f32.mrf.mxu0
    %v2315 = vadd.f32 %v2245, %v2314
    %v2316 = vpop.f32.mrf.mxu0
    %2317 = vdwg.mxu0
    %v2318 = vmax.f32 %v2315, 0.0
    %v2320 = vsel %vm184, %v2095, 0
    %2322 = vmatprep.subr.mxu0 0.0
    %2323 = vmatpush1.msra.mxu0 0.0
    %2324 = vmatprep.subr.mxu0 0.0
    %2325 = vmatpush1.msra.mxu0 0.0
    %2326 = vmatprep.subr.mxu0 0.0
    %2327 = vmatpush1.msra.mxu0 0.0
    %2328 = vmatprep.subr.mxu0 0.0
    %2329 = vmatpush1.msra.mxu0 0.0
    %2330 = vmatprep.subr.mxu0 0.0
    %2331 = vmatpush1.msra.mxu0 0.0
    %2332 = vmatprep.subr.mxu0 0.0
    %2333 = vmatpush1.msra.mxu0 0.0
    %2334 = vmatprep.subr.mxu0 0.0
    %2335 = vmatpush1.msra.mxu0 0.0
    %2336 = vmatprep.subr.mxu0 0.0
    %2337 = vmatpush1.msra.mxu0 0.0
    %2338 = vmatprep.subr.mxu0 0.0
    %2339 = vmatpush1.msra.mxu0 0.0
    %2340 = vmatprep.subr.mxu0 0.0
    %2341 = vmatpush1.msra.mxu0 0.0
    %2342 = vmatprep.subr.mxu0 0.0
    %2343 = vmatpush1.msra.mxu0 0.0
    %2344 = vmatprep.subr.mxu0 0.0
    %2345 = vmatpush1.msra.mxu0 0.0
    %2346 = vmatprep.subr.mxu0 0.0
    %2347 = vmatpush1.msra.mxu0 %v850
    %2348 = vmatprep.subr.mxu0 0.0
    %2349 = vmatpush1.msra.mxu0 %v848
    %2350 = vmatprep.subr.mxu0 0.0
    %2351 = vmatpush1.msra.mxu0 %v846
    %2352 = vmatprep.subr.mxu0 0.0
    %2353 = vmatpush1.msra.mxu0 %v844
    %2354 = vmatprep.subr.mxu0 0.0
    %2355 = vmatpush2.msra.mxu0 0.0
    %2356 = vmatprep.subr.mxu0 0.0
    %2357 = vmatpush2.msra.mxu0 0.0
    %2358 = vmatprep.subr.mxu0 0.0
    %2359 = vmatpush2.msra.mxu0 0.0
    %2360 = vmatprep.subr.mxu0 0.0
    %2361 = vmatpush2.msra.mxu0 0.0
    %2362 = vmatprep.subr.mxu0 0.0
    %2363 = vmatpush2.msra.mxu0 0.0
    %2364 = vmatprep.subr.mxu0 0.0
    %2365 = vmatpush2.msra.mxu0 0.0
    %2366 = vmatprep.subr.mxu0 0.0
    %2367 = vmatpush2.msra.mxu0 0.0
    %2368 = vmatprep.subr.mxu0 0.0
    %2369 = vmatpush2.msra.mxu0 0.0
    %2370 = vmatprep.subr.mxu0 0.0
    %2371 = vmatpush2.msra.mxu0 0.0
    %2372 = vmatprep.subr.mxu0 0.0
    %2373 = vmatpush2.msra.mxu0 0.0
    %2374 = vmatprep.subr.mxu0 0.0
    %2375 = vmatpush2.msra.mxu0 0.0
    %2376 = vmatprep.subr.mxu0 0.0
    %2377 = vmatpush2.msra.mxu0 0.0
    %2378 = vmatprep.subr.mxu0 0.0
    %2379 = vmatpush2.msra.mxu0 0.0
    %2380 = vmatprep.subr.mxu0 0.0
    %2381 = vmatpush2.msra.mxu0 0.0
    %2382 = vmatprep.subr.mxu0 0.0
    %2383 = vmatpush2.msra.mxu0 0.0
    %2384 = vmatprep.subr.mxu0 0.0
    %2385 = vmatpush2.msra.mxu0 0.0
    %2386 = vmatprep.mubr.f32.mxu0 0.0
    %2387 = vmatmul.mubr.f32.gmra.mxu0 %v2320
    %v2388 = vpop.f32.mrf.mxu0
    %v2389 = vadd.f32 %v273, %v2388
    %v2390 = vpop.f32.mrf.mxu0
    %2391 = vdwg.mxu0
    %2392 = vmatprep.subr.mxu0 0.0
    %2393 = vmatpush1.msra.mxu0 0.0
    %2394 = vmatprep.subr.mxu0 0.0
    %2395 = vmatpush1.msra.mxu0 0.0
    %2396 = vmatprep.subr.mxu0 0.0
    %2397 = vmatpush1.msra.mxu0 0.0
    %2398 = vmatprep.subr.mxu0 0.0
    %2399 = vmatpush1.msra.mxu0 0.0
    %2400 = vmatprep.subr.mxu0 0.0
    %2401 = vmatpush1.msra.mxu0 0.0
    %2402 = vmatprep.subr.mxu0 0.0
    %2403 = vmatpush1.msra.mxu0 0.0
    %2404 = vmatprep.subr.mxu0 0.0
    %2405 = vmatpush1.msra.mxu0 0.0
    %2406 = vmatprep.subr.mxu0 0.0
    %2407 = vmatpush1.msra.mxu0 0.0
    %2408 = vmatprep.subr.mxu0 0.0
    %2409 = vmatpush1.msra.mxu0 0.0
    %2410 = vmatprep.subr.mxu0 0.0
    %2411 = vmatpush1.msra.mxu0 0.0
    %2412 = vmatprep.subr.mxu0 0.0
    %2413 = vmatpush1.msra.mxu0 0.0
    %2414 = vmatprep.subr.mxu0 0.0
    %2415 = vmatpush1.msra.mxu0 0.0
    %2416 = vmatprep.subr.mxu0 0.0
    %2417 = vmatpush1.msra.mxu0 %v81
    %2418 = vmatprep.subr.mxu0 0.0
    %2419 = vmatpush1.msra.mxu0 %v80
    %2420 = vmatprep.subr.mxu0 0.0
    %2421 = vmatpush1.msra.mxu0 %v79
    %2422 = vmatprep.subr.mxu0 0.0
    %2423 = vmatpush1.msra.mxu0 %v78
    %2424 = vmatprep.subr.mxu0 0.0
    %2425 = vmatpush2.msra.mxu0 0.0
    %2426 = vmatprep.subr.mxu0 0.0
    %2427 = vmatpush2.msra.mxu0 0.0
    %2428 = vmatprep.subr.mxu0 0.0
    %2429 = vmatpush2.msra.mxu0 0.0
    %2430 = vmatprep.subr.mxu0 0.0
    %2431 = vmatpush2.msra.mxu0 0.0
    %2432 = vmatprep.subr.mxu0 0.0
    %2433 = vmatpush2.msra.mxu0 0.0
    %2434 = vmatprep.subr.mxu0 0.0
    %2435 = vmatpush2.msra.mxu0 0.0
    %2436 = vmatprep.subr.mxu0 0.0
    %2437 = vmatpush2.msra.mxu0 0.0
    %2438 = vmatprep.subr.mxu0 0.0
    %2439 = vmatpush2.msra.mxu0 0.0
    %2440 = vmatprep.subr.mxu0 0.0
    %2441 = vmatpush2.msra.mxu0 0.0
    %2442 = vmatprep.subr.mxu0 0.0
    %2443 = vmatpush2.msra.mxu0 0.0
    %2444 = vmatprep.subr.mxu0 0.0
    %2445 = vmatpush2.msra.mxu0 0.0
    %2446 = vmatprep.subr.mxu0 0.0
    %2447 = vmatpush2.msra.mxu0 0.0
    %2448 = vmatprep.subr.mxu0 0.0
    %2449 = vmatpush2.msra.mxu0 0.0
    %2450 = vmatprep.subr.mxu0 0.0
    %2451 = vmatpush2.msra.mxu0 0.0
    %2452 = vmatprep.subr.mxu0 0.0
    %2453 = vmatpush2.msra.mxu0 0.0
    %2454 = vmatprep.subr.mxu0 0.0
    %2455 = vmatpush2.msra.mxu0 0.0
    %2456 = vmatprep.mubr.f32.mxu0 0.0
    %2457 = vmatmul.mubr.f32.gmra.mxu0 %v2176
    %v2458 = vpop.f32.mrf.mxu0
    %v2459 = vadd.f32 %v2389, %v2458
    %v2460 = vpop.f32.mrf.mxu0
    %2461 = vdwg.mxu0
    %v2462 = vmax.f32 %v2459, 0.0
    %v2464 = vrot.slane %v2174, 4
    %v2465 = vsel %vm184, %v2464, 0
    %2467 = vmatprep.subr.mxu0 0.0
    %2468 = vmatpush1.msra.mxu0 0.0
    %2469 = vmatprep.subr.mxu0 0.0
    %2470 = vmatpush1.msra.mxu0 0.0
    %2471 = vmatprep.subr.mxu0 0.0
    %2472 = vmatpush1.msra.mxu0 0.0
    %2473 = vmatprep.subr.mxu0 0.0
    %2474 = vmatpush1.msra.mxu0 0.0
    %2475 = vmatprep.subr.mxu0 0.0
    %2476 = vmatpush1.msra.mxu0 0.0
    %2477 = vmatprep.subr.mxu0 0.0
    %2478 = vmatpush1.msra.mxu0 0.0
    %2479 = vmatprep.subr.mxu0 0.0
    %2480 = vmatpush1.msra.mxu0 0.0
    %2481 = vmatprep.subr.mxu0 0.0
    %2482 = vmatpush1.msra.mxu0 0.0
    %2483 = vmatprep.subr.mxu0 0.0
    %2484 = vmatpush1.msra.mxu0 0.0
    %2485 = vmatprep.subr.mxu0 0.0
    %2486 = vmatpush1.msra.mxu0 0.0
    %2487 = vmatprep.subr.mxu0 0.0
    %2488 = vmatpush1.msra.mxu0 0.0
    %2489 = vmatprep.subr.mxu0 0.0
    %2490 = vmatpush1.msra.mxu0 0.0
    %2491 = vmatprep.subr.mxu0 0.0
    %2492 = vmatpush1.msra.mxu0 %v290
    %2493 = vmatprep.subr.mxu0 0.0
    %2494 = vmatpush1.msra.mxu0 %v288
    %2495 = vmatprep.subr.mxu0 0.0
    %2496 = vmatpush1.msra.mxu0 %v286
    %2497 = vmatprep.subr.mxu0 0.0
    %2498 = vmatpush1.msra.mxu0 %v284
    %2499 = vmatprep.subr.mxu0 0.0
    %2500 = vmatpush2.msra.mxu0 0.0
    %2501 = vmatprep.subr.mxu0 0.0
    %2502 = vmatpush2.msra.mxu0 0.0
    %2503 = vmatprep.subr.mxu0 0.0
    %2504 = vmatpush2.msra.mxu0 0.0
    %2505 = vmatprep.subr.mxu0 0.0
    %2506 = vmatpush2.msra.mxu0 0.0
    %2507 = vmatprep.subr.mxu0 0.0
    %2508 = vmatpush2.msra.mxu0 0.0
    %2509 = vmatprep.subr.mxu0 0.0
    %2510 = vmatpush2.msra.mxu0 0.0
    %2511 = vmatprep.subr.mxu0 0.0
    %2512 = vmatpush2.msra.mxu0 0.0
    %2513 = vmatprep.subr.mxu0 0.0
    %2514 = vmatpush2.msra.mxu0 0.0
    %2515 = vmatprep.subr.mxu0 0.0
    %2516 = vmatpush2.msra.mxu0 0.0
    %2517 = vmatprep.subr.mxu0 0.0
    %2518 = vmatpush2.msra.mxu0 0.0
    %2519 = vmatprep.subr.mxu0 0.0
    %2520 = vmatpush2.msra.mxu0 0.0
    %2521 = vmatprep.subr.mxu0 0.0
    %2522 = vmatpush2.msra.mxu0 0.0
    %2523 = vmatprep.subr.mxu0 0.0
    %2524 = vmatpush2.msra.mxu0 0.0
    %2525 = vmatprep.subr.mxu0 0.0
    %2526 = vmatpush2.msra.mxu0 0.0
    %2527 = vmatprep.subr.mxu0 0.0
    %2528 = vmatpush2.msra.mxu0 0.0
    %2529 = vmatprep.subr.mxu0 0.0
    %2530 = vmatpush2.msra.mxu0 0.0
    %2531 = vmatprep.mubr.f32.mxu0 0.0
    %2532 = vmatmul.mubr.f32.gmra.mxu0 %v2465
    %v2533 = vpop.f32.mrf.mxu0
    %v2534 = vadd.f32 0.0, %v2533
    %v2535 = vpop.f32.mrf.mxu0
    %2536 = vdwg.mxu0
    %v2538 = vrot.slane %v2534, 2
    %v2540 = vadd.f32 %v263, %v2538
    %v2541 = vmax.f32 %v2540, 0.0
    %v2543 = vsel %vm184, %v2318, 0
    %2545 = vmatprep.subr.mxu0 0.0
    %2546 = vmatpush1.msra.mxu0 0.0
    %2547 = vmatprep.subr.mxu0 0.0
    %2548 = vmatpush1.msra.mxu0 0.0
    %2549 = vmatprep.subr.mxu0 0.0
    %2550 = vmatpush1.msra.mxu0 0.0
    %2551 = vmatprep.subr.mxu0 0.0
    %2552 = vmatpush1.msra.mxu0 0.0
    %2553 = vmatprep.subr.mxu0 0.0
    %2554 = vmatpush1.msra.mxu0 0.0
    %2555 = vmatprep.subr.mxu0 0.0
    %2556 = vmatpush1.msra.mxu0 0.0
    %2557 = vmatprep.subr.mxu0 0.0
    %2558 = vmatpush1.msra.mxu0 0.0
    %2559 = vmatprep.subr.mxu0 0.0
    %2560 = vmatpush1.msra.mxu0 0.0
    %2561 = vmatprep.subr.mxu0 0.0
    %2562 = vmatpush1.msra.mxu0 0.0
    %2563 = vmatprep.subr.mxu0 0.0
    %2564 = vmatpush1.msra.mxu0 0.0
    %2565 = vmatprep.subr.mxu0 0.0
    %2566 = vmatpush1.msra.mxu0 0.0
    %2567 = vmatprep.subr.mxu0 0.0
    %2568 = vmatpush1.msra.mxu0 0.0
    %2569 = vmatprep.subr.mxu0 0.0
    %2570 = vmatpush1.msra.mxu0 %v455
    %2571 = vmatprep.subr.mxu0 0.0
    %2572 = vmatpush1.msra.mxu0 %v453
    %2573 = vmatprep.subr.mxu0 0.0
    %2574 = vmatpush1.msra.mxu0 %v451
    %2575 = vmatprep.subr.mxu0 0.0
    %2576 = vmatpush1.msra.mxu0 %v449
    %2577 = vmatprep.subr.mxu0 0.0
    %2578 = vmatpush2.msra.mxu0 0.0
    %2579 = vmatprep.subr.mxu0 0.0
    %2580 = vmatpush2.msra.mxu0 0.0
    %2581 = vmatprep.subr.mxu0 0.0
    %2582 = vmatpush2.msra.mxu0 0.0
    %2583 = vmatprep.subr.mxu0 0.0
    %2584 = vmatpush2.msra.mxu0 0.0
    %2585 = vmatprep.subr.mxu0 0.0
    %2586 = vmatpush2.msra.mxu0 0.0
    %2587 = vmatprep.subr.mxu0 0.0
    %2588 = vmatpush2.msra.mxu0 0.0
    %2589 = vmatprep.subr.mxu0 0.0
    %2590 = vmatpush2.msra.mxu0 0.0
    %2591 = vmatprep.subr.mxu0 0.0
    %2592 = vmatpush2.msra.mxu0 0.0
    %2593 = vmatprep.subr.mxu0 0.0
    %2594 = vmatpush2.msra.mxu0 0.0
    %2595 = vmatprep.subr.mxu0 0.0
    %2596 = vmatpush2.msra.mxu0 0.0
    %2597 = vmatprep.subr.mxu0 0.0
    %2598 = vmatpush2.msra.mxu0 0.0
    %2599 = vmatprep.subr.mxu0 0.0
    %2600 = vmatpush2.msra.mxu0 0.0
    %2601 = vmatprep.subr.mxu0 0.0
    %2602 = vmatpush2.msra.mxu0 0.0
    %2603 = vmatprep.subr.mxu0 0.0
    %2604 = vmatpush2.msra.mxu0 0.0
    %2605 = vmatprep.subr.mxu0 0.0
    %2606 = vmatpush2.msra.mxu0 0.0
    %2607 = vmatprep.subr.mxu0 0.0
    %2608 = vmatpush2.msra.mxu0 0.0
    %2609 = vmatprep.mubr.f32.mxu0 0.0
    %2610 = vmatmul.mubr.f32.gmra.mxu0 %v2543
    %v2611 = vpop.f32.mrf.mxu0
    %v2612 = vadd.f32 %v269, %v2611
    %v2613 = vpop.f32.mrf.mxu0
    %2614 = vdwg.mxu0
    %2615 = vmatprep.subr.mxu0 0.0
    %2616 = vmatpush1.msra.mxu0 0.0
    %2617 = vmatprep.subr.mxu0 0.0
    %2618 = vmatpush1.msra.mxu0 0.0
    %2619 = vmatprep.subr.mxu0 0.0
    %2620 = vmatpush1.msra.mxu0 0.0
    %2621 = vmatprep.subr.mxu0 0.0
    %2622 = vmatpush1.msra.mxu0 0.0
    %2623 = vmatprep.subr.mxu0 0.0
    %2624 = vmatpush1.msra.mxu0 0.0
    %2625 = vmatprep.subr.mxu0 0.0
    %2626 = vmatpush1.msra.mxu0 0.0
    %2627 = vmatprep.subr.mxu0 0.0
    %2628 = vmatpush1.msra.mxu0 0.0
    %2629 = vmatprep.subr.mxu0 0.0
    %2630 = vmatpush1.msra.mxu0 0.0
    %2631 = vmatprep.subr.mxu0 0.0
    %2632 = vmatpush1.msra.mxu0 0.0
    %2633 = vmatprep.subr.mxu0 0.0
    %2634 = vmatpush1.msra.mxu0 0.0
    %2635 = vmatprep.subr.mxu0 0.0
    %2636 = vmatpush1.msra.mxu0 0.0
    %2637 = vmatprep.subr.mxu0 0.0
    %2638 = vmatpush1.msra.mxu0 0.0
    %2639 = vmatprep.subr.mxu0 0.0
    %2640 = vmatpush1.msra.mxu0 %v540
    %2641 = vmatprep.subr.mxu0 0.0
    %2642 = vmatpush1.msra.mxu0 %v538
    %2643 = vmatprep.subr.mxu0 0.0
    %2644 = vmatpush1.msra.mxu0 %v536
    %2645 = vmatprep.subr.mxu0 0.0
    %2646 = vmatpush1.msra.mxu0 %v534
    %2647 = vmatprep.subr.mxu0 0.0
    %2648 = vmatpush2.msra.mxu0 0.0
    %2649 = vmatprep.subr.mxu0 0.0
    %2650 = vmatpush2.msra.mxu0 0.0
    %2651 = vmatprep.subr.mxu0 0.0
    %2652 = vmatpush2.msra.mxu0 0.0
    %2653 = vmatprep.subr.mxu0 0.0
    %2654 = vmatpush2.msra.mxu0 0.0
    %2655 = vmatprep.subr.mxu0 0.0
    %2656 = vmatpush2.msra.mxu0 0.0
    %2657 = vmatprep.subr.mxu0 0.0
    %2658 = vmatpush2.msra.mxu0 0.0
    %2659 = vmatprep.subr.mxu0 0.0
    %2660 = vmatpush2.msra.mxu0 0.0
    %2661 = vmatprep.subr.mxu0 0.0
    %2662 = vmatpush2.msra.mxu0 0.0
    %2663 = vmatprep.subr.mxu0 0.0
    %2664 = vmatpush2.msra.mxu0 0.0
    %2665 = vmatprep.subr.mxu0 0.0
    %2666 = vmatpush2.msra.mxu0 0.0
    %2667 = vmatprep.subr.mxu0 0.0
    %2668 = vmatpush2.msra.mxu0 0.0
    %2669 = vmatprep.subr.mxu0 0.0
    %2670 = vmatpush2.msra.mxu0 0.0
    %2671 = vmatprep.subr.mxu0 0.0
    %2672 = vmatpush2.msra.mxu0 0.0
    %2673 = vmatprep.subr.mxu0 0.0
    %2674 = vmatpush2.msra.mxu0 0.0
    %2675 = vmatprep.subr.mxu0 0.0
    %2676 = vmatpush2.msra.mxu0 0.0
    %2677 = vmatprep.subr.mxu0 0.0
    %2678 = vmatpush2.msra.mxu0 0.0
    %2679 = vmatprep.mubr.f32.mxu0 0.0
    %2680 = vmatmul.mubr.f32.gmra.mxu0 %v2465
    %v2681 = vpop.f32.mrf.mxu0
    %v2682 = vadd.f32 %v2612, %v2681
    %v2683 = vpop.f32.mrf.mxu0
    %2684 = vdwg.mxu0
    %v2685 = vmax.f32 %v2682, 0.0
    %v2687 = vsel %vm184, %v2462, 0
    %2689 = vmatprep.subr.mxu0 0.0
    %2690 = vmatpush1.msra.mxu0 0.0
    %2691 = vmatprep.subr.mxu0 0.0
    %2692 = vmatpush1.msra.mxu0 0.0
    %2693 = vmatprep.subr.mxu0 0.0
    %2694 = vmatpush1.msra.mxu0 0.0
    %2695 = vmatprep.subr.mxu0 0.0
    %2696 = vmatpush1.msra.mxu0 0.0
    %2697 = vmatprep.subr.mxu0 0.0
    %2698 = vmatpush1.msra.mxu0 0.0
    %2699 = vmatprep.subr.mxu0 0.0
    %2700 = vmatpush1.msra.mxu0 0.0
    %2701 = vmatprep.subr.mxu0 0.0
    %2702 = vmatpush1.msra.mxu0 0.0
    %2703 = vmatprep.subr.mxu0 0.0
    %2704 = vmatpush1.msra.mxu0 0.0
    %2705 = vmatprep.subr.mxu0 0.0
    %2706 = vmatpush1.msra.mxu0 0.0
    %2707 = vmatprep.subr.mxu0 0.0
    %2708 = vmatpush1.msra.mxu0 0.0
    %2709 = vmatprep.subr.mxu0 0.0
    %2710 = vmatpush1.msra.mxu0 0.0
    %2711 = vmatprep.subr.mxu0 0.0
    %2712 = vmatpush1.msra.mxu0 0.0
    %2713 = vmatprep.subr.mxu0 0.0
    %2714 = vmatpush1.msra.mxu0 %v850
    %2715 = vmatprep.subr.mxu0 0.0
    %2716 = vmatpush1.msra.mxu0 %v848
    %2717 = vmatprep.subr.mxu0 0.0
    %2718 = vmatpush1.msra.mxu0 %v846
    %2719 = vmatprep.subr.mxu0 0.0
    %2720 = vmatpush1.msra.mxu0 %v844
    %2721 = vmatprep.subr.mxu0 0.0
    %2722 = vmatpush2.msra.mxu0 0.0
    %2723 = vmatprep.subr.mxu0 0.0
    %2724 = vmatpush2.msra.mxu0 0.0
    %2725 = vmatprep.subr.mxu0 0.0
    %2726 = vmatpush2.msra.mxu0 0.0
    %2727 = vmatprep.subr.mxu0 0.0
    %2728 = vmatpush2.msra.mxu0 0.0
    %2729 = vmatprep.subr.mxu0 0.0
    %2730 = vmatpush2.msra.mxu0 0.0
    %2731 = vmatprep.subr.mxu0 0.0
    %2732 = vmatpush2.msra.mxu0 0.0
    %2733 = vmatprep.subr.mxu0 0.0
    %2734 = vmatpush2.msra.mxu0 0.0
    %2735 = vmatprep.subr.mxu0 0.0
    %2736 = vmatpush2.msra.mxu0 0.0
    %2737 = vmatprep.subr.mxu0 0.0
    %2738 = vmatpush2.msra.mxu0 0.0
    %2739 = vmatprep.subr.mxu0 0.0
    %2740 = vmatpush2.msra.mxu0 0.0
    %2741 = vmatprep.subr.mxu0 0.0
    %2742 = vmatpush2.msra.mxu0 0.0
    %2743 = vmatprep.subr.mxu0 0.0
    %2744 = vmatpush2.msra.mxu0 0.0
    %2745 = vmatprep.subr.mxu0 0.0
    %2746 = vmatpush2.msra.mxu0 0.0
    %2747 = vmatprep.subr.mxu0 0.0
    %2748 = vmatpush2.msra.mxu0 0.0
    %2749 = vmatprep.subr.mxu0 0.0
    %2750 = vmatpush2.msra.mxu0 0.0
    %2751 = vmatprep.subr.mxu0 0.0
    %2752 = vmatpush2.msra.mxu0 0.0
    %2753 = vmatprep.mubr.f32.mxu0 0.0
    %2754 = vmatmul.mubr.f32.gmra.mxu0 %v2687
    %v2755 = vpop.f32.mrf.mxu0
    %v2756 = vadd.f32 %v273, %v2755
    %v2757 = vpop.f32.mrf.mxu0
    %2758 = vdwg.mxu0
    %2759 = vmatprep.subr.mxu0 0.0
    %2760 = vmatpush1.msra.mxu0 0.0
    %2761 = vmatprep.subr.mxu0 0.0
    %2762 = vmatpush1.msra.mxu0 0.0
    %2763 = vmatprep.subr.mxu0 0.0
    %2764 = vmatpush1.msra.mxu0 0.0
    %2765 = vmatprep.subr.mxu0 0.0
    %2766 = vmatpush1.msra.mxu0 0.0
    %2767 = vmatprep.subr.mxu0 0.0
    %2768 = vmatpush1.msra.mxu0 0.0
    %2769 = vmatprep.subr.mxu0 0.0
    %2770 = vmatpush1.msra.mxu0 0.0
    %2771 = vmatprep.subr.mxu0 0.0
    %2772 = vmatpush1.msra.mxu0 0.0
    %2773 = vmatprep.subr.mxu0 0.0
    %2774 = vmatpush1.msra.mxu0 0.0
    %2775 = vmatprep.subr.mxu0 0.0
    %2776 = vmatpush1.msra.mxu0 0.0
    %2777 = vmatprep.subr.mxu0 0.0
    %2778 = vmatpush1.msra.mxu0 0.0
    %2779 = vmatprep.subr.mxu0 0.0
    %2780 = vmatpush1.msra.mxu0 0.0
    %2781 = vmatprep.subr.mxu0 0.0
    %2782 = vmatpush1.msra.mxu0 0.0
    %2783 = vmatprep.subr.mxu0 0.0
    %2784 = vmatpush1.msra.mxu0 %v81
    %2785 = vmatprep.subr.mxu0 0.0
    %2786 = vmatpush1.msra.mxu0 %v80
    %2787 = vmatprep.subr.mxu0 0.0
    %2788 = vmatpush1.msra.mxu0 %v79
    %2789 = vmatprep.subr.mxu0 0.0
    %2790 = vmatpush1.msra.mxu0 %v78
    %2791 = vmatprep.subr.mxu0 0.0
    %2792 = vmatpush2.msra.mxu0 0.0
    %2793 = vmatprep.subr.mxu0 0.0
    %2794 = vmatpush2.msra.mxu0 0.0
    %2795 = vmatprep.subr.mxu0 0.0
    %2796 = vmatpush2.msra.mxu0 0.0
    %2797 = vmatprep.subr.mxu0 0.0
    %2798 = vmatpush2.msra.mxu0 0.0
    %2799 = vmatprep.subr.mxu0 0.0
    %2800 = vmatpush2.msra.mxu0 0.0
    %2801 = vmatprep.subr.mxu0 0.0
    %2802 = vmatpush2.msra.mxu0 0.0
    %2803 = vmatprep.subr.mxu0 0.0
    %2804 = vmatpush2.msra.mxu0 0.0
    %2805 = vmatprep.subr.mxu0 0.0
    %2806 = vmatpush2.msra.mxu0 0.0
    %2807 = vmatprep.subr.mxu0 0.0
    %2808 = vmatpush2.msra.mxu0 0.0
    %2809 = vmatprep.subr.mxu0 0.0
    %2810 = vmatpush2.msra.mxu0 0.0
    %2811 = vmatprep.subr.mxu0 0.0
    %2812 = vmatpush2.msra.mxu0 0.0
    %2813 = vmatprep.subr.mxu0 0.0
    %2814 = vmatpush2.msra.mxu0 0.0
    %2815 = vmatprep.subr.mxu0 0.0
    %2816 = vmatpush2.msra.mxu0 0.0
    %2817 = vmatprep.subr.mxu0 0.0
    %2818 = vmatpush2.msra.mxu0 0.0
    %2819 = vmatprep.subr.mxu0 0.0
    %2820 = vmatpush2.msra.mxu0 0.0
    %2821 = vmatprep.subr.mxu0 0.0
    %2822 = vmatpush2.msra.mxu0 0.0
    %2823 = vmatprep.mubr.f32.mxu0 0.0
    %2824 = vmatmul.mubr.f32.gmra.mxu0 %v2543
    %v2825 = vpop.f32.mrf.mxu0
    %v2826 = vadd.f32 %v2756, %v2825
    %v2827 = vpop.f32.mrf.mxu0
    %2828 = vdwg.mxu0
    %v2829 = vmax.f32 %v2826, 0.0
    %v2831 = vsel %vm184, %v2685, 0
    %2833 = vmatprep.subr.mxu0 0.0
    %2834 = vmatpush1.msra.mxu0 0.0
    %2835 = vmatprep.subr.mxu0 0.0
    %2836 = vmatpush1.msra.mxu0 0.0
    %2837 = vmatprep.subr.mxu0 0.0
    %2838 = vmatpush1.msra.mxu0 0.0
    %2839 = vmatprep.subr.mxu0 0.0
    %2840 = vmatpush1.msra.mxu0 0.0
    %2841 = vmatprep.subr.mxu0 0.0
    %2842 = vmatpush1.msra.mxu0 0.0
    %2843 = vmatprep.subr.mxu0 0.0
    %2844 = vmatpush1.msra.mxu0 0.0
    %2845 = vmatprep.subr.mxu0 0.0
    %2846 = vmatpush1.msra.mxu0 0.0
    %2847 = vmatprep.subr.mxu0 0.0
    %2848 = vmatpush1.msra.mxu0 0.0
    %2849 = vmatprep.subr.mxu0 0.0
    %2850 = vmatpush1.msra.mxu0 0.0
    %2851 = vmatprep.subr.mxu0 0.0
    %2852 = vmatpush1.msra.mxu0 0.0
    %2853 = vmatprep.subr.mxu0 0.0
    %2854 = vmatpush1.msra.mxu0 0.0
    %2855 = vmatprep.subr.mxu0 0.0
    %2856 = vmatpush1.msra.mxu0 0.0
    %2857 = vmatprep.subr.mxu0 0.0
    %2858 = vmatpush1.msra.mxu0 %v455
    %2859 = vmatprep.subr.mxu0 0.0
    %2860 = vmatpush1.msra.mxu0 %v453
    %2861 = vmatprep.subr.mxu0 0.0
    %2862 = vmatpush1.msra.mxu0 %v451
    %2863 = vmatprep.subr.mxu0 0.0
    %2864 = vmatpush1.msra.mxu0 %v449
    %2865 = vmatprep.subr.mxu0 0.0
    %2866 = vmatpush2.msra.mxu0 0.0
    %2867 = vmatprep.subr.mxu0 0.0
    %2868 = vmatpush2.msra.mxu0 0.0
    %2869 = vmatprep.subr.mxu0 0.0
    %2870 = vmatpush2.msra.mxu0 0.0
    %2871 = vmatprep.subr.mxu0 0.0
    %2872 = vmatpush2.msra.mxu0 0.0
    %2873 = vmatprep.subr.mxu0 0.0
    %2874 = vmatpush2.msra.mxu0 0.0
    %2875 = vmatprep.subr.mxu0 0.0
    %2876 = vmatpush2.msra.mxu0 0.0
    %2877 = vmatprep.subr.mxu0 0.0
    %2878 = vmatpush2.msra.mxu0 0.0
    %2879 = vmatprep.subr.mxu0 0.0
    %2880 = vmatpush2.msra.mxu0 0.0
    %2881 = vmatprep.subr.mxu0 0.0
    %2882 = vmatpush2.msra.mxu0 0.0
    %2883 = vmatprep.subr.mxu0 0.0
    %2884 = vmatpush2.msra.mxu0 0.0
    %2885 = vmatprep.subr.mxu0 0.0
    %2886 = vmatpush2.msra.mxu0 0.0
    %2887 = vmatprep.subr.mxu0 0.0
    %2888 = vmatpush2.msra.mxu0 0.0
    %2889 = vmatprep.subr.mxu0 0.0
    %2890 = vmatpush2.msra.mxu0 0.0
    %2891 = vmatprep.subr.mxu0 0.0
    %2892 = vmatpush2.msra.mxu0 0.0
    %2893 = vmatprep.subr.mxu0 0.0
    %2894 = vmatpush2.msra.mxu0 0.0
    %2895 = vmatprep.subr.mxu0 0.0
    %2896 = vmatpush2.msra.mxu0 0.0
    %2897 = vmatprep.mubr.f32.mxu0 0.0
    %2898 = vmatmul.mubr.f32.gmra.mxu0 %v2831
    %v2899 = vpop.f32.mrf.mxu0
    %v2900 = vadd.f32 %v269, %v2899
    %v2901 = vpop.f32.mrf.mxu0
    %2902 = vdwg.mxu0
    %v2904 = vrot.slane %v2541, 6
    %v2905 = vsel %vm184, %v2904, 0
    %2907 = vmatprep.subr.mxu0 0.0
    %2908 = vmatpush1.msra.mxu0 0.0
    %2909 = vmatprep.subr.mxu0 0.0
    %2910 = vmatpush1.msra.mxu0 0.0
    %2911 = vmatprep.subr.mxu0 0.0
    %2912 = vmatpush1.msra.mxu0 0.0
    %2913 = vmatprep.subr.mxu0 0.0
    %2914 = vmatpush1.msra.mxu0 0.0
    %2915 = vmatprep.subr.mxu0 0.0
    %2916 = vmatpush1.msra.mxu0 0.0
    %2917 = vmatprep.subr.mxu0 0.0
    %2918 = vmatpush1.msra.mxu0 0.0
    %2919 = vmatprep.subr.mxu0 0.0
    %2920 = vmatpush1.msra.mxu0 0.0
    %2921 = vmatprep.subr.mxu0 0.0
    %2922 = vmatpush1.msra.mxu0 0.0
    %2923 = vmatprep.subr.mxu0 0.0
    %2924 = vmatpush1.msra.mxu0 0.0
    %2925 = vmatprep.subr.mxu0 0.0
    %2926 = vmatpush1.msra.mxu0 0.0
    %2927 = vmatprep.subr.mxu0 0.0
    %2928 = vmatpush1.msra.mxu0 0.0
    %2929 = vmatprep.subr.mxu0 0.0
    %2930 = vmatpush1.msra.mxu0 0.0
    %2931 = vmatprep.subr.mxu0 0.0
    %2932 = vmatpush1.msra.mxu0 %v540
    %2933 = vmatprep.subr.mxu0 0.0
    %2934 = vmatpush1.msra.mxu0 %v538
    %2935 = vmatprep.subr.mxu0 0.0
    %2936 = vmatpush1.msra.mxu0 %v536
    %2937 = vmatprep.subr.mxu0 0.0
    %2938 = vmatpush1.msra.mxu0 %v534
    %2939 = vmatprep.subr.mxu0 0.0
    %2940 = vmatpush2.msra.mxu0 0.0
    %2941 = vmatprep.subr.mxu0 0.0
    %2942 = vmatpush2.msra.mxu0 0.0
    %2943 = vmatprep.subr.mxu0 0.0
    %2944 = vmatpush2.msra.mxu0 0.0
    %2945 = vmatprep.subr.mxu0 0.0
    %2946 = vmatpush2.msra.mxu0 0.0
    %2947 = vmatprep.subr.mxu0 0.0
    %2948 = vmatpush2.msra.mxu0 0.0
    %2949 = vmatprep.subr.mxu0 0.0
    %2950 = vmatpush2.msra.mxu0 0.0
    %2951 = vmatprep.subr.mxu0 0.0
    %2952 = vmatpush2.msra.mxu0 0.0
    %2953 = vmatprep.subr.mxu0 0.0
    %2954 = vmatpush2.msra.mxu0 0.0
    %2955 = vmatprep.subr.mxu0 0.0
    %2956 = vmatpush2.msra.mxu0 0.0
    %2957 = vmatprep.subr.mxu0 0.0
    %2958 = vmatpush2.msra.mxu0 0.0
    %2959 = vmatprep.subr.mxu0 0.0
    %2960 = vmatpush2.msra.mxu0 0.0
    %2961 = vmatprep.subr.mxu0 0.0
    %2962 = vmatpush2.msra.mxu0 0.0
    %2963 = vmatprep.subr.mxu0 0.0
    %2964 = vmatpush2.msra.mxu0 0.0
    %2965 = vmatprep.subr.mxu0 0.0
    %2966 = vmatpush2.msra.mxu0 0.0
    %2967 = vmatprep.subr.mxu0 0.0
    %2968 = vmatpush2.msra.mxu0 0.0
    %2969 = vmatprep.subr.mxu0 0.0
    %2970 = vmatpush2.msra.mxu0 0.0
    %2971 = vmatprep.mubr.f32.mxu0 0.0
    %2972 = vmatmul.mubr.f32.gmra.mxu0 %v2905
    %v2973 = vpop.f32.mrf.mxu0
    %v2974 = vadd.f32 %v2900, %v2973
    %v2975 = vpop.f32.mrf.mxu0
    %2976 = vdwg.mxu0
    %v2977 = vmax.f32 %v2974, 0.0
    %v2979 = vsel %vm184, %v2829, 0
    %2981 = vmatprep.subr.mxu0 0.0
    %2982 = vmatpush1.msra.mxu0 0.0
    %2983 = vmatprep.subr.mxu0 0.0
    %2984 = vmatpush1.msra.mxu0 0.0
    %2985 = vmatprep.subr.mxu0 0.0
    %2986 = vmatpush1.msra.mxu0 0.0
    %2987 = vmatprep.subr.mxu0 0.0
    %2988 = vmatpush1.msra.mxu0 0.0
    %2989 = vmatprep.subr.mxu0 0.0
    %2990 = vmatpush1.msra.mxu0 0.0
    %2991 = vmatprep.subr.mxu0 0.0
    %2992 = vmatpush1.msra.mxu0 0.0
    %2993 = vmatprep.subr.mxu0 0.0
    %2994 = vmatpush1.msra.mxu0 0.0
    %2995 = vmatprep.subr.mxu0 0.0
    %2996 = vmatpush1.msra.mxu0 0.0
    %2997 = vmatprep.subr.mxu0 0.0
    %2998 = vmatpush1.msra.mxu0 0.0
    %2999 = vmatprep.subr.mxu0 0.0
    %3000 = vmatpush1.msra.mxu0 0.0
    %3001 = vmatprep.subr.mxu0 0.0
    %3002 = vmatpush1.msra.mxu0 0.0
    %3003 = vmatprep.subr.mxu0 0.0
    %3004 = vmatpush1.msra.mxu0 0.0
    %3005 = vmatprep.subr.mxu0 0.0
    %3006 = vmatpush1.msra.mxu0 %v850
    %3007 = vmatprep.subr.mxu0 0.0
    %3008 = vmatpush1.msra.mxu0 %v848
    %3009 = vmatprep.subr.mxu0 0.0
    %3010 = vmatpush1.msra.mxu0 %v846
    %3011 = vmatprep.subr.mxu0 0.0
    %3012 = vmatpush1.msra.mxu0 %v844
    %3013 = vmatprep.subr.mxu0 0.0
    %3014 = vmatpush2.msra.mxu0 0.0
    %3015 = vmatprep.subr.mxu0 0.0
    %3016 = vmatpush2.msra.mxu0 0.0
    %3017 = vmatprep.subr.mxu0 0.0
    %3018 = vmatpush2.msra.mxu0 0.0
    %3019 = vmatprep.subr.mxu0 0.0
    %3020 = vmatpush2.msra.mxu0 0.0
    %3021 = vmatprep.subr.mxu0 0.0
    %3022 = vmatpush2.msra.mxu0 0.0
    %3023 = vmatprep.subr.mxu0 0.0
    %3024 = vmatpush2.msra.mxu0 0.0
    %3025 = vmatprep.subr.mxu0 0.0
    %3026 = vmatpush2.msra.mxu0 0.0
    %3027 = vmatprep.subr.mxu0 0.0
    %3028 = vmatpush2.msra.mxu0 0.0
    %3029 = vmatprep.subr.mxu0 0.0
    %3030 = vmatpush2.msra.mxu0 0.0
    %3031 = vmatprep.subr.mxu0 0.0
    %3032 = vmatpush2.msra.mxu0 0.0
    %3033 = vmatprep.subr.mxu0 0.0
    %3034 = vmatpush2.msra.mxu0 0.0
    %3035 = vmatprep.subr.mxu0 0.0
    %3036 = vmatpush2.msra.mxu0 0.0
    %3037 = vmatprep.subr.mxu0 0.0
    %3038 = vmatpush2.msra.mxu0 0.0
    %3039 = vmatprep.subr.mxu0 0.0
    %3040 = vmatpush2.msra.mxu0 0.0
    %3041 = vmatprep.subr.mxu0 0.0
    %3042 = vmatpush2.msra.mxu0 0.0
    %3043 = vmatprep.subr.mxu0 0.0
    %3044 = vmatpush2.msra.mxu0 0.0
    %3045 = vmatprep.mubr.f32.mxu0 0.0
    %3046 = vmatmul.mubr.f32.gmra.mxu0 %v2979
    %v3047 = vpop.f32.mrf.mxu0
    %v3048 = vadd.f32 %v273, %v3047
    %v3049 = vpop.f32.mrf.mxu0
    %3050 = vdwg.mxu0
    %3051 = vmatprep.subr.mxu0 0.0
    %3052 = vmatpush1.msra.mxu0 0.0
    %3053 = vmatprep.subr.mxu0 0.0
    %3054 = vmatpush1.msra.mxu0 0.0
    %3055 = vmatprep.subr.mxu0 0.0
    %3056 = vmatpush1.msra.mxu0 0.0
    %3057 = vmatprep.subr.mxu0 0.0
    %3058 = vmatpush1.msra.mxu0 0.0
    %3059 = vmatprep.subr.mxu0 0.0
    %3060 = vmatpush1.msra.mxu0 0.0
    %3061 = vmatprep.subr.mxu0 0.0
    %3062 = vmatpush1.msra.mxu0 0.0
    %3063 = vmatprep.subr.mxu0 0.0
    %3064 = vmatpush1.msra.mxu0 0.0
    %3065 = vmatprep.subr.mxu0 0.0
    %3066 = vmatpush1.msra.mxu0 0.0
    %3067 = vmatprep.subr.mxu0 0.0
    %3068 = vmatpush1.msra.mxu0 0.0
    %3069 = vmatprep.subr.mxu0 0.0
    %3070 = vmatpush1.msra.mxu0 0.0
    %3071 = vmatprep.subr.mxu0 0.0
    %3072 = vmatpush1.msra.mxu0 0.0
    %3073 = vmatprep.subr.mxu0 0.0
    %3074 = vmatpush1.msra.mxu0 0.0
    %3075 = vmatprep.subr.mxu0 0.0
    %3076 = vmatpush1.msra.mxu0 %v81
    %3077 = vmatprep.subr.mxu0 0.0
    %3078 = vmatpush1.msra.mxu0 %v80
    %3079 = vmatprep.subr.mxu0 0.0
    %3080 = vmatpush1.msra.mxu0 %v79
    %3081 = vmatprep.subr.mxu0 0.0
    %3082 = vmatpush1.msra.mxu0 %v78
    %3083 = vmatprep.subr.mxu0 0.0
    %3084 = vmatpush2.msra.mxu0 0.0
    %3085 = vmatprep.subr.mxu0 0.0
    %3086 = vmatpush2.msra.mxu0 0.0
    %3087 = vmatprep.subr.mxu0 0.0
    %3088 = vmatpush2.msra.mxu0 0.0
    %3089 = vmatprep.subr.mxu0 0.0
    %3090 = vmatpush2.msra.mxu0 0.0
    %3091 = vmatprep.subr.mxu0 0.0
    %3092 = vmatpush2.msra.mxu0 0.0
    %3093 = vmatprep.subr.mxu0 0.0
    %3094 = vmatpush2.msra.mxu0 0.0
    %3095 = vmatprep.subr.mxu0 0.0
    %3096 = vmatpush2.msra.mxu0 0.0
    %3097 = vmatprep.subr.mxu0 0.0
    %3098 = vmatpush2.msra.mxu0 0.0
    %3099 = vmatprep.subr.mxu0 0.0
    %3100 = vmatpush2.msra.mxu0 0.0
    %3101 = vmatprep.subr.mxu0 0.0
    %3102 = vmatpush2.msra.mxu0 0.0
    %3103 = vmatprep.subr.mxu0 0.0
    %3104 = vmatpush2.msra.mxu0 0.0
    %3105 = vmatprep.subr.mxu0 0.0
    %3106 = vmatpush2.msra.mxu0 0.0
    %3107 = vmatprep.subr.mxu0 0.0
    %3108 = vmatpush2.msra.mxu0 0.0
    %3109 = vmatprep.subr.mxu0 0.0
    %3110 = vmatpush2.msra.mxu0 0.0
    %3111 = vmatprep.subr.mxu0 0.0
    %3112 = vmatpush2.msra.mxu0 0.0
    %3113 = vmatprep.subr.mxu0 0.0
    %3114 = vmatpush2.msra.mxu0 0.0
    %3115 = vmatprep.mubr.f32.mxu0 0.0
    %3116 = vmatmul.mubr.f32.gmra.mxu0 %v2831
    %v3117 = vpop.f32.mrf.mxu0
    %v3118 = vadd.f32 %v3048, %v3117
    %v3119 = vpop.f32.mrf.mxu0
    %3120 = vdwg.mxu0
    %v3121 = vmax.f32 %v3118, 0.0
    %v3123 = vsel %vm184, %v3121, 0
    %3125 = vmatprep.subr.mxu0 0.0
    %3126 = vmatpush1.msra.mxu0 0.0
    %3127 = vmatprep.subr.mxu0 0.0
    %3128 = vmatpush1.msra.mxu0 0.0
    %3129 = vmatprep.subr.mxu0 0.0
    %3130 = vmatpush1.msra.mxu0 0.0
    %3131 = vmatprep.subr.mxu0 0.0
    %3132 = vmatpush1.msra.mxu0 0.0
    %3133 = vmatprep.subr.mxu0 0.0
    %3134 = vmatpush1.msra.mxu0 0.0
    %3135 = vmatprep.subr.mxu0 0.0
    %3136 = vmatpush1.msra.mxu0 0.0
    %3137 = vmatprep.subr.mxu0 0.0
    %3138 = vmatpush1.msra.mxu0 0.0
    %3139 = vmatprep.subr.mxu0 0.0
    %3140 = vmatpush1.msra.mxu0 0.0
    %3141 = vmatprep.subr.mxu0 0.0
    %3142 = vmatpush1.msra.mxu0 0.0
    %3143 = vmatprep.subr.mxu0 0.0
    %3144 = vmatpush1.msra.mxu0 0.0
    %3145 = vmatprep.subr.mxu0 0.0
    %3146 = vmatpush1.msra.mxu0 0.0
    %3147 = vmatprep.subr.mxu0 0.0
    %3148 = vmatpush1.msra.mxu0 0.0
    %3149 = vmatprep.subr.mxu0 0.0
    %3150 = vmatpush1.msra.mxu0 %v850
    %3151 = vmatprep.subr.mxu0 0.0
    %3152 = vmatpush1.msra.mxu0 %v848
    %3153 = vmatprep.subr.mxu0 0.0
    %3154 = vmatpush1.msra.mxu0 %v846
    %3155 = vmatprep.subr.mxu0 0.0
    %3156 = vmatpush1.msra.mxu0 %v844
    %3157 = vmatprep.subr.mxu0 0.0
    %3158 = vmatpush2.msra.mxu0 0.0
    %3159 = vmatprep.subr.mxu0 0.0
    %3160 = vmatpush2.msra.mxu0 0.0
    %3161 = vmatprep.subr.mxu0 0.0
    %3162 = vmatpush2.msra.mxu0 0.0
    %3163 = vmatprep.subr.mxu0 0.0
    %3164 = vmatpush2.msra.mxu0 0.0
    %3165 = vmatprep.subr.mxu0 0.0
    %3166 = vmatpush2.msra.mxu0 0.0
    %3167 = vmatprep.subr.mxu0 0.0
    %3168 = vmatpush2.msra.mxu0 0.0
    %3169 = vmatprep.subr.mxu0 0.0
    %3170 = vmatpush2.msra.mxu0 0.0
    %3171 = vmatprep.subr.mxu0 0.0
    %3172 = vmatpush2.msra.mxu0 0.0
    %3173 = vmatprep.subr.mxu0 0.0
    %3174 = vmatpush2.msra.mxu0 0.0
    %3175 = vmatprep.subr.mxu0 0.0
    %3176 = vmatpush2.msra.mxu0 0.0
    %3177 = vmatprep.subr.mxu0 0.0
    %3178 = vmatpush2.msra.mxu0 0.0
    %3179 = vmatprep.subr.mxu0 0.0
    %3180 = vmatpush2.msra.mxu0 0.0
    %3181 = vmatprep.subr.mxu0 0.0
    %3182 = vmatpush2.msra.mxu0 0.0
    %3183 = vmatprep.subr.mxu0 0.0
    %3184 = vmatpush2.msra.mxu0 0.0
    %3185 = vmatprep.subr.mxu0 0.0
    %3186 = vmatpush2.msra.mxu0 0.0
    %3187 = vmatprep.subr.mxu0 0.0
    %3188 = vmatpush2.msra.mxu0 0.0
    %3189 = vmatprep.mubr.f32.mxu0 0.0
    %3190 = vmatmul.mubr.f32.gmra.mxu0 %v3123
    %v3191 = vpop.f32.mrf.mxu0
    %v3192 = vadd.f32 %v273, %v3191
    %v3193 = vpop.f32.mrf.mxu0
    %3194 = vdwg.mxu0
    %v3196 = vsel %vm184, %v2977, 0
    %3198 = vmatprep.subr.mxu0 0.0
    %3199 = vmatpush1.msra.mxu0 0.0
    %3200 = vmatprep.subr.mxu0 0.0
    %3201 = vmatpush1.msra.mxu0 0.0
    %3202 = vmatprep.subr.mxu0 0.0
    %3203 = vmatpush1.msra.mxu0 0.0
    %3204 = vmatprep.subr.mxu0 0.0
    %3205 = vmatpush1.msra.mxu0 0.0
    %3206 = vmatprep.subr.mxu0 0.0
    %3207 = vmatpush1.msra.mxu0 0.0
    %3208 = vmatprep.subr.mxu0 0.0
    %3209 = vmatpush1.msra.mxu0 0.0
    %3210 = vmatprep.subr.mxu0 0.0
    %3211 = vmatpush1.msra.mxu0 0.0
    %3212 = vmatprep.subr.mxu0 0.0
    %3213 = vmatpush1.msra.mxu0 0.0
    %3214 = vmatprep.subr.mxu0 0.0
    %3215 = vmatpush1.msra.mxu0 0.0
    %3216 = vmatprep.subr.mxu0 0.0
    %3217 = vmatpush1.msra.mxu0 0.0
    %3218 = vmatprep.subr.mxu0 0.0
    %3219 = vmatpush1.msra.mxu0 0.0
    %3220 = vmatprep.subr.mxu0 0.0
    %3221 = vmatpush1.msra.mxu0 0.0
    %3222 = vmatprep.subr.mxu0 0.0
    %3223 = vmatpush1.msra.mxu0 %v81
    %3224 = vmatprep.subr.mxu0 0.0
    %3225 = vmatpush1.msra.mxu0 %v80
    %3226 = vmatprep.subr.mxu0 0.0
    %3227 = vmatpush1.msra.mxu0 %v79
    %3228 = vmatprep.subr.mxu0 0.0
    %3229 = vmatpush1.msra.mxu0 %v78
    %3230 = vmatprep.subr.mxu0 0.0
    %3231 = vmatpush2.msra.mxu0 0.0
    %3232 = vmatprep.subr.mxu0 0.0
    %3233 = vmatpush2.msra.mxu0 0.0
    %3234 = vmatprep.subr.mxu0 0.0
    %3235 = vmatpush2.msra.mxu0 0.0
    %3236 = vmatprep.subr.mxu0 0.0
    %3237 = vmatpush2.msra.mxu0 0.0
    %3238 = vmatprep.subr.mxu0 0.0
    %3239 = vmatpush2.msra.mxu0 0.0
    %3240 = vmatprep.subr.mxu0 0.0
    %3241 = vmatpush2.msra.mxu0 0.0
    %3242 = vmatprep.subr.mxu0 0.0
    %3243 = vmatpush2.msra.mxu0 0.0
    %3244 = vmatprep.subr.mxu0 0.0
    %3245 = vmatpush2.msra.mxu0 0.0
    %3246 = vmatprep.subr.mxu0 0.0
    %3247 = vmatpush2.msra.mxu0 0.0
    %3248 = vmatprep.subr.mxu0 0.0
    %3249 = vmatpush2.msra.mxu0 0.0
    %3250 = vmatprep.subr.mxu0 0.0
    %3251 = vmatpush2.msra.mxu0 0.0
    %3252 = vmatprep.subr.mxu0 0.0
    %3253 = vmatpush2.msra.mxu0 0.0
    %3254 = vmatprep.subr.mxu0 0.0
    %3255 = vmatpush2.msra.mxu0 0.0
    %3256 = vmatprep.subr.mxu0 0.0
    %3257 = vmatpush2.msra.mxu0 0.0
    %3258 = vmatprep.subr.mxu0 0.0
    %3259 = vmatpush2.msra.mxu0 0.0
    %3260 = vmatprep.subr.mxu0 0.0
    %3261 = vmatpush2.msra.mxu0 0.0
    %3262 = vmatprep.mubr.f32.mxu0 0.0
    %3263 = vmatmul.mubr.f32.gmra.mxu0 %v3196
    %v3264 = vpop.f32.mrf.mxu0
    %v3265 = vadd.f32 %v3192, %v3264
    %v3266 = vpop.f32.mrf.mxu0
    %3267 = vdwg.mxu0
    %v3268 = vmax.f32 %v3265, 0.0
    %v3270 = vrot.slane %v2977, 6
    %v3273 = vrot.slane %v3268, 4
    %vm3275 = vcmask 1041408
    %v3276 = vsel %vm3275, %v2904, %v3270
    %vm3277 = vcmask 1043456
    %v3278 = vsel %vm3277, %v3276, %v3273
    %vm3279 = vcmask 259072
    %3280 = vst.msk [vmem:[#allocation11] sm:$0x3f] %vm3279, %v3278
    %v3281 = vrot.slane %v1365, 6
    %v3283 = vrot.slane %v1729, 4
    %v3285 = vrot.slane %v2095, 2
    %v3287 = vrot.slane %v2829, 6
    %v3289 = vrot.slane %v3121, 4
    %v3291 = vrot.slane %v3268, 2
    %v3293 = vsel %vm3275, %v998, %v3281
    %v3294 = vsel %vm3277, %v3293, %v3283
    %vm3295 = vcmask 1045504
    %v3296 = vsel %vm3295, %v3294, %v3285
    %v3297 = vsel %vm3275, %v2462, %v3287
    %v3298 = vsel %vm3277, %v3297, %v3289
    %v3299 = vsel %vm3295, %v3298, %v3291
    %v3300 = vlaneseq
    %v3301 = vshrl.u32 %v3300, 7
    %v3302 = vsub.s32 0, %v3301
    %v3303 = vrot.slane %v88, %v3302
    %3304 = vrot.lane.b32.xlu0 %v78, 64
    %v3305 = vpop.permute.xlu0 %3304
    %3306 = vrot.lane.b32.xlu0 %v79, 64
    %v3307 = vpop.permute.xlu0 %3306
    %3308 = vrot.lane.b32.xlu0 %v80, 64
    %v3309 = vpop.permute.xlu0 %3308
    %3310 = vrot.lane.b32.xlu0 %v81, 64
    %v3311 = vpop.permute.xlu0 %3310
    %v3317 = vsel %vm184, %v3296, 0
    %v3320 = vsel %vm184, %v3299, 0
    %3322 = vmatprep.subr.mxu0 0.0
    %3323 = vmatpush1.msra.mxu0 0.0
    %3324 = vmatprep.subr.mxu0 0.0
    %3325 = vmatpush1.msra.mxu0 0.0
    %3326 = vmatprep.subr.mxu0 0.0
    %3327 = vmatpush1.msra.mxu0 0.0
    %3328 = vmatprep.subr.mxu0 0.0
    %3329 = vmatpush1.msra.mxu0 0.0
    %3330 = vmatprep.subr.mxu0 0.0
    %3331 = vmatpush1.msra.mxu0 0.0
    %3332 = vmatprep.subr.mxu0 0.0
    %3333 = vmatpush1.msra.mxu0 0.0
    %3334 = vmatprep.subr.mxu0 0.0
    %3335 = vmatpush1.msra.mxu0 0.0
    %3336 = vmatprep.subr.mxu0 0.0
    %3337 = vmatpush1.msra.mxu0 0.0
    %3338 = vmatprep.subr.mxu0 0.0
    %3339 = vmatpush1.msra.mxu0 0.0
    %3340 = vmatprep.subr.mxu0 0.0
    %3341 = vmatpush1.msra.mxu0 0.0
    %3342 = vmatprep.subr.mxu0 0.0
    %3343 = vmatpush1.msra.mxu0 0.0
    %3344 = vmatprep.subr.mxu0 0.0
    %3345 = vmatpush1.msra.mxu0 0.0
    %3346 = vmatprep.subr.mxu0 0.0
    %3347 = vmatpush1.msra.mxu0 %v3311
    %3348 = vmatprep.subr.mxu0 0.0
    %3349 = vmatpush1.msra.mxu0 %v3309
    %3350 = vmatprep.subr.mxu0 0.0
    %3351 = vmatpush1.msra.mxu0 %v3307
    %3352 = vmatprep.subr.mxu0 0.0
    %3353 = vmatpush1.msra.mxu0 %v3305
    %3354 = vmatprep.subr.mxu0 0.0
    %3355 = vmatpush2.msra.mxu0 0.0
    %3356 = vmatprep.subr.mxu0 0.0
    %3357 = vmatpush2.msra.mxu0 0.0
    %3358 = vmatprep.subr.mxu0 0.0
    %3359 = vmatpush2.msra.mxu0 0.0
    %3360 = vmatprep.subr.mxu0 0.0
    %3361 = vmatpush2.msra.mxu0 0.0
    %3362 = vmatprep.subr.mxu0 0.0
    %3363 = vmatpush2.msra.mxu0 0.0
    %3364 = vmatprep.subr.mxu0 0.0
    %3365 = vmatpush2.msra.mxu0 0.0
    %3366 = vmatprep.subr.mxu0 0.0
    %3367 = vmatpush2.msra.mxu0 0.0
    %3368 = vmatprep.subr.mxu0 0.0
    %3369 = vmatpush2.msra.mxu0 0.0
    %3370 = vmatprep.subr.mxu0 0.0
    %3371 = vmatpush2.msra.mxu0 0.0
    %3372 = vmatprep.subr.mxu0 0.0
    %3373 = vmatpush2.msra.mxu0 0.0
    %3374 = vmatprep.subr.mxu0 0.0
    %3375 = vmatpush2.msra.mxu0 0.0
    %3376 = vmatprep.subr.mxu0 0.0
    %3377 = vmatpush2.msra.mxu0 0.0
    %3378 = vmatprep.subr.mxu0 0.0
    %3379 = vmatpush2.msra.mxu0 0.0
    %3380 = vmatprep.subr.mxu0 0.0
    %3381 = vmatpush2.msra.mxu0 0.0
    %3382 = vmatprep.subr.mxu0 0.0
    %3383 = vmatpush2.msra.mxu0 0.0
    %3384 = vmatprep.subr.mxu0 0.0
    %3385 = vmatpush2.msra.mxu0 0.0
    %3386 = vmatprep.mubr.f32.mxu0 0.0
    %3387 = vmatmul.mubr.f32.gmra.mxu0 %v3317
    %v3388 = vpop.f32.mrf.mxu0
    %v3389 = vadd.f32 %v3303, %v3388
    %v3390 = vpop.f32.mrf.mxu0
    %3391 = vmatprep.mubr.f32.mxu0 0.0
    %3392 = vmatmul.mubr.f32.gmra.mxu0 %v3320
    %v3393 = vpop.f32.mrf.mxu0
    %v3394 = vadd.f32 %v3303, %v3393
    %v3395 = vpop.f32.mrf.mxu0
    %3396 = vdwg.mxu0
    %v3397 = vmax.f32 %v3389, 0.0
    %v3398 = vmax.f32 %v3394, 0.0
    %v3399 = vlaneseq
    %v3400 = vshrl.u32 %v3399, 7
    %v3401 = vsub.s32 0, %v3400
    %v3402 = vrot.slane %v89, %v3401
    %3403 = vrot.lane.b32.xlu0 %v78, 32
    %v3404 = vpop.permute.xlu0 %3403
    %3405 = vrot.lane.b32.xlu0 %v79, 32
    %v3406 = vpop.permute.xlu0 %3405
    %3407 = vrot.lane.b32.xlu0 %v80, 32
    %v3408 = vpop.permute.xlu0 %3407
    %3409 = vrot.lane.b32.xlu0 %v81, 32
    %v3410 = vpop.permute.xlu0 %3409
    %v3416 = vsel %vm184, %v3397, 0
    %v3419 = vsel %vm184, %v3398, 0
    %3421 = vmatprep.subr.mxu0 0.0
    %3422 = vmatpush1.msra.mxu0 0.0
    %3423 = vmatprep.subr.mxu0 0.0
    %3424 = vmatpush1.msra.mxu0 0.0
    %3425 = vmatprep.subr.mxu0 0.0
    %3426 = vmatpush1.msra.mxu0 0.0
    %3427 = vmatprep.subr.mxu0 0.0
    %3428 = vmatpush1.msra.mxu0 0.0
    %3429 = vmatprep.subr.mxu0 0.0
    %3430 = vmatpush1.msra.mxu0 0.0
    %3431 = vmatprep.subr.mxu0 0.0
    %3432 = vmatpush1.msra.mxu0 0.0
    %3433 = vmatprep.subr.mxu0 0.0
    %3434 = vmatpush1.msra.mxu0 0.0
    %3435 = vmatprep.subr.mxu0 0.0
    %3436 = vmatpush1.msra.mxu0 0.0
    %3437 = vmatprep.subr.mxu0 0.0
    %3438 = vmatpush1.msra.mxu0 0.0
    %3439 = vmatprep.subr.mxu0 0.0
    %3440 = vmatpush1.msra.mxu0 0.0
    %3441 = vmatprep.subr.mxu0 0.0
    %3442 = vmatpush1.msra.mxu0 0.0
    %3443 = vmatprep.subr.mxu0 0.0
    %3444 = vmatpush1.msra.mxu0 0.0
    %3445 = vmatprep.subr.mxu0 0.0
    %3446 = vmatpush1.msra.mxu0 %v3410
    %3447 = vmatprep.subr.mxu0 0.0
    %3448 = vmatpush1.msra.mxu0 %v3408
    %3449 = vmatprep.subr.mxu0 0.0
    %3450 = vmatpush1.msra.mxu0 %v3406
    %3451 = vmatprep.subr.mxu0 0.0
    %3452 = vmatpush1.msra.mxu0 %v3404
    %3453 = vmatprep.subr.mxu0 0.0
    %3454 = vmatpush2.msra.mxu0 0.0
    %3455 = vmatprep.subr.mxu0 0.0
    %3456 = vmatpush2.msra.mxu0 0.0
    %3457 = vmatprep.subr.mxu0 0.0
    %3458 = vmatpush2.msra.mxu0 0.0
    %3459 = vmatprep.subr.mxu0 0.0
    %3460 = vmatpush2.msra.mxu0 0.0
    %3461 = vmatprep.subr.mxu0 0.0
    %3462 = vmatpush2.msra.mxu0 0.0
    %3463 = vmatprep.subr.mxu0 0.0
    %3464 = vmatpush2.msra.mxu0 0.0
    %3465 = vmatprep.subr.mxu0 0.0
    %3466 = vmatpush2.msra.mxu0 0.0
    %3467 = vmatprep.subr.mxu0 0.0
    %3468 = vmatpush2.msra.mxu0 0.0
    %3469 = vmatprep.subr.mxu0 0.0
    %3470 = vmatpush2.msra.mxu0 0.0
    %3471 = vmatprep.subr.mxu0 0.0
    %3472 = vmatpush2.msra.mxu0 0.0
    %3473 = vmatprep.subr.mxu0 0.0
    %3474 = vmatpush2.msra.mxu0 0.0
    %3475 = vmatprep.subr.mxu0 0.0
    %3476 = vmatpush2.msra.mxu0 0.0
    %3477 = vmatprep.subr.mxu0 0.0
    %3478 = vmatpush2.msra.mxu0 0.0
    %3479 = vmatprep.subr.mxu0 0.0
    %3480 = vmatpush2.msra.mxu0 0.0
    %3481 = vmatprep.subr.mxu0 0.0
    %3482 = vmatpush2.msra.mxu0 0.0
    %3483 = vmatprep.subr.mxu0 0.0
    %3484 = vmatpush2.msra.mxu0 0.0
    %3485 = vmatprep.mubr.f32.mxu0 0.0
    %3486 = vmatmul.mubr.f32.gmra.mxu0 %v3416
    %v3487 = vpop.f32.mrf.mxu0
    %v3488 = vadd.f32 %v3402, %v3487
    %v3489 = vpop.f32.mrf.mxu0
    %3490 = vmatprep.mubr.f32.mxu0 0.0
    %3491 = vmatmul.mubr.f32.gmra.mxu0 %v3419
    %v3492 = vpop.f32.mrf.mxu0
    %v3493 = vadd.f32 %v3402, %v3492
    %v3494 = vpop.f32.mrf.mxu0
    %3495 = vdwg.mxu0
    %3496 = vst.msk [vmem:[#allocation10] sm:$0xff] %vm184, %v3488
    %3497 = vst.msk [vmem:[#allocation10 + $0x8] sm:$0xff] %vm184, %v3493
    // Predicated region
    $region34: #{tpu_custom_call.1} parent=1 // pred_check
      _
    $region35: #{tpu_custom_call.1} parent=1 // pred_check_branch
      %3499 = sbr.rel (0) target = $region37
    $region36: #{tpu_custom_call.1} parent=1 // pred_region
      %s3501 = ssub.s32 256, 256
      %3502 = vsyncadd [#allocation4], %s3501
      %s3503 = sshll.u32 [#allocation10], 4
      %s3504 = int_to_ptr.vmem [resolvable:$true] %s3503
      %3509 = dma.vmem_to_hbm [thread:$0]  %s3504, 256, %s4, [#allocation4], 128, 128, 8
    $region37: #{tpu_custom_call.1} parent=1 // pred_fallthru
      _
    // Predicated region
    $region38: #{tpu_custom_call.1} parent=1 // pred_check
      _
    $region39: #{tpu_custom_call.1} parent=1 // pred_check_branch
      %3511 = sbr.rel (0) target = $region41
    $region40: #{tpu_custom_call.1} parent=1 // pred_region
      %s3513 = ssub.s32 128, 128
      %3514 = vsyncadd [#allocation12], %s3513
      %s3516 = sshll.u32 [#allocation11], 4
      %s3517 = int_to_ptr.vmem [resolvable:$true] %s3516
      %3519 = dma.vmem_to_hbm [thread:$0]  %s3517, 128, %s5, [#allocation12]
    $region41: #{tpu_custom_call.1} parent=1 // pred_fallthru
      _
    // Predicated region
    $region42: #{tpu_custom_call.1} parent=1 // pred_check
      _
    $region43: #{tpu_custom_call.1} parent=1 // pred_check_branch
      %3521 = sbr.rel (0) target = $region45
    $region44: #{tpu_custom_call.1} parent=1 // pred_region
      %3522 = dma.done [#allocation4], 256
    $region45: #{tpu_custom_call.1} parent=1 // pred_fallthru
      _
    // Predicated region
    $region46: #{tpu_custom_call.1} parent=1 // pred_check
      _
    $region47: #{tpu_custom_call.1} parent=1 // pred_check_branch
      %3524 = sbr.rel (0) target = $region49
    $region48: #{tpu_custom_call.1} parent=1 // pred_region
      %3525 = dma.done [#allocation12], 128
    $region49: #{tpu_custom_call.1} parent=1 // pred_fallthru
      _
    %3526 = vsyncpa [#allocation3], 1
    %3527 = vsyncpa [#allocation6], 1
    %3528 = vsyncpa [#allocation9], 1
    %3529 = vsyncpa [#allocation4], 1
    %3530 = vsyncpa [#allocation12], 1

</llo_original>
